<compile_context>
chip_gen: v5e
topology: v5e:2x2
jax: 0.10.0
libtpu: 0.0.40
codegen_flags: <defaults>
</compile_context>

<pallas_src>
import functools
import math

import jax
import jax.numpy as jnp
from jax.experimental import pallas as pl
from jax.experimental.pallas import tpu as pltpu


# ---------------------------------------------------------------------------
# Shared building block (used by the kernel and the pure-JAX reference)
# ---------------------------------------------------------------------------
def _layernorm(x, gamma, beta, eps=1e-5):
    mean = jnp.mean(x, axis=-1, keepdims=True)
    var = jnp.mean((x - mean) ** 2, axis=-1, keepdims=True)
    return (x - mean) * jax.lax.rsqrt(var + eps) * gamma + beta


# ---------------------------------------------------------------------------
# Fused decoder-layer kernel: one grid step = (batch element, query tile)
# ---------------------------------------------------------------------------
def decoder_layer_kernel(
    trg_ref, mem_ref,
    # self attention (per-head weight tensors)
    wq1_r, bq1_r, wk1_r, bk1_r, wv1_r, bv1_r, wo1_r, bo1_r,
    # cross attention (per-head weight tensors)
    wq2_r, bq2_r, wk2_r, bk2_r, wv2_r, bv2_r, wo2_r, bo2_r,
    # feed-forward ("cnn")
    wf1_r, bf1_r, wf2_r, bf2_r,
    # layer norms
    g1_r, be1_r, g2_r, be2_r, g3_r, be3_r,
    out_ref,
    # per-batch K/V scratch (persists across the sequential t axis)
    k1_s, v1_s, k2_s, v2_s,
    *, num_heads, tq,
):
    t = pl.program_id(1)

    # ---- Once per batch element: project K/V for both attentions into bf16
    #      VMEM scratch.  Only per-head (S_kv, dh) f32 transients are live.
    @pl.when(t == 0)
    def _():
        src_self = trg_ref[0]          # (T, D) bf16
        src_mem = mem_ref[0]           # (S, D) bf16
        for h in range(num_heads):
            k1_s[h] = (jnp.dot(src_self, wk1_r[h],
                               preferred_element_type=jnp.float32)
                       + bk1_r[h]).astype(jnp.bfloat16)
            v1_s[h] = (jnp.dot(src_self, wv1_r[h],
                               preferred_element_type=jnp.float32)
                       + bv1_r[h]).astype(jnp.bfloat16)
            k2_s[h] = (jnp.dot(src_mem, wk2_r[h],
                               preferred_element_type=jnp.float32)
                       + bk2_r[h]).astype(jnp.bfloat16)
            v2_s[h] = (jnp.dot(src_mem, wv2_r[h],
                               preferred_element_type=jnp.float32)
                       + bv2_r[h]).astype(jnp.bfloat16)

    # ---- Query / residual tile: sliced out of the resident full-trg block
    #      (no extra per-step DMA); residual / LN math stays in f32.
    row0 = pl.multiple_of(t * tq, tq)
    x_tile_bf = trg_ref[0, pl.ds(row0, tq), :]        # (tq, D) bf16
    residual = x_tile_bf.astype(jnp.float32)

    def mha(x_bf, wq_r, bq_r, k_s, v_s, wo_r, bo_r):
        """MHA of one (tq, D) bf16 query tile against per-batch scratch K/V."""
        dh = k_s.shape[-1]
        scale = 1.0 / math.sqrt(dh)
        acc = jnp.zeros((tq, wo_r.shape[-1]), jnp.float32)
        # Heads unrolled at trace time; per-head weight tensors mean there are
        # no lane slices at non-128-aligned offsets for any head dim.
        for h in range(num_heads):
            qh = (jnp.dot(x_bf, wq_r[h], preferred_element_type=jnp.float32)
                  + bq_r[h]) * scale                   # fold 1/sqrt(dh) into Q
            s = jax.lax.dot_general(                   # (tq, S_kv) NT matmul
                qh.astype(jnp.bfloat16), k_s[h],
                (((1,), (1,)), ((), ())),
                preferred_element_type=jnp.float32)
            s = s - jnp.max(s, axis=-1, keepdims=True)
            p = jnp.exp(s)
            p = p * pl.reciprocal(jnp.sum(p, axis=-1, keepdims=True), approx=True)
            ctx = jnp.dot(p.astype(jnp.bfloat16), v_s[h],
                          preferred_element_type=jnp.float32)
            # Fold the head straight into the output projection (no concat).
            acc = acc + jnp.dot(ctx.astype(jnp.bfloat16), wo_r[h],
                                preferred_element_type=jnp.float32)
        return acc + bo_r[...]

    # Self attention + residual + LayerNorm.
    sa = mha(x_tile_bf, wq1_r, bq1_r, k1_s, v1_s, wo1_r, bo1_r)
    x = _layernorm(sa + residual, g1_r[...], be1_r[...])

    # Cross attention + residual + LayerNorm.
    ca = mha(x.astype(jnp.bfloat16), wq2_r, bq2_r, k2_s, v2_s, wo2_r, bo2_r)
    x = _layernorm(ca + x, g2_r[...], be2_r[...])

    # FFN (Linear -> relu -> Linear) + residual + LayerNorm.
    w1, w2 = wf1_r[...], wf2_r[...]
    hid = jnp.maximum(
        jnp.dot(x.astype(jnp.bfloat16), w1, preferred_element_type=jnp.float32)
        + bf1_r[...], 0.0)
    ff = jnp.dot(hid.astype(jnp.bfloat16), w2,
                 preferred_element_type=jnp.float32) + bf2_r[...]
    out_ref[0] = _layernorm(ff + x, g3_r[...], be3_r[...]).astype(out_ref.dtype)


PARAM_ORDER = (
    "wq1", "bq1", "wk1", "bk1", "wv1", "bv1", "wo1", "bo1",
    "wq2", "bq2", "wk2", "bk2", "wv2", "bv2", "wo2", "bo2",
    "wf1", "bf1", "wf2", "bf2",
    "g1", "be1", "g2", "be2", "g3", "be3",
)


def _pack_params(params, num_heads):
    """Per-head weight reshapes (free, wrapper-side) + one-time bf16 cast of all
    matmul weights.  Biases and LayerNorm params stay f32."""
    D = params["wq1"].shape[0]
    dh = D // num_heads
    out = {}
    for tag in ("1", "2"):
        for name in ("q", "k", "v"):
            w = params[f"w{name}{tag}"]
            b = params[f"b{name}{tag}"]
            out[f"w{name}{tag}"] = jnp.transpose(
                w.reshape(D, num_heads, dh), (1, 0, 2)).astype(jnp.bfloat16)  # (H, D, dh)
            out[f"b{name}{tag}"] = jnp.transpose(
                b.reshape(1, num_heads, dh), (1, 0, 2))                        # (H, 1, dh)
        out[f"wo{tag}"] = params[f"wo{tag}"].reshape(
            num_heads, dh, D).astype(jnp.bfloat16)                             # (H, dh, D)
        out[f"bo{tag}"] = params[f"bo{tag}"]                                   # (1, D)
    out["wf1"] = params["wf1"].astype(jnp.bfloat16)
    out["bf1"] = params["bf1"]
    out["wf2"] = params["wf2"].astype(jnp.bfloat16)
    out["bf2"] = params["bf2"]
    for tag in ("1", "2", "3"):
        out[f"g{tag}"] = params[f"g{tag}"]
        out[f"be{tag}"] = params[f"be{tag}"]
    return out


def _vmem_capacity_bytes():
    try:
        return int(pltpu.get_tpu_info().vmem_capacity_bytes)
    except Exception:
        return 128 * 1024 * 1024


_HAS_BUFFERED = hasattr(pl, "Buffered")


def _const_spec(a):
    """BlockSpec for a grid-invariant (weight) input: single-buffered if possible."""
    nd = a.ndim
    idx = lambda b, t, _nd=nd: (0,) * _nd
    if _HAS_BUFFERED:
        try:
            return pl.BlockSpec(a.shape, idx, pipeline_mode=pl.Buffered(1))
        except TypeError:
            pass
    return pl.BlockSpec(a.shape, idx)


def decoder_layer(trg, memory, params, num_heads, *, tq=None, vmem_limit_bytes=None):
    B, T, D = trg.shape
    S = memory.shape[1]
    E = params["wf1"].shape[1]
    assert D % num_heads == 0, "hidden_dim must be divisible by num_heads"
    dh = D // num_heads

    cap = _vmem_capacity_bytes()
    if vmem_limit_bytes is None:
        # Generation-aware budget: ~54 MiB on v7x (64 MiB VMEM), ~108 MiB on v5e/v6e.
        vmem_limit_bytes = min(int(cap * 0.85), 112 * 1024 * 1024)
    if tq is None:
        tq = 256 if cap >= 96 * 1024 * 1024 else 128
        tq = min(tq, T)
    assert T % tq == 0, "T must be divisible by the query tile size"
    n_t = T // tq

    packed = _pack_params(params, num_heads)
    weight_args = [packed[k] for k in PARAM_ORDER]

    trg_bf = trg.astype(jnp.bfloat16)
    mem_bf = memory.astype(jnp.bfloat16)

    in_specs = (
        [pl.BlockSpec((1, T, D), lambda b, t: (b, 0, 0)),   # full trg  (Q tiles + self K/V src)
         pl.BlockSpec((1, S, D), lambda b, t: (b, 0, 0))]   # full memory (cross K/V src)
        + [_const_spec(a) for a in weight_args]
    )

    scratch_shapes = [
        pltpu.VMEM((num_heads, T, dh), jnp.bfloat16),   # self-attn K
        pltpu.VMEM((num_heads, T, dh), jnp.bfloat16),   # self-attn V
        pltpu.VMEM((num_heads, S, dh), jnp.bfloat16),   # cross-attn K
        pltpu.VMEM((num_heads, S, dh), jnp.bfloat16),   # cross-attn V
    ]

    # ---- advisory cost estimate (K/V projections counted once per batch) ----
    flops = B * (4 * T * D * D + 4 * S * D * D) + B * n_t * (
        8 * tq * D * D          # Q / output projections, both attentions
        + 4 * tq * T * D        # self-attn scores + context
        + 4 * tq * S * D        # cross-attn scores + context
        + 4 * tq * D * E)       # FFN
    transcendentals = B * num_heads * T * (T + S)
    weight_bytes = sum(int(a.nbytes) for a in weight_args)
    bytes_accessed = (weight_bytes + int(trg_bf.nbytes) + int(mem_bf.nbytes)
                      + B * T * D * 4)

    kernel = functools.partial(decoder_layer_kernel, num_heads=num_heads, tq=tq)
    return pl.pallas_call(
        kernel,
        out_shape=jax.ShapeDtypeStruct((B, T, D), trg.dtype),
        grid=(B, n_t),
        in_specs=in_specs,
        out_specs=pl.BlockSpec((1, tq, D), lambda b, t: (b, t, 0)),
        scratch_shapes=scratch_shapes,
        compiler_params=pltpu.CompilerParams(
            # t must be sequential so the per-batch K/V scratch (initialised at
            # t == 0) is valid for all query tiles of that batch element.
            dimension_semantics=("parallel", "arbitrary"),
            vmem_limit_bytes=int(vmem_limit_bytes),
        ),
        cost_estimate=pl.CostEstimate(
            flops=int(flops),
            transcendentals=int(transcendentals),
            bytes_accessed=int(bytes_accessed),
        ),
    )(trg_bf, mem_bf, *weight_args)


# ---------------------------------------------------------------------------
# Pure-JAX f32 reference (PyTorch math) for a correctness check
# ---------------------------------------------------------------------------
def _ref_mha(xq, xkv, wq, bq, wk, bk, wv, bv, wo, bo, num_heads):
    B, T, D = xq.shape
    dh = D // num_heads

    def split(z):
        return z.reshape(B, z.shape[1], num_heads, dh).transpose(0, 2, 1, 3)

    q = split(xq @ wq + bq)
    k = split(xkv @ wk + bk)
    v = split(xkv @ wv + bv)
    s = jnp.einsum("bhtd,bhsd->bhts", q, k) / math.sqrt(dh)
    p = jax.nn.softmax(s, axis=-1)
    ctx = jnp.einsum("bhts,bhsd->bhtd", p, v)
    ctx = ctx.transpose(0, 2, 1, 3).reshape(B, T, D)
    return ctx @ wo + bo


def _ref_forward(trg, memory, p, num_heads):
    sa = _ref_mha(trg, trg, p["wq1"], p["bq1"], p["wk1"], p["bk1"],
                  p["wv1"], p["bv1"], p["wo1"], p["bo1"], num_heads)
    x = _layernorm(sa + trg, p["g1"], p["be1"])
    ca = _ref_mha(x, memory, p["wq2"], p["bq2"], p["wk2"], p["bk2"],
                  p["wv2"], p["bv2"], p["wo2"], p["bo2"], num_heads)
    x = _layernorm(ca + x, p["g2"], p["be2"])
    h = jnp.maximum(jnp.einsum("btd,de->bte", x, p["wf1"]) + p["bf1"], 0.0)
    ff = jnp.einsum("bte,ed->btd", h, p["wf2"]) + p["bf2"]
    return _layernorm(ff + x, p["g3"], p["be3"])


# ---------------------------------------------------------------------------
def init_params(key, hidden_dim, expansion_dim):
    D, E = hidden_dim, expansion_dim
    keys = jax.random.split(key, 32)
    ki = iter(keys)

    def w(shape, scale=0.05):
        return (scale * jax.random.normal(next(ki), shape)).astype(jnp.float32)

    params = {}
    for tag in ("1", "2"):  # self / cross attention
        for name in ("q", "k", "v", "o"):
            params[f"w{name}{tag}"] = w((D, D))
            params[f"b{name}{tag}"] = w((1, D), 0.02)
    params["wf1"] = w((D, E))
    params["bf1"] = w((1, E), 0.02)
    params["wf2"] = w((E, D))
    params["bf2"] = w((1, D), 0.02)
    for tag in ("1", "2", "3"):
        params[f"g{tag}"] = (1.0 + w((1, D), 0.02)).astype(jnp.float32)
        params[f"be{tag}"] = w((1, D), 0.02)
    return params


if __name__ == "__main__":
    # Small, lane-dense config: D, E multiples of 128 and head_dim = 128 so all
    # head tiles are lane-aligned.  tq=16 (< T) exercises the K/V-hoist scratch
    # persisting across query tiles; production defaults are tq=128/256.
    B, T, S = 2, 32, 64                      # batch, target seq, memory seq
    hidden_dim, num_heads, expansion_dim = 256, 2, 512   # head_dim = 128

    key = jax.random.PRNGKey(0)
    k_trg, k_mem, k_par = jax.random.split(key, 3)
    trg = jax.random.normal(k_trg, (B, T, hidden_dim), dtype=jnp.float32)
    memory = jax.random.normal(k_mem, (B, S, hidden_dim), dtype=jnp.float32)
    params = init_params(k_par, hidden_dim, expansion_dim)

    out = decoder_layer(trg, memory, params, num_heads, tq=16)   # grid = (2, 2)
    out = jax.block_until_ready(out)

    ref = jax.block_until_ready(_ref_forward(trg, memory, params, num_heads))
    assert out.shape == (B, T, hidden_dim)
    max_err = float(jnp.max(jnp.abs(out - ref)))
    # bf16 activations/weights on the MXU + bf16-streamed trg/memory + approx EUP
    # reciprocal vs an all-f32 reference -> expect ~1e-2 max abs error.
    assert max_err < 4e-2, f"mismatch vs JAX reference (max abs err {max_err})"

    print("KERNEL_OK")
</pallas_src>

<mosaic_0001>
module attributes {stable_mosaic.version = 11 : i64} {
  func.func @decoder_layer_kernel(%arg0: i32, %arg1: i32, %arg2: memref<1x32x256xbf16, #tpu.memory_space<vmem>>, %arg3: memref<1x64x256xbf16, #tpu.memory_space<vmem>>, %arg4: memref<2x256x128xbf16, #tpu.memory_space<vmem>>, %arg5: memref<2x1x128xf32, #tpu.memory_space<vmem>>, %arg6: memref<2x256x128xbf16, #tpu.memory_space<vmem>>, %arg7: memref<2x1x128xf32, #tpu.memory_space<vmem>>, %arg8: memref<2x256x128xbf16, #tpu.memory_space<vmem>>, %arg9: memref<2x1x128xf32, #tpu.memory_space<vmem>>, %arg10: memref<2x128x256xbf16, #tpu.memory_space<vmem>>, %arg11: memref<1x256xf32, #tpu.memory_space<vmem>>, %arg12: memref<2x256x128xbf16, #tpu.memory_space<vmem>>, %arg13: memref<2x1x128xf32, #tpu.memory_space<vmem>>, %arg14: memref<2x256x128xbf16, #tpu.memory_space<vmem>>, %arg15: memref<2x1x128xf32, #tpu.memory_space<vmem>>, %arg16: memref<2x256x128xbf16, #tpu.memory_space<vmem>>, %arg17: memref<2x1x128xf32, #tpu.memory_space<vmem>>, %arg18: memref<2x128x256xbf16, #tpu.memory_space<vmem>>, %arg19: memref<1x256xf32, #tpu.memory_space<vmem>>, %arg20: memref<256x512xbf16, #tpu.memory_space<vmem>>, %arg21: memref<1x512xf32, #tpu.memory_space<vmem>>, %arg22: memref<512x256xbf16, #tpu.memory_space<vmem>>, %arg23: memref<1x256xf32, #tpu.memory_space<vmem>>, %arg24: memref<1x256xf32, #tpu.memory_space<vmem>>, %arg25: memref<1x256xf32, #tpu.memory_space<vmem>>, %arg26: memref<1x256xf32, #tpu.memory_space<vmem>>, %arg27: memref<1x256xf32, #tpu.memory_space<vmem>>, %arg28: memref<1x256xf32, #tpu.memory_space<vmem>>, %arg29: memref<1x256xf32, #tpu.memory_space<vmem>>, %arg30: memref<1x16x256xf32, #tpu.memory_space<vmem>>, %arg31: memref<2x32x128xbf16, #tpu.memory_space<vmem>>, %arg32: memref<2x32x128xbf16, #tpu.memory_space<vmem>>, %arg33: memref<2x64x128xbf16, #tpu.memory_space<vmem>>, %arg34: memref<2x64x128xbf16, #tpu.memory_space<vmem>>) attributes {dimension_semantics = [#tpu.dimension_semantics<parallel>, #tpu.dimension_semantics<arbitrary>], iteration_bounds = array<i64: 2, 2>, scalar_prefetch = 0 : i64, scratch_operands = 4 : i64, tpu.core_type = #tpu.core_type<tc>, window_params = [{transform_indices = @transform_0, window_bounds = array<i64: 1, 32, 256>}, {transform_indices = @transform_1, window_bounds = array<i64: 1, 64, 256>}, {pipeline_mode = #tpu.pipeline_mode<synchronous>, transform_indices = @transform_2, window_bounds = array<i64: 2, 256, 128>}, {pipeline_mode = #tpu.pipeline_mode<synchronous>, transform_indices = @transform_3, window_bounds = array<i64: 2, 1, 128>}, {pipeline_mode = #tpu.pipeline_mode<synchronous>, transform_indices = @transform_4, window_bounds = array<i64: 2, 256, 128>}, {pipeline_mode = #tpu.pipeline_mode<synchronous>, transform_indices = @transform_5, window_bounds = array<i64: 2, 1, 128>}, {pipeline_mode = #tpu.pipeline_mode<synchronous>, transform_indices = @transform_6, window_bounds = array<i64: 2, 256, 128>}, {pipeline_mode = #tpu.pipeline_mode<synchronous>, transform_indices = @transform_7, window_bounds = array<i64: 2, 1, 128>}, {pipeline_mode = #tpu.pipeline_mode<synchronous>, transform_indices = @transform_8, window_bounds = array<i64: 2, 128, 256>}, {pipeline_mode = #tpu.pipeline_mode<synchronous>, transform_indices = @transform_9, window_bounds = array<i64: 1, 256>}, {pipeline_mode = #tpu.pipeline_mode<synchronous>, transform_indices = @transform_10, window_bounds = array<i64: 2, 256, 128>}, {pipeline_mode = #tpu.pipeline_mode<synchronous>, transform_indices = @transform_11, window_bounds = array<i64: 2, 1, 128>}, {pipeline_mode = #tpu.pipeline_mode<synchronous>, transform_indices = @transform_12, window_bounds = array<i64: 2, 256, 128>}, {pipeline_mode = #tpu.pipeline_mode<synchronous>, transform_indices = @transform_13, window_bounds = array<i64: 2, 1, 128>}, {pipeline_mode = #tpu.pipeline_mode<synchronous>, transform_indices = @transform_14, window_bounds = array<i64: 2, 256, 128>}, {pipeline_mode = #tpu.pipeline_mode<synchronous>, transform_indices = @transform_15, window_bounds = array<i64: 2, 1, 128>}, {pipeline_mode = #tpu.pipeline_mode<synchronous>, transform_indices = @transform_16, window_bounds = array<i64: 2, 128, 256>}, {pipeline_mode = #tpu.pipeline_mode<synchronous>, transform_indices = @transform_17, window_bounds = array<i64: 1, 256>}, {pipeline_mode = #tpu.pipeline_mode<synchronous>, transform_indices = @transform_18, window_bounds = array<i64: 256, 512>}, {pipeline_mode = #tpu.pipeline_mode<synchronous>, transform_indices = @transform_19, window_bounds = array<i64: 1, 512>}, {pipeline_mode = #tpu.pipeline_mode<synchronous>, transform_indices = @transform_20, window_bounds = array<i64: 512, 256>}, {pipeline_mode = #tpu.pipeline_mode<synchronous>, transform_indices = @transform_21, window_bounds = array<i64: 1, 256>}, {pipeline_mode = #tpu.pipeline_mode<synchronous>, transform_indices = @transform_22, window_bounds = array<i64: 1, 256>}, {pipeline_mode = #tpu.pipeline_mode<synchronous>, transform_indices = @transform_23, window_bounds = array<i64: 1, 256>}, {pipeline_mode = #tpu.pipeline_mode<synchronous>, transform_indices = @transform_24, window_bounds = array<i64: 1, 256>}, {pipeline_mode = #tpu.pipeline_mode<synchronous>, transform_indices = @transform_25, window_bounds = array<i64: 1, 256>}, {pipeline_mode = #tpu.pipeline_mode<synchronous>, transform_indices = @transform_26, window_bounds = array<i64: 1, 256>}, {pipeline_mode = #tpu.pipeline_mode<synchronous>, transform_indices = @transform_27, window_bounds = array<i64: 1, 256>}, {transform_indices = @transform_28, window_bounds = array<i64: 1, 16, 256>}]} {
    %c0_i32 = arith.constant 0 : i32
    %0 = arith.cmpi eq, %arg1, %c0_i32 : i32
    %1 = arith.extui %0 : i1 to i32
    %c0_i32_0 = arith.constant 0 : i32
    %2 = arith.cmpi ne, %1, %c0_i32_0 : i32
    scf.if %2 {
      %c0_135 = arith.constant 0 : index
      %c0_136 = arith.constant 0 : index
      %c0_137 = arith.constant 0 : index
      %238 = vector.load %arg2[%c0_135, %c0_136, %c0_137] : memref<1x32x256xbf16, #tpu.memory_space<vmem>>, vector<1x32x256xbf16>
      %239 = vector.shape_cast %238 : vector<1x32x256xbf16> to vector<32x256xbf16>
      %c0_138 = arith.constant 0 : index
      %c0_139 = arith.constant 0 : index
      %c0_140 = arith.constant 0 : index
      %240 = vector.load %arg3[%c0_138, %c0_139, %c0_140] : memref<1x64x256xbf16, #tpu.memory_space<vmem>>, vector<1x64x256xbf16>
      %241 = vector.shape_cast %240 : vector<1x64x256xbf16> to vector<64x256xbf16>
      %c0_141 = arith.constant 0 : index
      %c0_142 = arith.constant 0 : index
      %c0_143 = arith.constant 0 : index
      %242 = vector.load %arg6[%c0_141, %c0_142, %c0_143] : memref<2x256x128xbf16, #tpu.memory_space<vmem>>, vector<1x256x128xbf16>
      %243 = vector.shape_cast %242 : vector<1x256x128xbf16> to vector<256x128xbf16>
      %cst_144 = arith.constant dense<0.000000e+00> : vector<32x128xf32>
      %244 = tpu.matmul %239, %243, %cst_144 {dimension_numbers = #tpu.dot_dimension_numbers<[1], [0], [0], [1], [0, 0, 1, 1], [], []>} : vector<32x256xbf16>, vector<256x128xbf16>, vector<32x128xf32> -> vector<32x128xf32>
      %c0_145 = arith.constant 0 : index
      %c0_146 = arith.constant 0 : index
      %c0_147 = arith.constant 0 : index
      %245 = vector.load %arg7[%c0_145, %c0_146, %c0_147] : memref<2x1x128xf32, #tpu.memory_space<vmem>>, vector<1x1x128xf32>
      %246 = vector.shape_cast %245 : vector<1x1x128xf32> to vector<1x128xf32>
      %247 = vector.broadcast %246 : vector<1x128xf32> to vector<32x128xf32>
      %248 = arith.addf %244, %247 : vector<32x128xf32>
      %249 = arith.truncf %248 : vector<32x128xf32> to vector<32x128xbf16>
      %c0_148 = arith.constant 0 : index
      %c0_149 = arith.constant 0 : index
      %c0_150 = arith.constant 0 : index
      %250 = vector.load %arg31[%c0_148, %c0_149, %c0_150] : memref<2x32x128xbf16, #tpu.memory_space<vmem>>, vector<1x32x128xbf16>
      %251 = vector.shape_cast %250 : vector<1x32x128xbf16> to vector<32x128xbf16>
      %252 = vector.shape_cast %249 : vector<32x128xbf16> to vector<1x32x128xbf16>
      tpu.vector_store %arg31[%c0_148, %c0_149, %c0_150], %252 {strides = array<i32>} : memref<2x32x128xbf16, #tpu.memory_space<vmem>>, vector<1x32x128xbf16>,
      %c0_151 = arith.constant 0 : index
      %c0_152 = arith.constant 0 : index
      %c0_153 = arith.constant 0 : index
      %253 = vector.load %arg8[%c0_151, %c0_152, %c0_153] : memref<2x256x128xbf16, #tpu.memory_space<vmem>>, vector<1x256x128xbf16>
      %254 = vector.shape_cast %253 : vector<1x256x128xbf16> to vector<256x128xbf16>
      %cst_154 = arith.constant dense<0.000000e+00> : vector<32x128xf32>
      %255 = tpu.matmul %239, %254, %cst_154 {dimension_numbers = #tpu.dot_dimension_numbers<[1], [0], [0], [1], [0, 0, 1, 1], [], []>} : vector<32x256xbf16>, vector<256x128xbf16>, vector<32x128xf32> -> vector<32x128xf32>
      %c0_155 = arith.constant 0 : index
      %c0_156 = arith.constant 0 : index
      %c0_157 = arith.constant 0 : index
      %256 = vector.load %arg9[%c0_155, %c0_156, %c0_157] : memref<2x1x128xf32, #tpu.memory_space<vmem>>, vector<1x1x128xf32>
      %257 = vector.shape_cast %256 : vector<1x1x128xf32> to vector<1x128xf32>
      %258 = vector.broadcast %257 : vector<1x128xf32> to vector<32x128xf32>
      %259 = arith.addf %255, %258 : vector<32x128xf32>
      %260 = arith.truncf %259 : vector<32x128xf32> to vector<32x128xbf16>
      %c0_158 = arith.constant 0 : index
      %c0_159 = arith.constant 0 : index
      %c0_160 = arith.constant 0 : index
      %261 = vector.load %arg32[%c0_158, %c0_159, %c0_160] : memref<2x32x128xbf16, #tpu.memory_space<vmem>>, vector<1x32x128xbf16>
      %262 = vector.shape_cast %261 : vector<1x32x128xbf16> to vector<32x128xbf16>
      %263 = vector.shape_cast %260 : vector<32x128xbf16> to vector<1x32x128xbf16>
      tpu.vector_store %arg32[%c0_158, %c0_159, %c0_160], %263 {strides = array<i32>} : memref<2x32x128xbf16, #tpu.memory_space<vmem>>, vector<1x32x128xbf16>,
      %c0_161 = arith.constant 0 : index
      %c0_162 = arith.constant 0 : index
      %c0_163 = arith.constant 0 : index
      %264 = vector.load %arg14[%c0_161, %c0_162, %c0_163] : memref<2x256x128xbf16, #tpu.memory_space<vmem>>, vector<1x256x128xbf16>
      %265 = vector.shape_cast %264 : vector<1x256x128xbf16> to vector<256x128xbf16>
      %cst_164 = arith.constant dense<0.000000e+00> : vector<64x128xf32>
      %266 = tpu.matmul %241, %265, %cst_164 {dimension_numbers = #tpu.dot_dimension_numbers<[1], [0], [0], [1], [0, 0, 1, 1], [], []>} : vector<64x256xbf16>, vector<256x128xbf16>, vector<64x128xf32> -> vector<64x128xf32>
      %c0_165 = arith.constant 0 : index
      %c0_166 = arith.constant 0 : index
      %c0_167 = arith.constant 0 : index
      %267 = vector.load %arg15[%c0_165, %c0_166, %c0_167] : memref<2x1x128xf32, #tpu.memory_space<vmem>>, vector<1x1x128xf32>
      %268 = vector.shape_cast %267 : vector<1x1x128xf32> to vector<1x128xf32>
      %269 = vector.broadcast %268 : vector<1x128xf32> to vector<64x128xf32>
      %270 = arith.addf %266, %269 : vector<64x128xf32>
      %271 = arith.truncf %270 : vector<64x128xf32> to vector<64x128xbf16>
      %c0_168 = arith.constant 0 : index
      %c0_169 = arith.constant 0 : index
      %c0_170 = arith.constant 0 : index
      %272 = vector.load %arg33[%c0_168, %c0_169, %c0_170] : memref<2x64x128xbf16, #tpu.memory_space<vmem>>, vector<1x64x128xbf16>
      %273 = vector.shape_cast %272 : vector<1x64x128xbf16> to vector<64x128xbf16>
      %274 = vector.shape_cast %271 : vector<64x128xbf16> to vector<1x64x128xbf16>
      tpu.vector_store %arg33[%c0_168, %c0_169, %c0_170], %274 {strides = array<i32>} : memref<2x64x128xbf16, #tpu.memory_space<vmem>>, vector<1x64x128xbf16>,
      %c0_171 = arith.constant 0 : index
      %c0_172 = arith.constant 0 : index
      %c0_173 = arith.constant 0 : index
      %275 = vector.load %arg16[%c0_171, %c0_172, %c0_173] : memref<2x256x128xbf16, #tpu.memory_space<vmem>>, vector<1x256x128xbf16>
      %276 = vector.shape_cast %275 : vector<1x256x128xbf16> to vector<256x128xbf16>
      %cst_174 = arith.constant dense<0.000000e+00> : vector<64x128xf32>
      %277 = tpu.matmul %241, %276, %cst_174 {dimension_numbers = #tpu.dot_dimension_numbers<[1], [0], [0], [1], [0, 0, 1, 1], [], []>} : vector<64x256xbf16>, vector<256x128xbf16>, vector<64x128xf32> -> vector<64x128xf32>
      %c0_175 = arith.constant 0 : index
      %c0_176 = arith.constant 0 : index
      %c0_177 = arith.constant 0 : index
      %278 = vector.load %arg17[%c0_175, %c0_176, %c0_177] : memref<2x1x128xf32, #tpu.memory_space<vmem>>, vector<1x1x128xf32>
      %279 = vector.shape_cast %278 : vector<1x1x128xf32> to vector<1x128xf32>
      %280 = vector.broadcast %279 : vector<1x128xf32> to vector<64x128xf32>
      %281 = arith.addf %277, %280 : vector<64x128xf32>
      %282 = arith.truncf %281 : vector<64x128xf32> to vector<64x128xbf16>
      %c0_178 = arith.constant 0 : index
      %c0_179 = arith.constant 0 : index
      %c0_180 = arith.constant 0 : index
      %283 = vector.load %arg34[%c0_178, %c0_179, %c0_180] : memref<2x64x128xbf16, #tpu.memory_space<vmem>>, vector<1x64x128xbf16>
      %284 = vector.shape_cast %283 : vector<1x64x128xbf16> to vector<64x128xbf16>
      %285 = vector.shape_cast %282 : vector<64x128xbf16> to vector<1x64x128xbf16>
      tpu.vector_store %arg34[%c0_178, %c0_179, %c0_180], %285 {strides = array<i32>} : memref<2x64x128xbf16, #tpu.memory_space<vmem>>, vector<1x64x128xbf16>,
      %c1_181 = arith.constant 1 : index
      %c0_182 = arith.constant 0 : index
      %c0_183 = arith.constant 0 : index
      %286 = vector.load %arg6[%c1_181, %c0_182, %c0_183] : memref<2x256x128xbf16, #tpu.memory_space<vmem>>, vector<1x256x128xbf16>
      %287 = vector.shape_cast %286 : vector<1x256x128xbf16> to vector<256x128xbf16>
      %cst_184 = arith.constant dense<0.000000e+00> : vector<32x128xf32>
      %288 = tpu.matmul %239, %287, %cst_184 {dimension_numbers = #tpu.dot_dimension_numbers<[1], [0], [0], [1], [0, 0, 1, 1], [], []>} : vector<32x256xbf16>, vector<256x128xbf16>, vector<32x128xf32> -> vector<32x128xf32>
      %c1_185 = arith.constant 1 : index
      %c0_186 = arith.constant 0 : index
      %c0_187 = arith.constant 0 : index
      %289 = vector.load %arg7[%c1_185, %c0_186, %c0_187] : memref<2x1x128xf32, #tpu.memory_space<vmem>>, vector<1x1x128xf32>
      %290 = vector.shape_cast %289 : vector<1x1x128xf32> to vector<1x128xf32>
      %291 = vector.broadcast %290 : vector<1x128xf32> to vector<32x128xf32>
      %292 = arith.addf %288, %291 : vector<32x128xf32>
      %293 = arith.truncf %292 : vector<32x128xf32> to vector<32x128xbf16>
      %c1_188 = arith.constant 1 : index
      %c0_189 = arith.constant 0 : index
      %c0_190 = arith.constant 0 : index
      %294 = vector.load %arg31[%c1_188, %c0_189, %c0_190] : memref<2x32x128xbf16, #tpu.memory_space<vmem>>, vector<1x32x128xbf16>
      %295 = vector.shape_cast %294 : vector<1x32x128xbf16> to vector<32x128xbf16>
      %296 = vector.shape_cast %293 : vector<32x128xbf16> to vector<1x32x128xbf16>
      tpu.vector_store %arg31[%c1_188, %c0_189, %c0_190], %296 {strides = array<i32>} : memref<2x32x128xbf16, #tpu.memory_space<vmem>>, vector<1x32x128xbf16>,
      %c1_191 = arith.constant 1 : index
      %c0_192 = arith.constant 0 : index
      %c0_193 = arith.constant 0 : index
      %297 = vector.load %arg8[%c1_191, %c0_192, %c0_193] : memref<2x256x128xbf16, #tpu.memory_space<vmem>>, vector<1x256x128xbf16>
      %298 = vector.shape_cast %297 : vector<1x256x128xbf16> to vector<256x128xbf16>
      %cst_194 = arith.constant dense<0.000000e+00> : vector<32x128xf32>
      %299 = tpu.matmul %239, %298, %cst_194 {dimension_numbers = #tpu.dot_dimension_numbers<[1], [0], [0], [1], [0, 0, 1, 1], [], []>} : vector<32x256xbf16>, vector<256x128xbf16>, vector<32x128xf32> -> vector<32x128xf32>
      %c1_195 = arith.constant 1 : index
      %c0_196 = arith.constant 0 : index
      %c0_197 = arith.constant 0 : index
      %300 = vector.load %arg9[%c1_195, %c0_196, %c0_197] : memref<2x1x128xf32, #tpu.memory_space<vmem>>, vector<1x1x128xf32>
      %301 = vector.shape_cast %300 : vector<1x1x128xf32> to vector<1x128xf32>
      %302 = vector.broadcast %301 : vector<1x128xf32> to vector<32x128xf32>
      %303 = arith.addf %299, %302 : vector<32x128xf32>
      %304 = arith.truncf %303 : vector<32x128xf32> to vector<32x128xbf16>
      %c1_198 = arith.constant 1 : index
      %c0_199 = arith.constant 0 : index
      %c0_200 = arith.constant 0 : index
      %305 = vector.load %arg32[%c1_198, %c0_199, %c0_200] : memref<2x32x128xbf16, #tpu.memory_space<vmem>>, vector<1x32x128xbf16>
      %306 = vector.shape_cast %305 : vector<1x32x128xbf16> to vector<32x128xbf16>
      %307 = vector.shape_cast %304 : vector<32x128xbf16> to vector<1x32x128xbf16>
      tpu.vector_store %arg32[%c1_198, %c0_199, %c0_200], %307 {strides = array<i32>} : memref<2x32x128xbf16, #tpu.memory_space<vmem>>, vector<1x32x128xbf16>,
      %c1_201 = arith.constant 1 : index
      %c0_202 = arith.constant 0 : index
      %c0_203 = arith.constant 0 : index
      %308 = vector.load %arg14[%c1_201, %c0_202, %c0_203] : memref<2x256x128xbf16, #tpu.memory_space<vmem>>, vector<1x256x128xbf16>
      %309 = vector.shape_cast %308 : vector<1x256x128xbf16> to vector<256x128xbf16>
      %cst_204 = arith.constant dense<0.000000e+00> : vector<64x128xf32>
      %310 = tpu.matmul %241, %309, %cst_204 {dimension_numbers = #tpu.dot_dimension_numbers<[1], [0], [0], [1], [0, 0, 1, 1], [], []>} : vector<64x256xbf16>, vector<256x128xbf16>, vector<64x128xf32> -> vector<64x128xf32>
      %c1_205 = arith.constant 1 : index
      %c0_206 = arith.constant 0 : index
      %c0_207 = arith.constant 0 : index
      %311 = vector.load %arg15[%c1_205, %c0_206, %c0_207] : memref<2x1x128xf32, #tpu.memory_space<vmem>>, vector<1x1x128xf32>
      %312 = vector.shape_cast %311 : vector<1x1x128xf32> to vector<1x128xf32>
      %313 = vector.broadcast %312 : vector<1x128xf32> to vector<64x128xf32>
      %314 = arith.addf %310, %313 : vector<64x128xf32>
      %315 = arith.truncf %314 : vector<64x128xf32> to vector<64x128xbf16>
      %c1_208 = arith.constant 1 : index
      %c0_209 = arith.constant 0 : index
      %c0_210 = arith.constant 0 : index
      %316 = vector.load %arg33[%c1_208, %c0_209, %c0_210] : memref<2x64x128xbf16, #tpu.memory_space<vmem>>, vector<1x64x128xbf16>
      %317 = vector.shape_cast %316 : vector<1x64x128xbf16> to vector<64x128xbf16>
      %318 = vector.shape_cast %315 : vector<64x128xbf16> to vector<1x64x128xbf16>
      tpu.vector_store %arg33[%c1_208, %c0_209, %c0_210], %318 {strides = array<i32>} : memref<2x64x128xbf16, #tpu.memory_space<vmem>>, vector<1x64x128xbf16>,
      %c1_211 = arith.constant 1 : index
      %c0_212 = arith.constant 0 : index
      %c0_213 = arith.constant 0 : index
      %319 = vector.load %arg16[%c1_211, %c0_212, %c0_213] : memref<2x256x128xbf16, #tpu.memory_space<vmem>>, vector<1x256x128xbf16>
      %320 = vector.shape_cast %319 : vector<1x256x128xbf16> to vector<256x128xbf16>
      %cst_214 = arith.constant dense<0.000000e+00> : vector<64x128xf32>
      %321 = tpu.matmul %241, %320, %cst_214 {dimension_numbers = #tpu.dot_dimension_numbers<[1], [0], [0], [1], [0, 0, 1, 1], [], []>} : vector<64x256xbf16>, vector<256x128xbf16>, vector<64x128xf32> -> vector<64x128xf32>
      %c1_215 = arith.constant 1 : index
      %c0_216 = arith.constant 0 : index
      %c0_217 = arith.constant 0 : index
      %322 = vector.load %arg17[%c1_215, %c0_216, %c0_217] : memref<2x1x128xf32, #tpu.memory_space<vmem>>, vector<1x1x128xf32>
      %323 = vector.shape_cast %322 : vector<1x1x128xf32> to vector<1x128xf32>
      %324 = vector.broadcast %323 : vector<1x128xf32> to vector<64x128xf32>
      %325 = arith.addf %321, %324 : vector<64x128xf32>
      %326 = arith.truncf %325 : vector<64x128xf32> to vector<64x128xbf16>
      %c1_218 = arith.constant 1 : index
      %c0_219 = arith.constant 0 : index
      %c0_220 = arith.constant 0 : index
      %327 = vector.load %arg34[%c1_218, %c0_219, %c0_220] : memref<2x64x128xbf16, #tpu.memory_space<vmem>>, vector<1x64x128xbf16>
      %328 = vector.shape_cast %327 : vector<1x64x128xbf16> to vector<64x128xbf16>
      %329 = vector.shape_cast %326 : vector<64x128xbf16> to vector<1x64x128xbf16>
      tpu.vector_store %arg34[%c1_218, %c0_219, %c0_220], %329 {strides = array<i32>} : memref<2x64x128xbf16, #tpu.memory_space<vmem>>, vector<1x64x128xbf16>,
    } else {
    }
    %c16_i32 = arith.constant 16 : i32
    %3 = arith.muli %arg1, %c16_i32 : i32
    %4 = tpu.assume_multiple %3, 16 : i32
    %c0 = arith.constant 0 : index
    %5 = arith.index_cast %4 : i32 to index
    %c0_1 = arith.constant 0 : index
    %6 = vector.load %arg2[%c0, %5, %c0_1] : memref<1x32x256xbf16, #tpu.memory_space<vmem>>, vector<1x16x256xbf16>
    %7 = vector.shape_cast %6 : vector<1x16x256xbf16> to vector<16x256xbf16>
    %8 = arith.extf %7 : vector<16x256xbf16> to vector<16x256xf32>
    %cst = arith.constant 0.000000e+00 : f32
    %9 = vector.broadcast %cst : f32 to vector<16x256xf32>
    %c0_2 = arith.constant 0 : index
    %c0_3 = arith.constant 0 : index
    %c0_4 = arith.constant 0 : index
    %10 = vector.load %arg4[%c0_2, %c0_3, %c0_4] : memref<2x256x128xbf16, #tpu.memory_space<vmem>>, vector<1x256x128xbf16>
    %11 = vector.shape_cast %10 : vector<1x256x128xbf16> to vector<256x128xbf16>
    %cst_5 = arith.constant dense<0.000000e+00> : vector<16x128xf32>
    %12 = tpu.matmul %7, %11, %cst_5 {dimension_numbers = #tpu.dot_dimension_numbers<[1], [0], [0], [1], [0, 0, 1, 1], [], []>} : vector<16x256xbf16>, vector<256x128xbf16>, vector<16x128xf32> -> vector<16x128xf32>
    %c0_6 = arith.constant 0 : index
    %c0_7 = arith.constant 0 : index
    %c0_8 = arith.constant 0 : index
    %13 = vector.load %arg5[%c0_6, %c0_7, %c0_8] : memref<2x1x128xf32, #tpu.memory_space<vmem>>, vector<1x1x128xf32>
    %14 = vector.shape_cast %13 : vector<1x1x128xf32> to vector<1x128xf32>
    %15 = vector.broadcast %14 : vector<1x128xf32> to vector<16x128xf32>
    %16 = arith.addf %12, %15 : vector<16x128xf32>
    %cst_9 = arith.constant 0.0883883461 : f32
    %17 = vector.broadcast %cst_9 : f32 to vector<16x128xf32>
    %18 = arith.mulf %16, %17 : vector<16x128xf32>
    %19 = arith.truncf %18 : vector<16x128xf32> to vector<16x128xbf16>
    %c0_10 = arith.constant 0 : index
    %c0_11 = arith.constant 0 : index
    %c0_12 = arith.constant 0 : index
    %20 = vector.load %arg31[%c0_10, %c0_11, %c0_12] : memref<2x32x128xbf16, #tpu.memory_space<vmem>>, vector<1x32x128xbf16>
    %21 = vector.shape_cast %20 : vector<1x32x128xbf16> to vector<32x128xbf16>
    %cst_13 = arith.constant dense<0.000000e+00> : vector<16x32xf32>
    %22 = tpu.matmul %19, %21, %cst_13 {dimension_numbers = #tpu.dot_dimension_numbers<[1], [1], [0], [0], [0, 0, 1, 0], [], []>} : vector<16x128xbf16>, vector<32x128xbf16>, vector<16x32xf32> -> vector<16x32xf32>
    %cst_14 = arith.constant dense<0xFF800000> : vector<16xf32>
    %23 = vector.multi_reduction <maximumf>, %22, %cst_14 [1] : vector<16x32xf32> to vector<16xf32>
    %24 = vector.shape_cast %23 : vector<16xf32> to vector<16x1xf32>
    %25 = vector.broadcast %24 : vector<16x1xf32> to vector<16x32xf32>
    %26 = arith.subf %22, %25 : vector<16x32xf32>
    %27 = math.exp %26 : vector<16x32xf32>
    %cst_15 = arith.constant dense<0.000000e+00> : vector<16xf32>
    %28 = vector.multi_reduction <add>, %27, %cst_15 [1] : vector<16x32xf32> to vector<16xf32>
    %29 = vector.shape_cast %28 : vector<16xf32> to vector<16x1xf32>
    %30 = tpu.reciprocal %29 {approx = true} : vector<16x1xf32> -> vector<16x1xf32>
    %31 = vector.broadcast %30 : vector<16x1xf32> to vector<16x32xf32>
    %32 = arith.mulf %27, %31 : vector<16x32xf32>
    %33 = arith.truncf %32 : vector<16x32xf32> to vector<16x32xbf16>
    %c0_16 = arith.constant 0 : index
    %c0_17 = arith.constant 0 : index
    %c0_18 = arith.constant 0 : index
    %34 = vector.load %arg32[%c0_16, %c0_17, %c0_18] : memref<2x32x128xbf16, #tpu.memory_space<vmem>>, vector<1x32x128xbf16>
    %35 = vector.shape_cast %34 : vector<1x32x128xbf16> to vector<32x128xbf16>
    %cst_19 = arith.constant dense<0.000000e+00> : vector<16x128xf32>
    %36 = tpu.matmul %33, %35, %cst_19 {dimension_numbers = #tpu.dot_dimension_numbers<[1], [0], [0], [1], [0, 0, 1, 1], [], []>} : vector<16x32xbf16>, vector<32x128xbf16>, vector<16x128xf32> -> vector<16x128xf32>
    %37 = arith.truncf %36 : vector<16x128xf32> to vector<16x128xbf16>
    %c0_20 = arith.constant 0 : index
    %c0_21 = arith.constant 0 : index
    %c0_22 = arith.constant 0 : index
    %38 = vector.load %arg10[%c0_20, %c0_21, %c0_22] : memref<2x128x256xbf16, #tpu.memory_space<vmem>>, vector<1x128x256xbf16>
    %39 = vector.shape_cast %38 : vector<1x128x256xbf16> to vector<128x256xbf16>
    %cst_23 = arith.constant dense<0.000000e+00> : vector<16x256xf32>
    %40 = tpu.matmul %37, %39, %cst_23 {dimension_numbers = #tpu.dot_dimension_numbers<[1], [0], [0], [1], [0, 0, 1, 1], [], []>} : vector<16x128xbf16>, vector<128x256xbf16>, vector<16x256xf32> -> vector<16x256xf32>
    %41 = arith.addf %9, %40 : vector<16x256xf32>
    %c1 = arith.constant 1 : index
    %c0_24 = arith.constant 0 : index
    %c0_25 = arith.constant 0 : index
    %42 = vector.load %arg4[%c1, %c0_24, %c0_25] : memref<2x256x128xbf16, #tpu.memory_space<vmem>>, vector<1x256x128xbf16>
    %43 = vector.shape_cast %42 : vector<1x256x128xbf16> to vector<256x128xbf16>
    %cst_26 = arith.constant dense<0.000000e+00> : vector<16x128xf32>
    %44 = tpu.matmul %7, %43, %cst_26 {dimension_numbers = #tpu.dot_dimension_numbers<[1], [0], [0], [1], [0, 0, 1, 1], [], []>} : vector<16x256xbf16>, vector<256x128xbf16>, vector<16x128xf32> -> vector<16x128xf32>
    %c1_27 = arith.constant 1 : index
    %c0_28 = arith.constant 0 : index
    %c0_29 = arith.constant 0 : index
    %45 = vector.load %arg5[%c1_27, %c0_28, %c0_29] : memref<2x1x128xf32, #tpu.memory_space<vmem>>, vector<1x1x128xf32>
    %46 = vector.shape_cast %45 : vector<1x1x128xf32> to vector<1x128xf32>
    %47 = vector.broadcast %46 : vector<1x128xf32> to vector<16x128xf32>
    %48 = arith.addf %44, %47 : vector<16x128xf32>
    %cst_30 = arith.constant 0.0883883461 : f32
    %49 = vector.broadcast %cst_30 : f32 to vector<16x128xf32>
    %50 = arith.mulf %48, %49 : vector<16x128xf32>
    %51 = arith.truncf %50 : vector<16x128xf32> to vector<16x128xbf16>
    %c1_31 = arith.constant 1 : index
    %c0_32 = arith.constant 0 : index
    %c0_33 = arith.constant 0 : index
    %52 = vector.load %arg31[%c1_31, %c0_32, %c0_33] : memref<2x32x128xbf16, #tpu.memory_space<vmem>>, vector<1x32x128xbf16>
    %53 = vector.shape_cast %52 : vector<1x32x128xbf16> to vector<32x128xbf16>
    %cst_34 = arith.constant dense<0.000000e+00> : vector<16x32xf32>
    %54 = tpu.matmul %51, %53, %cst_34 {dimension_numbers = #tpu.dot_dimension_numbers<[1], [1], [0], [0], [0, 0, 1, 0], [], []>} : vector<16x128xbf16>, vector<32x128xbf16>, vector<16x32xf32> -> vector<16x32xf32>
    %cst_35 = arith.constant dense<0xFF800000> : vector<16xf32>
    %55 = vector.multi_reduction <maximumf>, %54, %cst_35 [1] : vector<16x32xf32> to vector<16xf32>
    %56 = vector.shape_cast %55 : vector<16xf32> to vector<16x1xf32>
    %57 = vector.broadcast %56 : vector<16x1xf32> to vector<16x32xf32>
    %58 = arith.subf %54, %57 : vector<16x32xf32>
    %59 = math.exp %58 : vector<16x32xf32>
    %cst_36 = arith.constant dense<0.000000e+00> : vector<16xf32>
    %60 = vector.multi_reduction <add>, %59, %cst_36 [1] : vector<16x32xf32> to vector<16xf32>
    %61 = vector.shape_cast %60 : vector<16xf32> to vector<16x1xf32>
    %62 = tpu.reciprocal %61 {approx = true} : vector<16x1xf32> -> vector<16x1xf32>
    %63 = vector.broadcast %62 : vector<16x1xf32> to vector<16x32xf32>
    %64 = arith.mulf %59, %63 : vector<16x32xf32>
    %65 = arith.truncf %64 : vector<16x32xf32> to vector<16x32xbf16>
    %c1_37 = arith.constant 1 : index
    %c0_38 = arith.constant 0 : index
    %c0_39 = arith.constant 0 : index
    %66 = vector.load %arg32[%c1_37, %c0_38, %c0_39] : memref<2x32x128xbf16, #tpu.memory_space<vmem>>, vector<1x32x128xbf16>
    %67 = vector.shape_cast %66 : vector<1x32x128xbf16> to vector<32x128xbf16>
    %cst_40 = arith.constant dense<0.000000e+00> : vector<16x128xf32>
    %68 = tpu.matmul %65, %67, %cst_40 {dimension_numbers = #tpu.dot_dimension_numbers<[1], [0], [0], [1], [0, 0, 1, 1], [], []>} : vector<16x32xbf16>, vector<32x128xbf16>, vector<16x128xf32> -> vector<16x128xf32>
    %69 = arith.truncf %68 : vector<16x128xf32> to vector<16x128xbf16>
    %c1_41 = arith.constant 1 : index
    %c0_42 = arith.constant 0 : index
    %c0_43 = arith.constant 0 : index
    %70 = vector.load %arg10[%c1_41, %c0_42, %c0_43] : memref<2x128x256xbf16, #tpu.memory_space<vmem>>, vector<1x128x256xbf16>
    %71 = vector.shape_cast %70 : vector<1x128x256xbf16> to vector<128x256xbf16>
    %cst_44 = arith.constant dense<0.000000e+00> : vector<16x256xf32>
    %72 = tpu.matmul %69, %71, %cst_44 {dimension_numbers = #tpu.dot_dimension_numbers<[1], [0], [0], [1], [0, 0, 1, 1], [], []>} : vector<16x128xbf16>, vector<128x256xbf16>, vector<16x256xf32> -> vector<16x256xf32>
    %73 = arith.addf %41, %72 : vector<16x256xf32>
    %c0_45 = arith.constant 0 : index
    %c0_46 = arith.constant 0 : index
    %74 = vector.load %arg11[%c0_45, %c0_46] : memref<1x256xf32, #tpu.memory_space<vmem>>, vector<1x256xf32>
    %75 = vector.broadcast %74 : vector<1x256xf32> to vector<16x256xf32>
    %76 = arith.addf %73, %75 : vector<16x256xf32>
    %77 = arith.addf %76, %8 : vector<16x256xf32>
    %c0_47 = arith.constant 0 : index
    %c0_48 = arith.constant 0 : index
    %78 = vector.load %arg24[%c0_47, %c0_48] : memref<1x256xf32, #tpu.memory_space<vmem>>, vector<1x256xf32>
    %c0_49 = arith.constant 0 : index
    %c0_50 = arith.constant 0 : index
    %79 = vector.load %arg25[%c0_49, %c0_50] : memref<1x256xf32, #tpu.memory_space<vmem>>, vector<1x256xf32>
    %cst_51 = arith.constant dense<0.000000e+00> : vector<16xf32>
    %80 = vector.multi_reduction <add>, %77, %cst_51 [1] : vector<16x256xf32> to vector<16xf32>
    %81 = vector.shape_cast %80 : vector<16xf32> to vector<16x1xf32>
    %cst_52 = arith.constant 2.560000e+02 : f32
    %82 = vector.broadcast %cst_52 : f32 to vector<16x1xf32>
    %83 = arith.divf %81, %82 : vector<16x1xf32>
    %84 = vector.broadcast %83 : vector<16x1xf32> to vector<16x256xf32>
    %85 = arith.subf %77, %84 : vector<16x256xf32>
    %86 = arith.mulf %85, %85 : vector<16x256xf32>
    %cst_53 = arith.constant dense<0.000000e+00> : vector<16xf32>
    %87 = vector.multi_reduction <add>, %86, %cst_53 [1] : vector<16x256xf32> to vector<16xf32>
    %88 = vector.shape_cast %87 : vector<16xf32> to vector<16x1xf32>
    %cst_54 = arith.constant 2.560000e+02 : f32
    %89 = vector.broadcast %cst_54 : f32 to vector<16x1xf32>
    %90 = arith.divf %88, %89 : vector<16x1xf32>
    %91 = vector.broadcast %83 : vector<16x1xf32> to vector<16x256xf32>
    %92 = arith.subf %77, %91 : vector<16x256xf32>
    %cst_55 = arith.constant 9.99999974E-6 : f32
    %93 = vector.broadcast %cst_55 : f32 to vector<16x1xf32>
    %94 = arith.addf %90, %93 : vector<16x1xf32>
    %95 = math.rsqrt %94 : vector<16x1xf32>
    %96 = vector.broadcast %95 : vector<16x1xf32> to vector<16x256xf32>
    %97 = arith.mulf %92, %96 : vector<16x256xf32>
    %98 = vector.broadcast %78 : vector<1x256xf32> to vector<16x256xf32>
    %99 = arith.mulf %97, %98 : vector<16x256xf32>
    %100 = vector.broadcast %79 : vector<1x256xf32> to vector<16x256xf32>
    %101 = arith.addf %99, %100 : vector<16x256xf32>
    %102 = arith.truncf %101 : vector<16x256xf32> to vector<16x256xbf16>
    %cst_56 = arith.constant 0.000000e+00 : f32
    %103 = vector.broadcast %cst_56 : f32 to vector<16x256xf32>
    %c0_57 = arith.constant 0 : index
    %c0_58 = arith.constant 0 : index
    %c0_59 = arith.constant 0 : index
    %104 = vector.load %arg12[%c0_57, %c0_58, %c0_59] : memref<2x256x128xbf16, #tpu.memory_space<vmem>>, vector<1x256x128xbf16>
    %105 = vector.shape_cast %104 : vector<1x256x128xbf16> to vector<256x128xbf16>
    %cst_60 = arith.constant dense<0.000000e+00> : vector<16x128xf32>
    %106 = tpu.matmul %102, %105, %cst_60 {dimension_numbers = #tpu.dot_dimension_numbers<[1], [0], [0], [1], [0, 0, 1, 1], [], []>} : vector<16x256xbf16>, vector<256x128xbf16>, vector<16x128xf32> -> vector<16x128xf32>
    %c0_61 = arith.constant 0 : index
    %c0_62 = arith.constant 0 : index
    %c0_63 = arith.constant 0 : index
    %107 = vector.load %arg13[%c0_61, %c0_62, %c0_63] : memref<2x1x128xf32, #tpu.memory_space<vmem>>, vector<1x1x128xf32>
    %108 = vector.shape_cast %107 : vector<1x1x128xf32> to vector<1x128xf32>
    %109 = vector.broadcast %108 : vector<1x128xf32> to vector<16x128xf32>
    %110 = arith.addf %106, %109 : vector<16x128xf32>
    %cst_64 = arith.constant 0.0883883461 : f32
    %111 = vector.broadcast %cst_64 : f32 to vector<16x128xf32>
    %112 = arith.mulf %110, %111 : vector<16x128xf32>
    %113 = arith.truncf %112 : vector<16x128xf32> to vector<16x128xbf16>
    %c0_65 = arith.constant 0 : index
    %c0_66 = arith.constant 0 : index
    %c0_67 = arith.constant 0 : index
    %114 = vector.load %arg33[%c0_65, %c0_66, %c0_67] : memref<2x64x128xbf16, #tpu.memory_space<vmem>>, vector<1x64x128xbf16>
    %115 = vector.shape_cast %114 : vector<1x64x128xbf16> to vector<64x128xbf16>
    %cst_68 = arith.constant dense<0.000000e+00> : vector<16x64xf32>
    %116 = tpu.matmul %113, %115, %cst_68 {dimension_numbers = #tpu.dot_dimension_numbers<[1], [1], [0], [0], [0, 0, 1, 0], [], []>} : vector<16x128xbf16>, vector<64x128xbf16>, vector<16x64xf32> -> vector<16x64xf32>
    %cst_69 = arith.constant dense<0xFF800000> : vector<16xf32>
    %117 = vector.multi_reduction <maximumf>, %116, %cst_69 [1] : vector<16x64xf32> to vector<16xf32>
    %118 = vector.shape_cast %117 : vector<16xf32> to vector<16x1xf32>
    %119 = vector.broadcast %118 : vector<16x1xf32> to vector<16x64xf32>
    %120 = arith.subf %116, %119 : vector<16x64xf32>
    %121 = math.exp %120 : vector<16x64xf32>
    %cst_70 = arith.constant dense<0.000000e+00> : vector<16xf32>
    %122 = vector.multi_reduction <add>, %121, %cst_70 [1] : vector<16x64xf32> to vector<16xf32>
    %123 = vector.shape_cast %122 : vector<16xf32> to vector<16x1xf32>
    %124 = tpu.reciprocal %123 {approx = true} : vector<16x1xf32> -> vector<16x1xf32>
    %125 = vector.broadcast %124 : vector<16x1xf32> to vector<16x64xf32>
    %126 = arith.mulf %121, %125 : vector<16x64xf32>
    %127 = arith.truncf %126 : vector<16x64xf32> to vector<16x64xbf16>
    %c0_71 = arith.constant 0 : index
    %c0_72 = arith.constant 0 : index
    %c0_73 = arith.constant 0 : index
    %128 = vector.load %arg34[%c0_71, %c0_72, %c0_73] : memref<2x64x128xbf16, #tpu.memory_space<vmem>>, vector<1x64x128xbf16>
    %129 = vector.shape_cast %128 : vector<1x64x128xbf16> to vector<64x128xbf16>
    %cst_74 = arith.constant dense<0.000000e+00> : vector<16x128xf32>
    %130 = tpu.matmul %127, %129, %cst_74 {dimension_numbers = #tpu.dot_dimension_numbers<[1], [0], [0], [1], [0, 0, 1, 1], [], []>} : vector<16x64xbf16>, vector<64x128xbf16>, vector<16x128xf32> -> vector<16x128xf32>
    %131 = arith.truncf %130 : vector<16x128xf32> to vector<16x128xbf16>
    %c0_75 = arith.constant 0 : index
    %c0_76 = arith.constant 0 : index
    %c0_77 = arith.constant 0 : index
    %132 = vector.load %arg18[%c0_75, %c0_76, %c0_77] : memref<2x128x256xbf16, #tpu.memory_space<vmem>>, vector<1x128x256xbf16>
    %133 = vector.shape_cast %132 : vector<1x128x256xbf16> to vector<128x256xbf16>
    %cst_78 = arith.constant dense<0.000000e+00> : vector<16x256xf32>
    %134 = tpu.matmul %131, %133, %cst_78 {dimension_numbers = #tpu.dot_dimension_numbers<[1], [0], [0], [1], [0, 0, 1, 1], [], []>} : vector<16x128xbf16>, vector<128x256xbf16>, vector<16x256xf32> -> vector<16x256xf32>
    %135 = arith.addf %103, %134 : vector<16x256xf32>
    %c1_79 = arith.constant 1 : index
    %c0_80 = arith.constant 0 : index
    %c0_81 = arith.constant 0 : index
    %136 = vector.load %arg12[%c1_79, %c0_80, %c0_81] : memref<2x256x128xbf16, #tpu.memory_space<vmem>>, vector<1x256x128xbf16>
    %137 = vector.shape_cast %136 : vector<1x256x128xbf16> to vector<256x128xbf16>
    %cst_82 = arith.constant dense<0.000000e+00> : vector<16x128xf32>
    %138 = tpu.matmul %102, %137, %cst_82 {dimension_numbers = #tpu.dot_dimension_numbers<[1], [0], [0], [1], [0, 0, 1, 1], [], []>} : vector<16x256xbf16>, vector<256x128xbf16>, vector<16x128xf32> -> vector<16x128xf32>
    %c1_83 = arith.constant 1 : index
    %c0_84 = arith.constant 0 : index
    %c0_85 = arith.constant 0 : index
    %139 = vector.load %arg13[%c1_83, %c0_84, %c0_85] : memref<2x1x128xf32, #tpu.memory_space<vmem>>, vector<1x1x128xf32>
    %140 = vector.shape_cast %139 : vector<1x1x128xf32> to vector<1x128xf32>
    %141 = vector.broadcast %140 : vector<1x128xf32> to vector<16x128xf32>
    %142 = arith.addf %138, %141 : vector<16x128xf32>
    %cst_86 = arith.constant 0.0883883461 : f32
    %143 = vector.broadcast %cst_86 : f32 to vector<16x128xf32>
    %144 = arith.mulf %142, %143 : vector<16x128xf32>
    %145 = arith.truncf %144 : vector<16x128xf32> to vector<16x128xbf16>
    %c1_87 = arith.constant 1 : index
    %c0_88 = arith.constant 0 : index
    %c0_89 = arith.constant 0 : index
    %146 = vector.load %arg33[%c1_87, %c0_88, %c0_89] : memref<2x64x128xbf16, #tpu.memory_space<vmem>>, vector<1x64x128xbf16>
    %147 = vector.shape_cast %146 : vector<1x64x128xbf16> to vector<64x128xbf16>
    %cst_90 = arith.constant dense<0.000000e+00> : vector<16x64xf32>
    %148 = tpu.matmul %145, %147, %cst_90 {dimension_numbers = #tpu.dot_dimension_numbers<[1], [1], [0], [0], [0, 0, 1, 0], [], []>} : vector<16x128xbf16>, vector<64x128xbf16>, vector<16x64xf32> -> vector<16x64xf32>
    %cst_91 = arith.constant dense<0xFF800000> : vector<16xf32>
    %149 = vector.multi_reduction <maximumf>, %148, %cst_91 [1] : vector<16x64xf32> to vector<16xf32>
    %150 = vector.shape_cast %149 : vector<16xf32> to vector<16x1xf32>
    %151 = vector.broadcast %150 : vector<16x1xf32> to vector<16x64xf32>
    %152 = arith.subf %148, %151 : vector<16x64xf32>
    %153 = math.exp %152 : vector<16x64xf32>
    %cst_92 = arith.constant dense<0.000000e+00> : vector<16xf32>
    %154 = vector.multi_reduction <add>, %153, %cst_92 [1] : vector<16x64xf32> to vector<16xf32>
    %155 = vector.shape_cast %154 : vector<16xf32> to vector<16x1xf32>
    %156 = tpu.reciprocal %155 {approx = true} : vector<16x1xf32> -> vector<16x1xf32>
    %157 = vector.broadcast %156 : vector<16x1xf32> to vector<16x64xf32>
    %158 = arith.mulf %153, %157 : vector<16x64xf32>
    %159 = arith.truncf %158 : vector<16x64xf32> to vector<16x64xbf16>
    %c1_93 = arith.constant 1 : index
    %c0_94 = arith.constant 0 : index
    %c0_95 = arith.constant 0 : index
    %160 = vector.load %arg34[%c1_93, %c0_94, %c0_95] : memref<2x64x128xbf16, #tpu.memory_space<vmem>>, vector<1x64x128xbf16>
    %161 = vector.shape_cast %160 : vector<1x64x128xbf16> to vector<64x128xbf16>
    %cst_96 = arith.constant dense<0.000000e+00> : vector<16x128xf32>
    %162 = tpu.matmul %159, %161, %cst_96 {dimension_numbers = #tpu.dot_dimension_numbers<[1], [0], [0], [1], [0, 0, 1, 1], [], []>} : vector<16x64xbf16>, vector<64x128xbf16>, vector<16x128xf32> -> vector<16x128xf32>
    %163 = arith.truncf %162 : vector<16x128xf32> to vector<16x128xbf16>
    %c1_97 = arith.constant 1 : index
    %c0_98 = arith.constant 0 : index
    %c0_99 = arith.constant 0 : index
    %164 = vector.load %arg18[%c1_97, %c0_98, %c0_99] : memref<2x128x256xbf16, #tpu.memory_space<vmem>>, vector<1x128x256xbf16>
    %165 = vector.shape_cast %164 : vector<1x128x256xbf16> to vector<128x256xbf16>
    %cst_100 = arith.constant dense<0.000000e+00> : vector<16x256xf32>
    %166 = tpu.matmul %163, %165, %cst_100 {dimension_numbers = #tpu.dot_dimension_numbers<[1], [0], [0], [1], [0, 0, 1, 1], [], []>} : vector<16x128xbf16>, vector<128x256xbf16>, vector<16x256xf32> -> vector<16x256xf32>
    %167 = arith.addf %135, %166 : vector<16x256xf32>
    %c0_101 = arith.constant 0 : index
    %c0_102 = arith.constant 0 : index
    %168 = vector.load %arg19[%c0_101, %c0_102] : memref<1x256xf32, #tpu.memory_space<vmem>>, vector<1x256xf32>
    %169 = vector.broadcast %168 : vector<1x256xf32> to vector<16x256xf32>
    %170 = arith.addf %167, %169 : vector<16x256xf32>
    %171 = arith.addf %170, %101 : vector<16x256xf32>
    %c0_103 = arith.constant 0 : index
    %c0_104 = arith.constant 0 : index
    %172 = vector.load %arg26[%c0_103, %c0_104] : memref<1x256xf32, #tpu.memory_space<vmem>>, vector<1x256xf32>
    %c0_105 = arith.constant 0 : index
    %c0_106 = arith.constant 0 : index
    %173 = vector.load %arg27[%c0_105, %c0_106] : memref<1x256xf32, #tpu.memory_space<vmem>>, vector<1x256xf32>
    %cst_107 = arith.constant dense<0.000000e+00> : vector<16xf32>
    %174 = vector.multi_reduction <add>, %171, %cst_107 [1] : vector<16x256xf32> to vector<16xf32>
    %175 = vector.shape_cast %174 : vector<16xf32> to vector<16x1xf32>
    %cst_108 = arith.constant 2.560000e+02 : f32
    %176 = vector.broadcast %cst_108 : f32 to vector<16x1xf32>
    %177 = arith.divf %175, %176 : vector<16x1xf32>
    %178 = vector.broadcast %177 : vector<16x1xf32> to vector<16x256xf32>
    %179 = arith.subf %171, %178 : vector<16x256xf32>
    %180 = arith.mulf %179, %179 : vector<16x256xf32>
    %cst_109 = arith.constant dense<0.000000e+00> : vector<16xf32>
    %181 = vector.multi_reduction <add>, %180, %cst_109 [1] : vector<16x256xf32> to vector<16xf32>
    %182 = vector.shape_cast %181 : vector<16xf32> to vector<16x1xf32>
    %cst_110 = arith.constant 2.560000e+02 : f32
    %183 = vector.broadcast %cst_110 : f32 to vector<16x1xf32>
    %184 = arith.divf %182, %183 : vector<16x1xf32>
    %185 = vector.broadcast %177 : vector<16x1xf32> to vector<16x256xf32>
    %186 = arith.subf %171, %185 : vector<16x256xf32>
    %cst_111 = arith.constant 9.99999974E-6 : f32
    %187 = vector.broadcast %cst_111 : f32 to vector<16x1xf32>
    %188 = arith.addf %184, %187 : vector<16x1xf32>
    %189 = math.rsqrt %188 : vector<16x1xf32>
    %190 = vector.broadcast %189 : vector<16x1xf32> to vector<16x256xf32>
    %191 = arith.mulf %186, %190 : vector<16x256xf32>
    %192 = vector.broadcast %172 : vector<1x256xf32> to vector<16x256xf32>
    %193 = arith.mulf %191, %192 : vector<16x256xf32>
    %194 = vector.broadcast %173 : vector<1x256xf32> to vector<16x256xf32>
    %195 = arith.addf %193, %194 : vector<16x256xf32>
    %c0_112 = arith.constant 0 : index
    %c0_113 = arith.constant 0 : index
    %196 = vector.load %arg20[%c0_112, %c0_113] : memref<256x512xbf16, #tpu.memory_space<vmem>>, vector<256x512xbf16>
    %c0_114 = arith.constant 0 : index
    %c0_115 = arith.constant 0 : index
    %197 = vector.load %arg22[%c0_114, %c0_115] : memref<512x256xbf16, #tpu.memory_space<vmem>>, vector<512x256xbf16>
    %198 = arith.truncf %195 : vector<16x256xf32> to vector<16x256xbf16>
    %cst_116 = arith.constant dense<0.000000e+00> : vector<16x512xf32>
    %199 = tpu.matmul %198, %196, %cst_116 {dimension_numbers = #tpu.dot_dimension_numbers<[1], [0], [0], [1], [0, 0, 1, 1], [], []>} : vector<16x256xbf16>, vector<256x512xbf16>, vector<16x512xf32> -> vector<16x512xf32>
    %c0_117 = arith.constant 0 : index
    %c0_118 = arith.constant 0 : index
    %200 = vector.load %arg21[%c0_117, %c0_118] : memref<1x512xf32, #tpu.memory_space<vmem>>, vector<1x512xf32>
    %201 = vector.broadcast %200 : vector<1x512xf32> to vector<16x512xf32>
    %202 = arith.addf %199, %201 : vector<16x512xf32>
    %cst_119 = arith.constant 0.000000e+00 : f32
    %203 = vector.broadcast %cst_119 : f32 to vector<16x512xf32>
    %204 = arith.maximumf %202, %203 : vector<16x512xf32>
    %205 = arith.truncf %204 : vector<16x512xf32> to vector<16x512xbf16>
    %cst_120 = arith.constant dense<0.000000e+00> : vector<16x256xf32>
    %206 = tpu.matmul %205, %197, %cst_120 {dimension_numbers = #tpu.dot_dimension_numbers<[1], [0], [0], [1], [0, 0, 1, 1], [], []>} : vector<16x512xbf16>, vector<512x256xbf16>, vector<16x256xf32> -> vector<16x256xf32>
    %c0_121 = arith.constant 0 : index
    %c0_122 = arith.constant 0 : index
    %207 = vector.load %arg23[%c0_121, %c0_122] : memref<1x256xf32, #tpu.memory_space<vmem>>, vector<1x256xf32>
    %208 = vector.broadcast %207 : vector<1x256xf32> to vector<16x256xf32>
    %209 = arith.addf %206, %208 : vector<16x256xf32>
    %210 = arith.addf %209, %195 : vector<16x256xf32>
    %c0_123 = arith.constant 0 : index
    %c0_124 = arith.constant 0 : index
    %211 = vector.load %arg28[%c0_123, %c0_124] : memref<1x256xf32, #tpu.memory_space<vmem>>, vector<1x256xf32>
    %c0_125 = arith.constant 0 : index
    %c0_126 = arith.constant 0 : index
    %212 = vector.load %arg29[%c0_125, %c0_126] : memref<1x256xf32, #tpu.memory_space<vmem>>, vector<1x256xf32>
    %cst_127 = arith.constant dense<0.000000e+00> : vector<16xf32>
    %213 = vector.multi_reduction <add>, %210, %cst_127 [1] : vector<16x256xf32> to vector<16xf32>
    %214 = vector.shape_cast %213 : vector<16xf32> to vector<16x1xf32>
    %cst_128 = arith.constant 2.560000e+02 : f32
    %215 = vector.broadcast %cst_128 : f32 to vector<16x1xf32>
    %216 = arith.divf %214, %215 : vector<16x1xf32>
    %217 = vector.broadcast %216 : vector<16x1xf32> to vector<16x256xf32>
    %218 = arith.subf %210, %217 : vector<16x256xf32>
    %219 = arith.mulf %218, %218 : vector<16x256xf32>
    %cst_129 = arith.constant dense<0.000000e+00> : vector<16xf32>
    %220 = vector.multi_reduction <add>, %219, %cst_129 [1] : vector<16x256xf32> to vector<16xf32>
    %221 = vector.shape_cast %220 : vector<16xf32> to vector<16x1xf32>
    %cst_130 = arith.constant 2.560000e+02 : f32
    %222 = vector.broadcast %cst_130 : f32 to vector<16x1xf32>
    %223 = arith.divf %221, %222 : vector<16x1xf32>
    %224 = vector.broadcast %216 : vector<16x1xf32> to vector<16x256xf32>
    %225 = arith.subf %210, %224 : vector<16x256xf32>
    %cst_131 = arith.constant 9.99999974E-6 : f32
    %226 = vector.broadcast %cst_131 : f32 to vector<16x1xf32>
    %227 = arith.addf %223, %226 : vector<16x1xf32>
    %228 = math.rsqrt %227 : vector<16x1xf32>
    %229 = vector.broadcast %228 : vector<16x1xf32> to vector<16x256xf32>
    %230 = arith.mulf %225, %229 : vector<16x256xf32>
    %231 = vector.broadcast %211 : vector<1x256xf32> to vector<16x256xf32>
    %232 = arith.mulf %230, %231 : vector<16x256xf32>
    %233 = vector.broadcast %212 : vector<1x256xf32> to vector<16x256xf32>
    %234 = arith.addf %232, %233 : vector<16x256xf32>
    %c0_132 = arith.constant 0 : index
    %c0_133 = arith.constant 0 : index
    %c0_134 = arith.constant 0 : index
    %235 = vector.load %arg30[%c0_132, %c0_133, %c0_134] : memref<1x16x256xf32, #tpu.memory_space<vmem>>, vector<1x16x256xf32>
    %236 = vector.shape_cast %235 : vector<1x16x256xf32> to vector<16x256xf32>
    %237 = vector.shape_cast %234 : vector<16x256xf32> to vector<1x16x256xf32>
    tpu.vector_store %arg30[%c0_132, %c0_133, %c0_134], %237 {strides = array<i32>} : memref<1x16x256xf32, #tpu.memory_space<vmem>>, vector<1x16x256xf32>,
    return
  }
  func.func @transform_0(%arg0: i32, %arg1: i32) -> (i32, i32, i32) {
    %c0_i32 = arith.constant 0 : i32
    %c0_i32_0 = arith.constant 0 : i32
    %c0_i32_1 = arith.constant 0 : i32
    return %arg0, %c0_i32, %c0_i32_0 : i32, i32, i32
  }
  func.func @transform_1(%arg0: i32, %arg1: i32) -> (i32, i32, i32) {
    %c0_i32 = arith.constant 0 : i32
    %c0_i32_0 = arith.constant 0 : i32
    %c0_i32_1 = arith.constant 0 : i32
    return %arg0, %c0_i32, %c0_i32_0 : i32, i32, i32
  }
  func.func @transform_2(%arg0: i32, %arg1: i32) -> (i32, i32, i32) {
    %c0_i32 = arith.constant 0 : i32
    %c0_i32_0 = arith.constant 0 : i32
    %c0_i32_1 = arith.constant 0 : i32
    %c0_i32_2 = arith.constant 0 : i32
    return %c0_i32, %c0_i32_0, %c0_i32_1 : i32, i32, i32
  }
  func.func @transform_3(%arg0: i32, %arg1: i32) -> (i32, i32, i32) {
    %c0_i32 = arith.constant 0 : i32
    %c0_i32_0 = arith.constant 0 : i32
    %c0_i32_1 = arith.constant 0 : i32
    %c0_i32_2 = arith.constant 0 : i32
    return %c0_i32, %c0_i32_0, %c0_i32_1 : i32, i32, i32
  }
  func.func @transform_4(%arg0: i32, %arg1: i32) -> (i32, i32, i32) {
    %c0_i32 = arith.constant 0 : i32
    %c0_i32_0 = arith.constant 0 : i32
    %c0_i32_1 = arith.constant 0 : i32
    %c0_i32_2 = arith.constant 0 : i32
    return %c0_i32, %c0_i32_0, %c0_i32_1 : i32, i32, i32
  }
  func.func @transform_5(%arg0: i32, %arg1: i32) -> (i32, i32, i32) {
    %c0_i32 = arith.constant 0 : i32
    %c0_i32_0 = arith.constant 0 : i32
    %c0_i32_1 = arith.constant 0 : i32
    %c0_i32_2 = arith.constant 0 : i32
    return %c0_i32, %c0_i32_0, %c0_i32_1 : i32, i32, i32
  }
  func.func @transform_6(%arg0: i32, %arg1: i32) -> (i32, i32, i32) {
    %c0_i32 = arith.constant 0 : i32
    %c0_i32_0 = arith.constant 0 : i32
    %c0_i32_1 = arith.constant 0 : i32
    %c0_i32_2 = arith.constant 0 : i32
    return %c0_i32, %c0_i32_0, %c0_i32_1 : i32, i32, i32
  }
  func.func @transform_7(%arg0: i32, %arg1: i32) -> (i32, i32, i32) {
    %c0_i32 = arith.constant 0 : i32
    %c0_i32_0 = arith.constant 0 : i32
    %c0_i32_1 = arith.constant 0 : i32
    %c0_i32_2 = arith.constant 0 : i32
    return %c0_i32, %c0_i32_0, %c0_i32_1 : i32, i32, i32
  }
  func.func @transform_8(%arg0: i32, %arg1: i32) -> (i32, i32, i32) {
    %c0_i32 = arith.constant 0 : i32
    %c0_i32_0 = arith.constant 0 : i32
    %c0_i32_1 = arith.constant 0 : i32
    %c0_i32_2 = arith.constant 0 : i32
    return %c0_i32, %c0_i32_0, %c0_i32_1 : i32, i32, i32
  }
  func.func @transform_9(%arg0: i32, %arg1: i32) -> (i32, i32) {
    %c0_i32 = arith.constant 0 : i32
    %c0_i32_0 = arith.constant 0 : i32
    %c0_i32_1 = arith.constant 0 : i32
    return %c0_i32, %c0_i32_0 : i32, i32
  }
  func.func @transform_10(%arg0: i32, %arg1: i32) -> (i32, i32, i32) {
    %c0_i32 = arith.constant 0 : i32
    %c0_i32_0 = arith.constant 0 : i32
    %c0_i32_1 = arith.constant 0 : i32
    %c0_i32_2 = arith.constant 0 : i32
    return %c0_i32, %c0_i32_0, %c0_i32_1 : i32, i32, i32
  }
  func.func @transform_11(%arg0: i32, %arg1: i32) -> (i32, i32, i32) {
    %c0_i32 = arith.constant 0 : i32
    %c0_i32_0 = arith.constant 0 : i32
    %c0_i32_1 = arith.constant 0 : i32
    %c0_i32_2 = arith.constant 0 : i32
    return %c0_i32, %c0_i32_0, %c0_i32_1 : i32, i32, i32
  }
  func.func @transform_12(%arg0: i32, %arg1: i32) -> (i32, i32, i32) {
    %c0_i32 = arith.constant 0 : i32
    %c0_i32_0 = arith.constant 0 : i32
    %c0_i32_1 = arith.constant 0 : i32
    %c0_i32_2 = arith.constant 0 : i32
    return %c0_i32, %c0_i32_0, %c0_i32_1 : i32, i32, i32
  }
  func.func @transform_13(%arg0: i32, %arg1: i32) -> (i32, i32, i32) {
    %c0_i32 = arith.constant 0 : i32
    %c0_i32_0 = arith.constant 0 : i32
    %c0_i32_1 = arith.constant 0 : i32
    %c0_i32_2 = arith.constant 0 : i32
    return %c0_i32, %c0_i32_0, %c0_i32_1 : i32, i32, i32
  }
  func.func @transform_14(%arg0: i32, %arg1: i32) -> (i32, i32, i32) {
    %c0_i32 = arith.constant 0 : i32
    %c0_i32_0 = arith.constant 0 : i32
    %c0_i32_1 = arith.constant 0 : i32
    %c0_i32_2 = arith.constant 0 : i32
    return %c0_i32, %c0_i32_0, %c0_i32_1 : i32, i32, i32
  }
  func.func @transform_15(%arg0: i32, %arg1: i32) -> (i32, i32, i32) {
    %c0_i32 = arith.constant 0 : i32
    %c0_i32_0 = arith.constant 0 : i32
    %c0_i32_1 = arith.constant 0 : i32
    %c0_i32_2 = arith.constant 0 : i32
    return %c0_i32, %c0_i32_0, %c0_i32_1 : i32, i32, i32
  }
  func.func @transform_16(%arg0: i32, %arg1: i32) -> (i32, i32, i32) {
    %c0_i32 = arith.constant 0 : i32
    %c0_i32_0 = arith.constant 0 : i32
    %c0_i32_1 = arith.constant 0 : i32
    %c0_i32_2 = arith.constant 0 : i32
    return %c0_i32, %c0_i32_0, %c0_i32_1 : i32, i32, i32
  }
  func.func @transform_17(%arg0: i32, %arg1: i32) -> (i32, i32) {
    %c0_i32 = arith.constant 0 : i32
    %c0_i32_0 = arith.constant 0 : i32
    %c0_i32_1 = arith.constant 0 : i32
    return %c0_i32, %c0_i32_0 : i32, i32
  }
  func.func @transform_18(%arg0: i32, %arg1: i32) -> (i32, i32) {
    %c0_i32 = arith.constant 0 : i32
    %c0_i32_0 = arith.constant 0 : i32
    %c0_i32_1 = arith.constant 0 : i32
    return %c0_i32, %c0_i32_0 : i32, i32
  }
  func.func @transform_19(%arg0: i32, %arg1: i32) -> (i32, i32) {
    %c0_i32 = arith.constant 0 : i32
    %c0_i32_0 = arith.constant 0 : i32
    %c0_i32_1 = arith.constant 0 : i32
    return %c0_i32, %c0_i32_0 : i32, i32
  }
  func.func @transform_20(%arg0: i32, %arg1: i32) -> (i32, i32) {
    %c0_i32 = arith.constant 0 : i32
    %c0_i32_0 = arith.constant 0 : i32
    %c0_i32_1 = arith.constant 0 : i32
    return %c0_i32, %c0_i32_0 : i32, i32
  }
  func.func @transform_21(%arg0: i32, %arg1: i32) -> (i32, i32) {
    %c0_i32 = arith.constant 0 : i32
    %c0_i32_0 = arith.constant 0 : i32
    %c0_i32_1 = arith.constant 0 : i32
    return %c0_i32, %c0_i32_0 : i32, i32
  }
  func.func @transform_22(%arg0: i32, %arg1: i32) -> (i32, i32) {
    %c0_i32 = arith.constant 0 : i32
    %c0_i32_0 = arith.constant 0 : i32
    %c0_i32_1 = arith.constant 0 : i32
    return %c0_i32, %c0_i32_0 : i32, i32
  }
  func.func @transform_23(%arg0: i32, %arg1: i32) -> (i32, i32) {
    %c0_i32 = arith.constant 0 : i32
    %c0_i32_0 = arith.constant 0 : i32
    %c0_i32_1 = arith.constant 0 : i32
    return %c0_i32, %c0_i32_0 : i32, i32
  }
  func.func @transform_24(%arg0: i32, %arg1: i32) -> (i32, i32) {
    %c0_i32 = arith.constant 0 : i32
    %c0_i32_0 = arith.constant 0 : i32
    %c0_i32_1 = arith.constant 0 : i32
    return %c0_i32, %c0_i32_0 : i32, i32
  }
  func.func @transform_25(%arg0: i32, %arg1: i32) -> (i32, i32) {
    %c0_i32 = arith.constant 0 : i32
    %c0_i32_0 = arith.constant 0 : i32
    %c0_i32_1 = arith.constant 0 : i32
    return %c0_i32, %c0_i32_0 : i32, i32
  }
  func.func @transform_26(%arg0: i32, %arg1: i32) -> (i32, i32) {
    %c0_i32 = arith.constant 0 : i32
    %c0_i32_0 = arith.constant 0 : i32
    %c0_i32_1 = arith.constant 0 : i32
    return %c0_i32, %c0_i32_0 : i32, i32
  }
  func.func @transform_27(%arg0: i32, %arg1: i32) -> (i32, i32) {
    %c0_i32 = arith.constant 0 : i32
    %c0_i32_0 = arith.constant 0 : i32
    %c0_i32_1 = arith.constant 0 : i32
    return %c0_i32, %c0_i32_0 : i32, i32
  }
  func.func @transform_28(%arg0: i32, %arg1: i32) -> (i32, i32, i32) {
    %c0_i32 = arith.constant 0 : i32
    %c0_i32_0 = arith.constant 0 : i32
    return %arg0, %arg1, %c0_i32 : i32, i32, i32
  }
}

</mosaic_0001>

<llo_original>
// kernel: tpu_custom_call.1
$region0: #{tpu_custom_call.1}
  #allocation0 [shape = 'u32[]', space=smem, size = 0x4, offset = 0x4, fixed_abs, tag = 'smem constant byte address 0x4 - core index']
  #allocation1 [shape = 'u32[72,128]{1,0:T(1,128)}', space=vmem, size = 0x9000, scoped, tag = 'internal scratch']
  #allocation2 [shape = 'bf16[2,32,128]{2,1,0:T(8,128)(2,1)}', space=vmem, size = 0x4000, scoped, tag = 'scratch operand']
  #allocation3 [shape = 'bf16[2,32,128]{2,1,0:T(8,128)(2,1)}', space=vmem, size = 0x4000, scoped, tag = 'scratch operand']
  #allocation4 [shape = 'bf16[2,64,128]{2,1,0:T(8,128)(2,1)}', space=vmem, size = 0x8000, scoped, tag = 'scratch operand']
  #allocation5 [shape = 'bf16[2,64,128]{2,1,0:T(8,128)(2,1)}', space=vmem, size = 0x8000, scoped, tag = 'scratch operand']
  %s0 = inlined_call_operand.hbm [shape: bf16[2,32,256], index: 0, kind: input, shape index: {}]
  %s1 = inlined_call_operand.hbm [shape: bf16[2,64,256], index: 1, kind: input, shape index: {}]
  %s2 = inlined_call_operand.hbm [shape: bf16[2,256,128], index: 2, kind: input, shape index: {}]
  %s3 = inlined_call_operand.vmem [shape: f32[2,1,128], index: 3, kind: input, shape index: {}]
  %s4 = inlined_call_operand.hbm [shape: bf16[2,256,128], index: 4, kind: input, shape index: {}]
  %s5 = inlined_call_operand.hbm [shape: f32[2,1,128], index: 5, kind: input, shape index: {}]
  %s6 = inlined_call_operand.hbm [shape: bf16[2,256,128], index: 6, kind: input, shape index: {}]
  %s7 = inlined_call_operand.hbm [shape: f32[2,1,128], index: 7, kind: input, shape index: {}]
  %s8 = inlined_call_operand.hbm [shape: bf16[2,128,256], index: 8, kind: input, shape index: {}]
  %s9 = inlined_call_operand.vmem [shape: f32[1,256], index: 9, kind: input, shape index: {}]
  %s10 = inlined_call_operand.hbm [shape: bf16[2,256,128], index: 10, kind: input, shape index: {}]
  %s11 = inlined_call_operand.vmem [shape: f32[2,1,128], index: 11, kind: input, shape index: {}]
  %s12 = inlined_call_operand.hbm [shape: bf16[2,256,128], index: 12, kind: input, shape index: {}]
  %s13 = inlined_call_operand.vmem [shape: f32[2,1,128], index: 13, kind: input, shape index: {}]
  %s14 = inlined_call_operand.hbm [shape: bf16[2,256,128], index: 14, kind: input, shape index: {}]
  %s15 = inlined_call_operand.vmem [shape: f32[2,1,128], index: 15, kind: input, shape index: {}]
  %s16 = inlined_call_operand.hbm [shape: bf16[2,128,256], index: 16, kind: input, shape index: {}]
  %s17 = inlined_call_operand.vmem [shape: f32[1,256], index: 17, kind: input, shape index: {}]
  %s18 = inlined_call_operand.hbm [shape: bf16[256,512], index: 18, kind: input, shape index: {}]
  %s19 = inlined_call_operand.vmem [shape: f32[1,512], index: 19, kind: input, shape index: {}]
  %s20 = inlined_call_operand.hbm [shape: bf16[512,256], index: 20, kind: input, shape index: {}]
  %s21 = inlined_call_operand.vmem [shape: f32[1,256], index: 21, kind: input, shape index: {}]
  %s22 = inlined_call_operand.vmem [shape: f32[1,256], index: 22, kind: input, shape index: {}]
  %s23 = inlined_call_operand.vmem [shape: f32[1,256], index: 23, kind: input, shape index: {}]
  %s24 = inlined_call_operand.hbm [shape: f32[1,256], index: 24, kind: input, shape index: {}]
  %s25 = inlined_call_operand.vmem [shape: f32[1,256], index: 25, kind: input, shape index: {}]
  %s26 = inlined_call_operand.hbm [shape: f32[1,256], index: 26, kind: input, shape index: {}]
  %s27 = inlined_call_operand.hbm [shape: f32[1,256], index: 27, kind: input, shape index: {}]
  %s28 = inlined_call_operand.hbm [shape: f32[2,32,256], index: 28, kind: output, shape index: {}]
  %s29 = sld [smem:[#allocation0]]
  $region217: #{tpu_custom_call.1} parent=0
    _
  %s31 = ssub.s32 1, %s29
  %s32 = scalar_select 0, %s31, %s29
  $region1: #{tpu_custom_call.1} parent=0
    #allocation6 [shape = 'u8[32768]{0}', space=vmem, size = 0x8000, scoped, tag = 'input window, operand 0']
    #allocation7 [shape = 's32[2]{0}', space=sflag, size = 0x8, scoped, tag = 'scoped memory for tpu_custom_call.1']
    #allocation8 [shape = 's32[2]{0}', space=sflag, size = 0x8, scoped, tag = 'scoped memory for tpu_custom_call.1']
    #allocation9 [shape = 'u8[65536]{0}', space=vmem, size = 0x10000, scoped, tag = 'input window, operand 1']
    #allocation10 [shape = 's32[2]{0}', space=sflag, size = 0x8, scoped, tag = 'scoped memory for tpu_custom_call.1']
    #allocation11 [shape = 'u8[131072]{0}', space=vmem, size = 0x20000, scoped, tag = 'input window, operand 2, single buffered']
    #allocation12 [shape = 'u8[131072]{0}', space=vmem, size = 0x20000, scoped, tag = 'input window, operand 4, single buffered']
    #allocation13 [shape = 's32[1]{0}', space=sflag, size = 0x4, scoped, tag = 'scoped memory for tpu_custom_call.1']
    #allocation14 [shape = 'u8[1024]{0}', space=vmem, size = 0x400, scoped, tag = 'input window, operand 5, single buffered']
    #allocation15 [shape = 'u8[131072]{0}', space=vmem, size = 0x20000, scoped, tag = 'input window, operand 6, single buffered']
    #allocation16 [shape = 's32[1]{0}', space=sflag, size = 0x4, scoped, tag = 'scoped memory for tpu_custom_call.1']
    #allocation17 [shape = 'u8[1024]{0}', space=vmem, size = 0x400, scoped, tag = 'input window, operand 7, single buffered']
    #allocation18 [shape = 'u8[131072]{0}', space=vmem, size = 0x20000, scoped, tag = 'input window, operand 8, single buffered']
    #allocation19 [shape = 's32[1]{0}', space=sflag, size = 0x4, scoped, tag = 'scoped memory for tpu_custom_call.1']
    #allocation20 [shape = 'u8[131072]{0}', space=vmem, size = 0x20000, scoped, tag = 'input window, operand 10, single buffered']
    #allocation21 [shape = 'u8[131072]{0}', space=vmem, size = 0x20000, scoped, tag = 'input window, operand 12, single buffered']
    #allocation22 [shape = 's32[1]{0}', space=sflag, size = 0x4, scoped, tag = 'scoped memory for tpu_custom_call.1']
    #allocation23 [shape = 'u8[131072]{0}', space=vmem, size = 0x20000, scoped, tag = 'input window, operand 14, single buffered']
    #allocation24 [shape = 'u8[131072]{0}', space=vmem, size = 0x20000, scoped, tag = 'input window, operand 16, single buffered']
    #allocation25 [shape = 's32[1]{0}', space=sflag, size = 0x4, scoped, tag = 'scoped memory for tpu_custom_call.1']
    #allocation26 [shape = 'u8[262144]{0}', space=vmem, size = 0x40000, scoped, tag = 'input window, operand 18, single buffered']
    #allocation27 [shape = 'u8[262144]{0}', space=vmem, size = 0x40000, scoped, tag = 'input window, operand 20, single buffered']
    #allocation28 [shape = 's32[1]{0}', space=sflag, size = 0x4, scoped, tag = 'scoped memory for tpu_custom_call.1']
    #allocation29 [shape = 'u8[1024]{0}', space=vmem, size = 0x400, scoped, tag = 'input window, operand 24, single buffered']
    #allocation30 [shape = 'u8[1024]{0}', space=vmem, size = 0x400, scoped, tag = 'input window, operand 26, single buffered']
    #allocation31 [shape = 's32[1]{0}', space=sflag, size = 0x4, scoped, tag = 'scoped memory for tpu_custom_call.1']
    #allocation32 [shape = 'u8[1024]{0}', space=vmem, size = 0x400, scoped, tag = 'input window, operand 27, single buffered']
    #allocation33 [shape = 'u8[32768]{0}', space=vmem, size = 0x8000, scoped, tag = 'output window, operand 0']
    %33 = vsyncpa [#allocation7], 0
    %s34 = scalar_lea.sflag [#allocation7], 1
    %35 = vsyncpa %s34, 0
    %36 = vsyncpa [#allocation10], 0
    %s37 = scalar_lea.sflag [#allocation10], 1
    %38 = vsyncpa %s37, 0
    %39 = vsyncpa [#allocation13], 0
    %40 = vsyncpa [#allocation16], 0
    %41 = vsyncpa [#allocation19], 0
    %42 = vsyncpa [#allocation22], 0
    %43 = vsyncpa [#allocation25], 0
    %44 = vsyncpa [#allocation28], 0
    %45 = vsyncpa [#allocation31], 0
    %46 = vsyncpa [#allocation8], 0
    %s47 = scalar_lea.sflag [#allocation8], 1
    %48 = vsyncpa %s47, 0
    loop: start=0, step=1, limit=6
    $region2: #{tpu_custom_call.1} parent=1 // loop_pre_header
      _
    $region3: #{tpu_custom_call.1} parent=1 // loop_header
      %s50 = sphi 0, %s54
      %p51 = scmp.ge.s32.totalorder %s50, 6
      %s57 = sphi 0, %s69
      %s58 = sphi 0, %s65
      %s59 = sphi 0, %s57
      %s60 = sphi 0, %s58
      %s61 = sphi 0, %s59
      %s62 = sphi 0, %s60
      %s72 = sphi 0, %s74
      %s75 = sphi 0, %s72
      %s76 = sphi 0, %s75
      %s92 = sphi 0, %s76
      %s98 = sphi 0, %s100
      %s101 = sphi 0, %s98
      %s102 = sphi 0, %s101
      %s118 = sphi 0, %s102
      %s122 = sphi 0, %s122
      %s124 = sphi 0, %s122
      %s125 = sphi 0, %s124
      %s139 = sphi 0, %s125
      %s143 = sphi 0, %s143
      %s145 = sphi 0, %s143
      %s146 = sphi 0, %s145
      %s160 = sphi 0, %s146
      %s164 = sphi 0, %s164
      %s166 = sphi 0, %s164
      %s167 = sphi 0, %s166
      %s181 = sphi 0, %s167
      %s185 = sphi 0, %s185
      %s187 = sphi 0, %s185
      %s188 = sphi 0, %s187
      %s202 = sphi 0, %s188
      %s206 = sphi 0, %s206
      %s208 = sphi 0, %s206
      %s209 = sphi 0, %s208
      %s223 = sphi 0, %s209
      %s227 = sphi 0, %s227
      %s229 = sphi 0, %s227
      %s230 = sphi 0, %s229
      %s244 = sphi 0, %s230
      %s248 = sphi 0, %s248
      %s250 = sphi 0, %s248
      %s251 = sphi 0, %s250
      %s265 = sphi 0, %s251
      %s269 = sphi 0, %s269
      %s271 = sphi 0, %s269
      %s272 = sphi 0, %s271
      %s286 = sphi 0, %s272
      %s290 = sphi 0, %s290
      %s292 = sphi 0, %s290
      %s293 = sphi 0, %s292
      %s307 = sphi 0, %s293
      %s311 = sphi 0, %s311
      %s313 = sphi 0, %s311
      %s314 = sphi 0, %s313
      %s328 = sphi 0, %s314
      %s332 = sphi 0, %s332
      %s334 = sphi 0, %s332
      %s335 = sphi 0, %s334
      %s349 = sphi 0, %s335
      %s353 = sphi 0, %s353
      %s355 = sphi 0, %s353
      %s356 = sphi 0, %s355
      %s370 = sphi 0, %s356
      %s374 = sphi 0, %s374
      %s376 = sphi 0, %s374
      %s377 = sphi 0, %s376
      %s391 = sphi 0, %s377
      %s395 = sphi 0, %s395
      %s397 = sphi 0, %s395
      %s398 = sphi 0, %s397
      %s412 = sphi 0, %s398
      %s416 = sphi 0, %s416
      %s418 = sphi 0, %s416
      %s419 = sphi 0, %s418
      %s433 = sphi 0, %s419
      %s437 = sphi 0, %s437
      %s439 = sphi 0, %s437
      %s440 = sphi 0, %s439
      %s454 = sphi 0, %s440
      %s458 = sphi 0, %s458
      %s460 = sphi 0, %s458
      %s461 = sphi 0, %s460
      %s475 = sphi 0, %s461
      %s479 = sphi 0, %s479
      %s481 = sphi 0, %s479
      %s482 = sphi 0, %s481
      %s496 = sphi 0, %s482
      %s500 = sphi 0, %s500
      %s502 = sphi 0, %s500
      %s503 = sphi 0, %s502
      %s517 = sphi 0, %s503
      %s521 = sphi 0, %s521
      %s523 = sphi 0, %s521
      %s524 = sphi 0, %s523
      %s538 = sphi 0, %s524
      %s542 = sphi 0, %s542
      %s544 = sphi 0, %s542
      %s545 = sphi 0, %s544
      %s559 = sphi 0, %s545
      %s563 = sphi 0, %s563
      %s565 = sphi 0, %s563
      %s566 = sphi 0, %s565
      %s580 = sphi 0, %s566
      %s584 = sphi 0, %s584
      %s586 = sphi 0, %s584
      %s587 = sphi 0, %s586
      %s601 = sphi 0, %s587
      %s605 = sphi 0, %s605
      %s607 = sphi 0, %s605
      %s608 = sphi 0, %s607
      %s622 = sphi 0, %s608
      %s626 = sphi 0, %s626
      %s628 = sphi 0, %s626
      %s629 = sphi 0, %s628
      %s643 = sphi 0, %s629
      %s647 = sphi 0, %s647
      %s649 = sphi 0, %s647
      %s650 = sphi 0, %s649
      %s664 = sphi 0, %s650
      %s672 = sphi 0, %s674
      %s675 = sphi 0, %s672
      %s676 = sphi 0, %s675
      %s692 = sphi 0, %s676
    $region4: #{tpu_custom_call.1} parent=1 // loop_header_branch
      %53 = sbr.rel (%p51) target = $region8
    $region5: #{tpu_custom_call.1} parent=1 // loop_body
      %s55 = ssub.s32 %s50, 1
      %s56 = ssub.s32 %s50, 2
      %s63 = sadd.s32 1, %s58
      %p64 = scmp.ge.s32.totalorder %s63, 2
      %s65 = scalar_select %p64, 0, %s63
      %s66 = sadd.s32 1, %s57
      %s67 = scalar_select %p64, %s66, %s57
      %p68 = scmp.ge.s32.totalorder %s67, 2
      %s69 = scalar_select %p68, 0, %s67
      %s70 = ssub.s32 %s57, %s69
      %p71 = scmp.eq.s32.totalorder %s70, 0
      %s73 = sadd.s32 %s72, 1
      %s74 = scalar_select %p71, %s72, %s73
      %p77 = pneg %p71
      %p78 = scmp.eq.s32.totalorder %s50, 3
      %p79 = por %p77, %p78
      %p80 = scmp.ne.s32.totalorder %s72, %s75
      %p81 = scmp.eq.s32.totalorder %s50, 0
      %p82 = por %p80, %p81
      %p83 = scmp.ne.s32.totalorder %s72, %s75
      %p84 = scmp.eq.s32.totalorder %s55, 3
      %p85 = por %p83, %p84
      %p86 = scmp.ne.s32.totalorder %s75, %s76
      %p87 = scmp.eq.s32.totalorder %s55, 0
      %p88 = por %p86, %p87
      %p89 = scmp.ne.s32.totalorder %s75, %s76
      %p90 = scmp.eq.s32.totalorder %s56, 3
      %p91 = por %p89, %p90
      %p93 = scmp.ne.s32.totalorder %s76, %s92
      %p94 = scmp.eq.s32.totalorder %s56, 0
      %p95 = por %p93, %p94
      %s96 = ssub.s32 %s57, %s69
      %p97 = scmp.eq.s32.totalorder %s96, 0
      %s99 = sadd.s32 %s98, 1
      %s100 = scalar_select %p97, %s98, %s99
      %p103 = pneg %p97
      %p104 = scmp.eq.s32.totalorder %s50, 3
      %p105 = por %p103, %p104
      %p106 = scmp.ne.s32.totalorder %s98, %s101
      %p107 = scmp.eq.s32.totalorder %s50, 0
      %p108 = por %p106, %p107
      %p109 = scmp.ne.s32.totalorder %s98, %s101
      %p110 = scmp.eq.s32.totalorder %s55, 3
      %p111 = por %p109, %p110
      %p112 = scmp.ne.s32.totalorder %s101, %s102
      %p113 = scmp.eq.s32.totalorder %s55, 0
      %p114 = por %p112, %p113
      %p115 = scmp.ne.s32.totalorder %s101, %s102
      %p116 = scmp.eq.s32.totalorder %s56, 3
      %p117 = por %p115, %p116
      %p119 = scmp.ne.s32.totalorder %s102, %s118
      %p120 = scmp.eq.s32.totalorder %s56, 0
      %p121 = por %p119, %p120
      %s123 = sadd.s32 %s122, 1
      %p126 = scmp.eq.s32.totalorder %s50, 3
      %p127 = scmp.ne.s32.totalorder %s122, %s124
      %p128 = scmp.eq.s32.totalorder %s50, 0
      %p129 = por %p127, %p128
      %p130 = scmp.ne.s32.totalorder %s122, %s124
      %p131 = scmp.eq.s32.totalorder %s55, 3
      %p132 = por %p130, %p131
      %p133 = scmp.ne.s32.totalorder %s124, %s125
      %p134 = scmp.eq.s32.totalorder %s55, 0
      %p135 = por %p133, %p134
      %p136 = scmp.ne.s32.totalorder %s124, %s125
      %p137 = scmp.eq.s32.totalorder %s56, 3
      %p138 = por %p136, %p137
      %p140 = scmp.ne.s32.totalorder %s125, %s139
      %p141 = scmp.eq.s32.totalorder %s56, 0
      %p142 = por %p140, %p141
      %s144 = sadd.s32 %s143, 1
      %p147 = scmp.eq.s32.totalorder %s50, 3
      %p148 = scmp.ne.s32.totalorder %s143, %s145
      %p149 = scmp.eq.s32.totalorder %s50, 0
      %p150 = por %p148, %p149
      %p151 = scmp.ne.s32.totalorder %s143, %s145
      %p152 = scmp.eq.s32.totalorder %s55, 3
      %p153 = por %p151, %p152
      %p154 = scmp.ne.s32.totalorder %s145, %s146
      %p155 = scmp.eq.s32.totalorder %s55, 0
      %p156 = por %p154, %p155
      %p157 = scmp.ne.s32.totalorder %s145, %s146
      %p158 = scmp.eq.s32.totalorder %s56, 3
      %p159 = por %p157, %p158
      %p161 = scmp.ne.s32.totalorder %s146, %s160
      %p162 = scmp.eq.s32.totalorder %s56, 0
      %p163 = por %p161, %p162
      %s165 = sadd.s32 %s164, 1
      %p168 = scmp.eq.s32.totalorder %s50, 3
      %p169 = scmp.ne.s32.totalorder %s164, %s166
      %p170 = scmp.eq.s32.totalorder %s50, 0
      %p171 = por %p169, %p170
      %p172 = scmp.ne.s32.totalorder %s164, %s166
      %p173 = scmp.eq.s32.totalorder %s55, 3
      %p174 = por %p172, %p173
      %p175 = scmp.ne.s32.totalorder %s166, %s167
      %p176 = scmp.eq.s32.totalorder %s55, 0
      %p177 = por %p175, %p176
      %p178 = scmp.ne.s32.totalorder %s166, %s167
      %p179 = scmp.eq.s32.totalorder %s56, 3
      %p180 = por %p178, %p179
      %p182 = scmp.ne.s32.totalorder %s167, %s181
      %p183 = scmp.eq.s32.totalorder %s56, 0
      %p184 = por %p182, %p183
      %s186 = sadd.s32 %s185, 1
      %p189 = scmp.eq.s32.totalorder %s50, 3
      %p190 = scmp.ne.s32.totalorder %s185, %s187
      %p191 = scmp.eq.s32.totalorder %s50, 0
      %p192 = por %p190, %p191
      %p193 = scmp.ne.s32.totalorder %s185, %s187
      %p194 = scmp.eq.s32.totalorder %s55, 3
      %p195 = por %p193, %p194
      %p196 = scmp.ne.s32.totalorder %s187, %s188
      %p197 = scmp.eq.s32.totalorder %s55, 0
      %p198 = por %p196, %p197
      %p199 = scmp.ne.s32.totalorder %s187, %s188
      %p200 = scmp.eq.s32.totalorder %s56, 3
      %p201 = por %p199, %p200
      %p203 = scmp.ne.s32.totalorder %s188, %s202
      %p204 = scmp.eq.s32.totalorder %s56, 0
      %p205 = por %p203, %p204
      %s207 = sadd.s32 %s206, 1
      %p210 = scmp.eq.s32.totalorder %s50, 3
      %p211 = scmp.ne.s32.totalorder %s206, %s208
      %p212 = scmp.eq.s32.totalorder %s50, 0
      %p213 = por %p211, %p212
      %p214 = scmp.ne.s32.totalorder %s206, %s208
      %p215 = scmp.eq.s32.totalorder %s55, 3
      %p216 = por %p214, %p215
      %p217 = scmp.ne.s32.totalorder %s208, %s209
      %p218 = scmp.eq.s32.totalorder %s55, 0
      %p219 = por %p217, %p218
      %p220 = scmp.ne.s32.totalorder %s208, %s209
      %p221 = scmp.eq.s32.totalorder %s56, 3
      %p222 = por %p220, %p221
      %p224 = scmp.ne.s32.totalorder %s209, %s223
      %p225 = scmp.eq.s32.totalorder %s56, 0
      %p226 = por %p224, %p225
      %s228 = sadd.s32 %s227, 1
      %p231 = scmp.eq.s32.totalorder %s50, 3
      %p232 = scmp.ne.s32.totalorder %s227, %s229
      %p233 = scmp.eq.s32.totalorder %s50, 0
      %p234 = por %p232, %p233
      %p235 = scmp.ne.s32.totalorder %s227, %s229
      %p236 = scmp.eq.s32.totalorder %s55, 3
      %p237 = por %p235, %p236
      %p238 = scmp.ne.s32.totalorder %s229, %s230
      %p239 = scmp.eq.s32.totalorder %s55, 0
      %p240 = por %p238, %p239
      %p241 = scmp.ne.s32.totalorder %s229, %s230
      %p242 = scmp.eq.s32.totalorder %s56, 3
      %p243 = por %p241, %p242
      %p245 = scmp.ne.s32.totalorder %s230, %s244
      %p246 = scmp.eq.s32.totalorder %s56, 0
      %p247 = por %p245, %p246
      %s249 = sadd.s32 %s248, 1
      %p252 = scmp.eq.s32.totalorder %s50, 3
      %p253 = scmp.ne.s32.totalorder %s248, %s250
      %p254 = scmp.eq.s32.totalorder %s50, 0
      %p255 = por %p253, %p254
      %p256 = scmp.ne.s32.totalorder %s248, %s250
      %p257 = scmp.eq.s32.totalorder %s55, 3
      %p258 = por %p256, %p257
      %p259 = scmp.ne.s32.totalorder %s250, %s251
      %p260 = scmp.eq.s32.totalorder %s55, 0
      %p261 = por %p259, %p260
      %p262 = scmp.ne.s32.totalorder %s250, %s251
      %p263 = scmp.eq.s32.totalorder %s56, 3
      %p264 = por %p262, %p263
      %p266 = scmp.ne.s32.totalorder %s251, %s265
      %p267 = scmp.eq.s32.totalorder %s56, 0
      %p268 = por %p266, %p267
      %s270 = sadd.s32 %s269, 1
      %p273 = scmp.eq.s32.totalorder %s50, 3
      %p274 = scmp.ne.s32.totalorder %s269, %s271
      %p275 = scmp.eq.s32.totalorder %s50, 0
      %p276 = por %p274, %p275
      %p277 = scmp.ne.s32.totalorder %s269, %s271
      %p278 = scmp.eq.s32.totalorder %s55, 3
      %p279 = por %p277, %p278
      %p280 = scmp.ne.s32.totalorder %s271, %s272
      %p281 = scmp.eq.s32.totalorder %s55, 0
      %p282 = por %p280, %p281
      %p283 = scmp.ne.s32.totalorder %s271, %s272
      %p284 = scmp.eq.s32.totalorder %s56, 3
      %p285 = por %p283, %p284
      %p287 = scmp.ne.s32.totalorder %s272, %s286
      %p288 = scmp.eq.s32.totalorder %s56, 0
      %p289 = por %p287, %p288
      %s291 = sadd.s32 %s290, 1
      %p294 = scmp.eq.s32.totalorder %s50, 3
      %p295 = scmp.ne.s32.totalorder %s290, %s292
      %p296 = scmp.eq.s32.totalorder %s50, 0
      %p297 = por %p295, %p296
      %p298 = scmp.ne.s32.totalorder %s290, %s292
      %p299 = scmp.eq.s32.totalorder %s55, 3
      %p300 = por %p298, %p299
      %p301 = scmp.ne.s32.totalorder %s292, %s293
      %p302 = scmp.eq.s32.totalorder %s55, 0
      %p303 = por %p301, %p302
      %p304 = scmp.ne.s32.totalorder %s292, %s293
      %p305 = scmp.eq.s32.totalorder %s56, 3
      %p306 = por %p304, %p305
      %p308 = scmp.ne.s32.totalorder %s293, %s307
      %p309 = scmp.eq.s32.totalorder %s56, 0
      %p310 = por %p308, %p309
      %s312 = sadd.s32 %s311, 1
      %p315 = scmp.eq.s32.totalorder %s50, 3
      %p316 = scmp.ne.s32.totalorder %s311, %s313
      %p317 = scmp.eq.s32.totalorder %s50, 0
      %p318 = por %p316, %p317
      %p319 = scmp.ne.s32.totalorder %s311, %s313
      %p320 = scmp.eq.s32.totalorder %s55, 3
      %p321 = por %p319, %p320
      %p322 = scmp.ne.s32.totalorder %s313, %s314
      %p323 = scmp.eq.s32.totalorder %s55, 0
      %p324 = por %p322, %p323
      %p325 = scmp.ne.s32.totalorder %s313, %s314
      %p326 = scmp.eq.s32.totalorder %s56, 3
      %p327 = por %p325, %p326
      %p329 = scmp.ne.s32.totalorder %s314, %s328
      %p330 = scmp.eq.s32.totalorder %s56, 0
      %p331 = por %p329, %p330
      %s333 = sadd.s32 %s332, 1
      %p336 = scmp.eq.s32.totalorder %s50, 3
      %p337 = scmp.ne.s32.totalorder %s332, %s334
      %p338 = scmp.eq.s32.totalorder %s50, 0
      %p339 = por %p337, %p338
      %p340 = scmp.ne.s32.totalorder %s332, %s334
      %p341 = scmp.eq.s32.totalorder %s55, 3
      %p342 = por %p340, %p341
      %p343 = scmp.ne.s32.totalorder %s334, %s335
      %p344 = scmp.eq.s32.totalorder %s55, 0
      %p345 = por %p343, %p344
      %p346 = scmp.ne.s32.totalorder %s334, %s335
      %p347 = scmp.eq.s32.totalorder %s56, 3
      %p348 = por %p346, %p347
      %p350 = scmp.ne.s32.totalorder %s335, %s349
      %p351 = scmp.eq.s32.totalorder %s56, 0
      %p352 = por %p350, %p351
      %s354 = sadd.s32 %s353, 1
      %p357 = scmp.eq.s32.totalorder %s50, 3
      %p358 = scmp.ne.s32.totalorder %s353, %s355
      %p359 = scmp.eq.s32.totalorder %s50, 0
      %p360 = por %p358, %p359
      %p361 = scmp.ne.s32.totalorder %s353, %s355
      %p362 = scmp.eq.s32.totalorder %s55, 3
      %p363 = por %p361, %p362
      %p364 = scmp.ne.s32.totalorder %s355, %s356
      %p365 = scmp.eq.s32.totalorder %s55, 0
      %p366 = por %p364, %p365
      %p367 = scmp.ne.s32.totalorder %s355, %s356
      %p368 = scmp.eq.s32.totalorder %s56, 3
      %p369 = por %p367, %p368
      %p371 = scmp.ne.s32.totalorder %s356, %s370
      %p372 = scmp.eq.s32.totalorder %s56, 0
      %p373 = por %p371, %p372
      %s375 = sadd.s32 %s374, 1
      %p378 = scmp.eq.s32.totalorder %s50, 3
      %p379 = scmp.ne.s32.totalorder %s374, %s376
      %p380 = scmp.eq.s32.totalorder %s50, 0
      %p381 = por %p379, %p380
      %p382 = scmp.ne.s32.totalorder %s374, %s376
      %p383 = scmp.eq.s32.totalorder %s55, 3
      %p384 = por %p382, %p383
      %p385 = scmp.ne.s32.totalorder %s376, %s377
      %p386 = scmp.eq.s32.totalorder %s55, 0
      %p387 = por %p385, %p386
      %p388 = scmp.ne.s32.totalorder %s376, %s377
      %p389 = scmp.eq.s32.totalorder %s56, 3
      %p390 = por %p388, %p389
      %p392 = scmp.ne.s32.totalorder %s377, %s391
      %p393 = scmp.eq.s32.totalorder %s56, 0
      %p394 = por %p392, %p393
      %s396 = sadd.s32 %s395, 1
      %p399 = scmp.eq.s32.totalorder %s50, 3
      %p400 = scmp.ne.s32.totalorder %s395, %s397
      %p401 = scmp.eq.s32.totalorder %s50, 0
      %p402 = por %p400, %p401
      %p403 = scmp.ne.s32.totalorder %s395, %s397
      %p404 = scmp.eq.s32.totalorder %s55, 3
      %p405 = por %p403, %p404
      %p406 = scmp.ne.s32.totalorder %s397, %s398
      %p407 = scmp.eq.s32.totalorder %s55, 0
      %p408 = por %p406, %p407
      %p409 = scmp.ne.s32.totalorder %s397, %s398
      %p410 = scmp.eq.s32.totalorder %s56, 3
      %p411 = por %p409, %p410
      %p413 = scmp.ne.s32.totalorder %s398, %s412
      %p414 = scmp.eq.s32.totalorder %s56, 0
      %p415 = por %p413, %p414
      %s417 = sadd.s32 %s416, 1
      %p420 = scmp.eq.s32.totalorder %s50, 3
      %p421 = scmp.ne.s32.totalorder %s416, %s418
      %p422 = scmp.eq.s32.totalorder %s50, 0
      %p423 = por %p421, %p422
      %p424 = scmp.ne.s32.totalorder %s416, %s418
      %p425 = scmp.eq.s32.totalorder %s55, 3
      %p426 = por %p424, %p425
      %p427 = scmp.ne.s32.totalorder %s418, %s419
      %p428 = scmp.eq.s32.totalorder %s55, 0
      %p429 = por %p427, %p428
      %p430 = scmp.ne.s32.totalorder %s418, %s419
      %p431 = scmp.eq.s32.totalorder %s56, 3
      %p432 = por %p430, %p431
      %p434 = scmp.ne.s32.totalorder %s419, %s433
      %p435 = scmp.eq.s32.totalorder %s56, 0
      %p436 = por %p434, %p435
      %s438 = sadd.s32 %s437, 1
      %p441 = scmp.eq.s32.totalorder %s50, 3
      %p442 = scmp.ne.s32.totalorder %s437, %s439
      %p443 = scmp.eq.s32.totalorder %s50, 0
      %p444 = por %p442, %p443
      %p445 = scmp.ne.s32.totalorder %s437, %s439
      %p446 = scmp.eq.s32.totalorder %s55, 3
      %p447 = por %p445, %p446
      %p448 = scmp.ne.s32.totalorder %s439, %s440
      %p449 = scmp.eq.s32.totalorder %s55, 0
      %p450 = por %p448, %p449
      %p451 = scmp.ne.s32.totalorder %s439, %s440
      %p452 = scmp.eq.s32.totalorder %s56, 3
      %p453 = por %p451, %p452
      %p455 = scmp.ne.s32.totalorder %s440, %s454
      %p456 = scmp.eq.s32.totalorder %s56, 0
      %p457 = por %p455, %p456
      %s459 = sadd.s32 %s458, 1
      %p462 = scmp.eq.s32.totalorder %s50, 3
      %p463 = scmp.ne.s32.totalorder %s458, %s460
      %p464 = scmp.eq.s32.totalorder %s50, 0
      %p465 = por %p463, %p464
      %p466 = scmp.ne.s32.totalorder %s458, %s460
      %p467 = scmp.eq.s32.totalorder %s55, 3
      %p468 = por %p466, %p467
      %p469 = scmp.ne.s32.totalorder %s460, %s461
      %p470 = scmp.eq.s32.totalorder %s55, 0
      %p471 = por %p469, %p470
      %p472 = scmp.ne.s32.totalorder %s460, %s461
      %p473 = scmp.eq.s32.totalorder %s56, 3
      %p474 = por %p472, %p473
      %p476 = scmp.ne.s32.totalorder %s461, %s475
      %p477 = scmp.eq.s32.totalorder %s56, 0
      %p478 = por %p476, %p477
      %s480 = sadd.s32 %s479, 1
      %p483 = scmp.eq.s32.totalorder %s50, 3
      %p484 = scmp.ne.s32.totalorder %s479, %s481
      %p485 = scmp.eq.s32.totalorder %s50, 0
      %p486 = por %p484, %p485
      %p487 = scmp.ne.s32.totalorder %s479, %s481
      %p488 = scmp.eq.s32.totalorder %s55, 3
      %p489 = por %p487, %p488
      %p490 = scmp.ne.s32.totalorder %s481, %s482
      %p491 = scmp.eq.s32.totalorder %s55, 0
      %p492 = por %p490, %p491
      %p493 = scmp.ne.s32.totalorder %s481, %s482
      %p494 = scmp.eq.s32.totalorder %s56, 3
      %p495 = por %p493, %p494
      %p497 = scmp.ne.s32.totalorder %s482, %s496
      %p498 = scmp.eq.s32.totalorder %s56, 0
      %p499 = por %p497, %p498
      %s501 = sadd.s32 %s500, 1
      %p504 = scmp.eq.s32.totalorder %s50, 3
      %p505 = scmp.ne.s32.totalorder %s500, %s502
      %p506 = scmp.eq.s32.totalorder %s50, 0
      %p507 = por %p505, %p506
      %p508 = scmp.ne.s32.totalorder %s500, %s502
      %p509 = scmp.eq.s32.totalorder %s55, 3
      %p510 = por %p508, %p509
      %p511 = scmp.ne.s32.totalorder %s502, %s503
      %p512 = scmp.eq.s32.totalorder %s55, 0
      %p513 = por %p511, %p512
      %p514 = scmp.ne.s32.totalorder %s502, %s503
      %p515 = scmp.eq.s32.totalorder %s56, 3
      %p516 = por %p514, %p515
      %p518 = scmp.ne.s32.totalorder %s503, %s517
      %p519 = scmp.eq.s32.totalorder %s56, 0
      %p520 = por %p518, %p519
      %s522 = sadd.s32 %s521, 1
      %p525 = scmp.eq.s32.totalorder %s50, 3
      %p526 = scmp.ne.s32.totalorder %s521, %s523
      %p527 = scmp.eq.s32.totalorder %s50, 0
      %p528 = por %p526, %p527
      %p529 = scmp.ne.s32.totalorder %s521, %s523
      %p530 = scmp.eq.s32.totalorder %s55, 3
      %p531 = por %p529, %p530
      %p532 = scmp.ne.s32.totalorder %s523, %s524
      %p533 = scmp.eq.s32.totalorder %s55, 0
      %p534 = por %p532, %p533
      %p535 = scmp.ne.s32.totalorder %s523, %s524
      %p536 = scmp.eq.s32.totalorder %s56, 3
      %p537 = por %p535, %p536
      %p539 = scmp.ne.s32.totalorder %s524, %s538
      %p540 = scmp.eq.s32.totalorder %s56, 0
      %p541 = por %p539, %p540
      %s543 = sadd.s32 %s542, 1
      %p546 = scmp.eq.s32.totalorder %s50, 3
      %p547 = scmp.ne.s32.totalorder %s542, %s544
      %p548 = scmp.eq.s32.totalorder %s50, 0
      %p549 = por %p547, %p548
      %p550 = scmp.ne.s32.totalorder %s542, %s544
      %p551 = scmp.eq.s32.totalorder %s55, 3
      %p552 = por %p550, %p551
      %p553 = scmp.ne.s32.totalorder %s544, %s545
      %p554 = scmp.eq.s32.totalorder %s55, 0
      %p555 = por %p553, %p554
      %p556 = scmp.ne.s32.totalorder %s544, %s545
      %p557 = scmp.eq.s32.totalorder %s56, 3
      %p558 = por %p556, %p557
      %p560 = scmp.ne.s32.totalorder %s545, %s559
      %p561 = scmp.eq.s32.totalorder %s56, 0
      %p562 = por %p560, %p561
      %s564 = sadd.s32 %s563, 1
      %p567 = scmp.eq.s32.totalorder %s50, 3
      %p568 = scmp.ne.s32.totalorder %s563, %s565
      %p569 = scmp.eq.s32.totalorder %s50, 0
      %p570 = por %p568, %p569
      %p571 = scmp.ne.s32.totalorder %s563, %s565
      %p572 = scmp.eq.s32.totalorder %s55, 3
      %p573 = por %p571, %p572
      %p574 = scmp.ne.s32.totalorder %s565, %s566
      %p575 = scmp.eq.s32.totalorder %s55, 0
      %p576 = por %p574, %p575
      %p577 = scmp.ne.s32.totalorder %s565, %s566
      %p578 = scmp.eq.s32.totalorder %s56, 3
      %p579 = por %p577, %p578
      %p581 = scmp.ne.s32.totalorder %s566, %s580
      %p582 = scmp.eq.s32.totalorder %s56, 0
      %p583 = por %p581, %p582
      %s585 = sadd.s32 %s584, 1
      %p588 = scmp.eq.s32.totalorder %s50, 3
      %p589 = scmp.ne.s32.totalorder %s584, %s586
      %p590 = scmp.eq.s32.totalorder %s50, 0
      %p591 = por %p589, %p590
      %p592 = scmp.ne.s32.totalorder %s584, %s586
      %p593 = scmp.eq.s32.totalorder %s55, 3
      %p594 = por %p592, %p593
      %p595 = scmp.ne.s32.totalorder %s586, %s587
      %p596 = scmp.eq.s32.totalorder %s55, 0
      %p597 = por %p595, %p596
      %p598 = scmp.ne.s32.totalorder %s586, %s587
      %p599 = scmp.eq.s32.totalorder %s56, 3
      %p600 = por %p598, %p599
      %p602 = scmp.ne.s32.totalorder %s587, %s601
      %p603 = scmp.eq.s32.totalorder %s56, 0
      %p604 = por %p602, %p603
      %s606 = sadd.s32 %s605, 1
      %p609 = scmp.eq.s32.totalorder %s50, 3
      %p610 = scmp.ne.s32.totalorder %s605, %s607
      %p611 = scmp.eq.s32.totalorder %s50, 0
      %p612 = por %p610, %p611
      %p613 = scmp.ne.s32.totalorder %s605, %s607
      %p614 = scmp.eq.s32.totalorder %s55, 3
      %p615 = por %p613, %p614
      %p616 = scmp.ne.s32.totalorder %s607, %s608
      %p617 = scmp.eq.s32.totalorder %s55, 0
      %p618 = por %p616, %p617
      %p619 = scmp.ne.s32.totalorder %s607, %s608
      %p620 = scmp.eq.s32.totalorder %s56, 3
      %p621 = por %p619, %p620
      %p623 = scmp.ne.s32.totalorder %s608, %s622
      %p624 = scmp.eq.s32.totalorder %s56, 0
      %p625 = por %p623, %p624
      %s627 = sadd.s32 %s626, 1
      %p630 = scmp.eq.s32.totalorder %s50, 3
      %p631 = scmp.ne.s32.totalorder %s626, %s628
      %p632 = scmp.eq.s32.totalorder %s50, 0
      %p633 = por %p631, %p632
      %p634 = scmp.ne.s32.totalorder %s626, %s628
      %p635 = scmp.eq.s32.totalorder %s55, 3
      %p636 = por %p634, %p635
      %p637 = scmp.ne.s32.totalorder %s628, %s629
      %p638 = scmp.eq.s32.totalorder %s55, 0
      %p639 = por %p637, %p638
      %p640 = scmp.ne.s32.totalorder %s628, %s629
      %p641 = scmp.eq.s32.totalorder %s56, 3
      %p642 = por %p640, %p641
      %p644 = scmp.ne.s32.totalorder %s629, %s643
      %p645 = scmp.eq.s32.totalorder %s56, 0
      %p646 = por %p644, %p645
      %s648 = sadd.s32 %s647, 1
      %p651 = scmp.eq.s32.totalorder %s50, 3
      %p652 = scmp.ne.s32.totalorder %s647, %s649
      %p653 = scmp.eq.s32.totalorder %s50, 0
      %p654 = por %p652, %p653
      %p655 = scmp.ne.s32.totalorder %s647, %s649
      %p656 = scmp.eq.s32.totalorder %s55, 3
      %p657 = por %p655, %p656
      %p658 = scmp.ne.s32.totalorder %s649, %s650
      %p659 = scmp.eq.s32.totalorder %s55, 0
      %p660 = por %p658, %p659
      %p661 = scmp.ne.s32.totalorder %s649, %s650
      %p662 = scmp.eq.s32.totalorder %s56, 3
      %p663 = por %p661, %p662
      %p665 = scmp.ne.s32.totalorder %s650, %s664
      %p666 = scmp.eq.s32.totalorder %s56, 0
      %p667 = por %p665, %p666
      %s668 = ssub.s32 %s57, %s69
      %s669 = ssub.s32 %s58, %s65
      %s670 = sor.u32 %s668, %s669
      %p671 = scmp.eq.s32.totalorder %s670, 0
      %s673 = sadd.s32 %s672, 1
      %s674 = scalar_select %p671, %s672, %s673
      %p677 = pneg %p671
      %p678 = scmp.eq.s32.totalorder %s50, 3
      %p679 = por %p677, %p678
      %p680 = scmp.ne.s32.totalorder %s672, %s675
      %p681 = scmp.eq.s32.totalorder %s50, 0
      %p682 = por %p680, %p681
      %p683 = scmp.ne.s32.totalorder %s672, %s675
      %p684 = scmp.eq.s32.totalorder %s55, 3
      %p685 = por %p683, %p684
      %p686 = scmp.ne.s32.totalorder %s675, %s676
      %p687 = scmp.eq.s32.totalorder %s55, 0
      %p688 = por %p686, %p687
      %p689 = scmp.ne.s32.totalorder %s675, %s676
      %p690 = scmp.eq.s32.totalorder %s56, 3
      %p691 = por %p689, %p690
      %p693 = scmp.ne.s32.totalorder %s676, %s692
      %p694 = scmp.eq.s32.totalorder %s56, 0
      %p695 = por %p693, %p694
      %p696 = scmp.le.s32.totalorder 1, %s50
      %p697 = scmp.lt.s32.totalorder %s50, 5
      %p698 = pnand %p696, %p697
      %p699 = pneg %p698
      // Predicated region
      $region9: #{tpu_custom_call.1} parent=5 // pred_check
        _
      $region10: #{tpu_custom_call.1} parent=5 // pred_check_branch
        %701 = sbr.rel (%p698) target = $region12
      $region11: #{tpu_custom_call.1} parent=5 // pred_region
        %s702 = ssub.s32 %s50, 1
        // Predicated region
        $region13: #{tpu_custom_call.1} parent=11 // pred_check
          %p703 = pneg %p135
        $region14: #{tpu_custom_call.1} parent=11 // pred_check_branch
          %705 = sbr.rel (%p703) target = $region16
        $region15: #{tpu_custom_call.1} parent=11 // pred_region
          %707 = vsyncadd [#allocation10], 0
          %s708 = sshll.u32 %s2, 4
          %s709 = int_to_ptr.hbm [resolvable:$true] %s708
          %s710 = sshll.u32 [#allocation11], 4
          %s711 = int_to_ptr.vmem [resolvable:$true] %s710
          %716 = dma.hbm_to_vmem [thread:$0]  %s709, 4096, %s711, [#allocation10], 64, 64, 4
        $region16: #{tpu_custom_call.1} parent=11 // pred_fallthru
          _
        // Predicated region
        $region17: #{tpu_custom_call.1} parent=11 // pred_check
          %p717 = pneg %p156
        $region18: #{tpu_custom_call.1} parent=11 // pred_check_branch
          %719 = sbr.rel (%p717) target = $region20
        $region19: #{tpu_custom_call.1} parent=11 // pred_region
          _
        $region20: #{tpu_custom_call.1} parent=11 // pred_fallthru
          _
        // Predicated region
        $region21: #{tpu_custom_call.1} parent=11 // pred_check
          %p720 = pneg %p177
        $region22: #{tpu_custom_call.1} parent=11 // pred_check_branch
          %722 = sbr.rel (%p720) target = $region24
        $region23: #{tpu_custom_call.1} parent=11 // pred_region
          %724 = vsyncadd [#allocation13], 0
          %s725 = sshll.u32 %s4, 4
          %s726 = int_to_ptr.hbm [resolvable:$true] %s725
          %s727 = sshll.u32 [#allocation12], 4
          %s728 = int_to_ptr.vmem [resolvable:$true] %s727
          %733 = dma.hbm_to_vmem [thread:$0]  %s726, 4096, %s728, [#allocation13], 64, 64, 4
        $region24: #{tpu_custom_call.1} parent=11 // pred_fallthru
          _
        // Predicated region
        $region25: #{tpu_custom_call.1} parent=11 // pred_check
          %p734 = pneg %p198
        $region26: #{tpu_custom_call.1} parent=11 // pred_check_branch
          %736 = sbr.rel (%p734) target = $region28
        $region27: #{tpu_custom_call.1} parent=11 // pred_region
          %738 = vsyncadd [#allocation13], 0
          %s739 = sshll.u32 %s5, 4
          %s740 = int_to_ptr.hbm [resolvable:$true] %s739
          %s741 = sshll.u32 [#allocation14], 4
          %s742 = int_to_ptr.vmem [resolvable:$true] %s741
          %747 = dma.hbm_to_vmem [thread:$0]  %s740, 32, %s742, [#allocation13], 16, 16, 1
        $region28: #{tpu_custom_call.1} parent=11 // pred_fallthru
          _
        // Predicated region
        $region29: #{tpu_custom_call.1} parent=11 // pred_check
          %p748 = pneg %p219
        $region30: #{tpu_custom_call.1} parent=11 // pred_check_branch
          %750 = sbr.rel (%p748) target = $region32
        $region31: #{tpu_custom_call.1} parent=11 // pred_region
          %752 = vsyncadd [#allocation16], 0
          %s753 = sshll.u32 %s6, 4
          %s754 = int_to_ptr.hbm [resolvable:$true] %s753
          %s755 = sshll.u32 [#allocation15], 4
          %s756 = int_to_ptr.vmem [resolvable:$true] %s755
          %761 = dma.hbm_to_vmem [thread:$0]  %s754, 4096, %s756, [#allocation16], 64, 64, 4
        $region32: #{tpu_custom_call.1} parent=11 // pred_fallthru
          _
        // Predicated region
        $region33: #{tpu_custom_call.1} parent=11 // pred_check
          %p762 = pneg %p240
        $region34: #{tpu_custom_call.1} parent=11 // pred_check_branch
          %764 = sbr.rel (%p762) target = $region36
        $region35: #{tpu_custom_call.1} parent=11 // pred_region
          %766 = vsyncadd [#allocation16], 0
          %s767 = sshll.u32 %s7, 4
          %s768 = int_to_ptr.hbm [resolvable:$true] %s767
          %s769 = sshll.u32 [#allocation17], 4
          %s770 = int_to_ptr.vmem [resolvable:$true] %s769
          %775 = dma.hbm_to_vmem [thread:$0]  %s768, 32, %s770, [#allocation16], 16, 16, 1
        $region36: #{tpu_custom_call.1} parent=11 // pred_fallthru
          _
        // Predicated region
        $region37: #{tpu_custom_call.1} parent=11 // pred_check
          %p776 = pneg %p261
        $region38: #{tpu_custom_call.1} parent=11 // pred_check_branch
          %778 = sbr.rel (%p776) target = $region40
        $region39: #{tpu_custom_call.1} parent=11 // pred_region
          %780 = vsyncadd [#allocation19], 0
          %s781 = sshll.u32 %s8, 4
          %s782 = int_to_ptr.hbm [resolvable:$true] %s781
          %s783 = sshll.u32 [#allocation18], 4
          %s784 = int_to_ptr.vmem [resolvable:$true] %s783
          %789 = dma.hbm_to_vmem [thread:$0]  %s782, 4096, %s784, [#allocation19], 128, 128, 8
        $region40: #{tpu_custom_call.1} parent=11 // pred_fallthru
          _
        // Predicated region
        $region41: #{tpu_custom_call.1} parent=11 // pred_check
          %p790 = pneg %p282
        $region42: #{tpu_custom_call.1} parent=11 // pred_check_branch
          %792 = sbr.rel (%p790) target = $region44
        $region43: #{tpu_custom_call.1} parent=11 // pred_region
          _
        $region44: #{tpu_custom_call.1} parent=11 // pred_fallthru
          _
        // Predicated region
        $region45: #{tpu_custom_call.1} parent=11 // pred_check
          %p793 = pneg %p303
        $region46: #{tpu_custom_call.1} parent=11 // pred_check_branch
          %795 = sbr.rel (%p793) target = $region48
        $region47: #{tpu_custom_call.1} parent=11 // pred_region
          %797 = vsyncadd [#allocation19], 0
          %s798 = sshll.u32 %s10, 4
          %s799 = int_to_ptr.hbm [resolvable:$true] %s798
          %s800 = sshll.u32 [#allocation20], 4
          %s801 = int_to_ptr.vmem [resolvable:$true] %s800
          %806 = dma.hbm_to_vmem [thread:$0]  %s799, 4096, %s801, [#allocation19], 64, 64, 4
        $region48: #{tpu_custom_call.1} parent=11 // pred_fallthru
          _
        // Predicated region
        $region49: #{tpu_custom_call.1} parent=11 // pred_check
          %p807 = pneg %p324
        $region50: #{tpu_custom_call.1} parent=11 // pred_check_branch
          %809 = sbr.rel (%p807) target = $region52
        $region51: #{tpu_custom_call.1} parent=11 // pred_region
          _
        $region52: #{tpu_custom_call.1} parent=11 // pred_fallthru
          _
        // Predicated region
        $region53: #{tpu_custom_call.1} parent=11 // pred_check
          %p810 = pneg %p345
        $region54: #{tpu_custom_call.1} parent=11 // pred_check_branch
          %812 = sbr.rel (%p810) target = $region56
        $region55: #{tpu_custom_call.1} parent=11 // pred_region
          %814 = vsyncadd [#allocation22], 0
          %s815 = sshll.u32 %s12, 4
          %s816 = int_to_ptr.hbm [resolvable:$true] %s815
          %s817 = sshll.u32 [#allocation21], 4
          %s818 = int_to_ptr.vmem [resolvable:$true] %s817
          %823 = dma.hbm_to_vmem [thread:$0]  %s816, 4096, %s818, [#allocation22], 64, 64, 4
        $region56: #{tpu_custom_call.1} parent=11 // pred_fallthru
          _
        // Predicated region
        $region57: #{tpu_custom_call.1} parent=11 // pred_check
          %p824 = pneg %p366
        $region58: #{tpu_custom_call.1} parent=11 // pred_check_branch
          %826 = sbr.rel (%p824) target = $region60
        $region59: #{tpu_custom_call.1} parent=11 // pred_region
          _
        $region60: #{tpu_custom_call.1} parent=11 // pred_fallthru
          _
        // Predicated region
        $region61: #{tpu_custom_call.1} parent=11 // pred_check
          %p827 = pneg %p387
        $region62: #{tpu_custom_call.1} parent=11 // pred_check_branch
          %829 = sbr.rel (%p827) target = $region64
        $region63: #{tpu_custom_call.1} parent=11 // pred_region
          %831 = vsyncadd [#allocation22], 0
          %s832 = sshll.u32 %s14, 4
          %s833 = int_to_ptr.hbm [resolvable:$true] %s832
          %s834 = sshll.u32 [#allocation23], 4
          %s835 = int_to_ptr.vmem [resolvable:$true] %s834
          %840 = dma.hbm_to_vmem [thread:$0]  %s833, 4096, %s835, [#allocation22], 64, 64, 4
        $region64: #{tpu_custom_call.1} parent=11 // pred_fallthru
          _
        // Predicated region
        $region65: #{tpu_custom_call.1} parent=11 // pred_check
          %p841 = pneg %p408
        $region66: #{tpu_custom_call.1} parent=11 // pred_check_branch
          %843 = sbr.rel (%p841) target = $region68
        $region67: #{tpu_custom_call.1} parent=11 // pred_region
          _
        $region68: #{tpu_custom_call.1} parent=11 // pred_fallthru
          _
        // Predicated region
        $region69: #{tpu_custom_call.1} parent=11 // pred_check
          %p844 = pneg %p429
        $region70: #{tpu_custom_call.1} parent=11 // pred_check_branch
          %846 = sbr.rel (%p844) target = $region72
        $region71: #{tpu_custom_call.1} parent=11 // pred_region
          %848 = vsyncadd [#allocation25], 0
          %s849 = sshll.u32 %s16, 4
          %s850 = int_to_ptr.hbm [resolvable:$true] %s849
          %s851 = sshll.u32 [#allocation24], 4
          %s852 = int_to_ptr.vmem [resolvable:$true] %s851
          %857 = dma.hbm_to_vmem [thread:$0]  %s850, 4096, %s852, [#allocation25], 128, 128, 8
        $region72: #{tpu_custom_call.1} parent=11 // pred_fallthru
          _
        // Predicated region
        $region73: #{tpu_custom_call.1} parent=11 // pred_check
          %p858 = pneg %p450
        $region74: #{tpu_custom_call.1} parent=11 // pred_check_branch
          %860 = sbr.rel (%p858) target = $region76
        $region75: #{tpu_custom_call.1} parent=11 // pred_region
          _
        $region76: #{tpu_custom_call.1} parent=11 // pred_fallthru
          _
        // Predicated region
        $region77: #{tpu_custom_call.1} parent=11 // pred_check
          %p861 = pneg %p471
        $region78: #{tpu_custom_call.1} parent=11 // pred_check_branch
          %863 = sbr.rel (%p861) target = $region80
        $region79: #{tpu_custom_call.1} parent=11 // pred_region
          %865 = vsyncadd [#allocation25], 0
          %s866 = sshll.u32 %s18, 4
          %s867 = int_to_ptr.hbm [resolvable:$true] %s866
          %s868 = sshll.u32 [#allocation26], 4
          %s869 = int_to_ptr.vmem [resolvable:$true] %s868
          %874 = dma.hbm_to_vmem [thread:$0]  %s867, 8192, %s869, [#allocation25], 256, 256, 16
        $region80: #{tpu_custom_call.1} parent=11 // pred_fallthru
          _
        // Predicated region
        $region81: #{tpu_custom_call.1} parent=11 // pred_check
          %p875 = pneg %p492
        $region82: #{tpu_custom_call.1} parent=11 // pred_check_branch
          %877 = sbr.rel (%p875) target = $region84
        $region83: #{tpu_custom_call.1} parent=11 // pred_region
          _
        $region84: #{tpu_custom_call.1} parent=11 // pred_fallthru
          _
        // Predicated region
        $region85: #{tpu_custom_call.1} parent=11 // pred_check
          %p878 = pneg %p513
        $region86: #{tpu_custom_call.1} parent=11 // pred_check_branch
          %880 = sbr.rel (%p878) target = $region88
        $region87: #{tpu_custom_call.1} parent=11 // pred_region
          %882 = vsyncadd [#allocation28], 0
          %s883 = sshll.u32 %s20, 4
          %s884 = int_to_ptr.hbm [resolvable:$true] %s883
          %s885 = sshll.u32 [#allocation27], 4
          %s886 = int_to_ptr.vmem [resolvable:$true] %s885
          %891 = dma.hbm_to_vmem [thread:$0]  %s884, 8192, %s886, [#allocation28], 128, 128, 8
        $region88: #{tpu_custom_call.1} parent=11 // pred_fallthru
          _
        // Predicated region
        $region89: #{tpu_custom_call.1} parent=11 // pred_check
          %p892 = pneg %p534
        $region90: #{tpu_custom_call.1} parent=11 // pred_check_branch
          %894 = sbr.rel (%p892) target = $region92
        $region91: #{tpu_custom_call.1} parent=11 // pred_region
          _
        $region92: #{tpu_custom_call.1} parent=11 // pred_fallthru
          _
        // Predicated region
        $region93: #{tpu_custom_call.1} parent=11 // pred_check
          %p895 = pneg %p555
        $region94: #{tpu_custom_call.1} parent=11 // pred_check_branch
          %897 = sbr.rel (%p895) target = $region96
        $region95: #{tpu_custom_call.1} parent=11 // pred_region
          _
        $region96: #{tpu_custom_call.1} parent=11 // pred_fallthru
          _
        // Predicated region
        $region97: #{tpu_custom_call.1} parent=11 // pred_check
          %p898 = pneg %p576
        $region98: #{tpu_custom_call.1} parent=11 // pred_check_branch
          %900 = sbr.rel (%p898) target = $region100
        $region99: #{tpu_custom_call.1} parent=11 // pred_region
          _
        $region100: #{tpu_custom_call.1} parent=11 // pred_fallthru
          _
        // Predicated region
        $region101: #{tpu_custom_call.1} parent=11 // pred_check
          %p901 = pneg %p597
        $region102: #{tpu_custom_call.1} parent=11 // pred_check_branch
          %903 = sbr.rel (%p901) target = $region104
        $region103: #{tpu_custom_call.1} parent=11 // pred_region
          %905 = vsyncadd [#allocation28], 0
          %s907 = sshll.u32 %s24, 4
          %s908 = int_to_ptr.hbm [resolvable:$true] %s907
          %s909 = sshll.u32 [#allocation29], 4
          %s910 = int_to_ptr.vmem [resolvable:$true] %s909
          %912 = dma.hbm_to_vmem [thread:$0]  %s908, 32, %s910, [#allocation28]
        $region104: #{tpu_custom_call.1} parent=11 // pred_fallthru
          _
        // Predicated region
        $region105: #{tpu_custom_call.1} parent=11 // pred_check
          %p913 = pneg %p618
        $region106: #{tpu_custom_call.1} parent=11 // pred_check_branch
          %915 = sbr.rel (%p913) target = $region108
        $region107: #{tpu_custom_call.1} parent=11 // pred_region
          _
        $region108: #{tpu_custom_call.1} parent=11 // pred_fallthru
          _
        // Predicated region
        $region109: #{tpu_custom_call.1} parent=11 // pred_check
          %p916 = pneg %p639
        $region110: #{tpu_custom_call.1} parent=11 // pred_check_branch
          %918 = sbr.rel (%p916) target = $region112
        $region111: #{tpu_custom_call.1} parent=11 // pred_region
          %920 = vsyncadd [#allocation31], 0
          %s922 = sshll.u32 %s26, 4
          %s923 = int_to_ptr.hbm [resolvable:$true] %s922
          %s924 = sshll.u32 [#allocation30], 4
          %s925 = int_to_ptr.vmem [resolvable:$true] %s924
          %927 = dma.hbm_to_vmem [thread:$0]  %s923, 32, %s925, [#allocation31]
        $region112: #{tpu_custom_call.1} parent=11 // pred_fallthru
          _
        // Predicated region
        $region113: #{tpu_custom_call.1} parent=11 // pred_check
          %p928 = pneg %p660
        $region114: #{tpu_custom_call.1} parent=11 // pred_check_branch
          %930 = sbr.rel (%p928) target = $region116
        $region115: #{tpu_custom_call.1} parent=11 // pred_region
          %932 = vsyncadd [#allocation31], 0
          %s934 = sshll.u32 %s27, 4
          %s935 = int_to_ptr.hbm [resolvable:$true] %s934
          %s936 = sshll.u32 [#allocation32], 4
          %s937 = int_to_ptr.vmem [resolvable:$true] %s936
          %939 = dma.hbm_to_vmem [thread:$0]  %s935, 32, %s937, [#allocation31]
        $region116: #{tpu_custom_call.1} parent=11 // pred_fallthru
          _
      $region12: #{tpu_custom_call.1} parent=5 // pred_fallthru
        _
      %p940 = scmp.lt.s32.totalorder %s50, 4
      // Predicated region
      $region117: #{tpu_custom_call.1} parent=5 // pred_check
        %p941 = pneg %p940
      $region118: #{tpu_custom_call.1} parent=5 // pred_check_branch
        %943 = sbr.rel (%p941) target = $region120
      $region119: #{tpu_custom_call.1} parent=5 // pred_region
        // Predicated region
        $region121: #{tpu_custom_call.1} parent=119 // pred_check
          %p944 = pneg %p82
        $region122: #{tpu_custom_call.1} parent=119 // pred_check_branch
          %946 = sbr.rel (%p944) target = $region124
        $region123: #{tpu_custom_call.1} parent=119 // pred_region
          %s947 = sand.u32 %s72, 1
          %s948 = scalar_lea.sflag [#allocation7], %s947
          %s949 = sand.u32 %s72, 1
          %s950 = smul.addr %s949, 32
          %s951 = scalar_lea.vmem [#allocation6], %s950
          %953 = vsyncadd %s948, 0
          %s954 = smul.addr %s57, 8
          %s955 = smul.addr %s954, 4
          %s956 = scalar_lea.hbm %s0, %s955
          %s957 = sshll.u32 %s956, 4
          %s958 = int_to_ptr.hbm [resolvable:$true] %s957
          %s959 = sshll.u32 %s951, 4
          %s960 = int_to_ptr.vmem [resolvable:$true] %s959
          %965 = dma.hbm_to_vmem [thread:$0]  %s958, 512, %s960, %s948, 128, 128, 8
        $region124: #{tpu_custom_call.1} parent=119 // pred_fallthru
          _
        // Predicated region
        $region125: #{tpu_custom_call.1} parent=119 // pred_check
          %p966 = pneg %p108
        $region126: #{tpu_custom_call.1} parent=119 // pred_check_branch
          %968 = sbr.rel (%p966) target = $region128
        $region127: #{tpu_custom_call.1} parent=119 // pred_region
          %s969 = sand.u32 %s50, 1
          %s970 = scalar_lea.sflag [#allocation10], %s969
          %s971 = sand.u32 %s98, 1
          %s972 = smul.addr %s971, 64
          %s973 = scalar_lea.vmem [#allocation9], %s972
          %975 = vsyncadd %s970, 0
          %s976 = smul.addr %s57, 16
          %s977 = smul.addr %s976, 4
          %s978 = scalar_lea.hbm %s1, %s977
          %s979 = sshll.u32 %s978, 4
          %s980 = int_to_ptr.hbm [resolvable:$true] %s979
          %s981 = sshll.u32 %s973, 4
          %s982 = int_to_ptr.vmem [resolvable:$true] %s981
          %987 = dma.hbm_to_vmem [thread:$0]  %s980, 1024, %s982, %s970, 128, 128, 8
        $region128: #{tpu_custom_call.1} parent=119 // pred_fallthru
          _
      $region120: #{tpu_custom_call.1} parent=5 // pred_fallthru
        _
      %p988 = scmp.le.s32.totalorder 1, %s50
      %p989 = scmp.lt.s32.totalorder %s50, 5
      %p990 = pnand %p988, %p989
      %p991 = pneg %p990
      // Predicated region
      $region129: #{tpu_custom_call.1} parent=5 // pred_check
        _
      $region130: #{tpu_custom_call.1} parent=5 // pred_check_branch
        %993 = sbr.rel (%p990) target = $region132
      $region131: #{tpu_custom_call.1} parent=5 // pred_region
        %s994 = ssub.s32 %s50, 1
        %s995 = sand.u32 %s75, 1
        %s996 = scalar_lea.sflag [#allocation7], %s995
        %s997 = sand.u32 %s75, 1
        %s998 = smul.addr %s997, 32
        %s999 = scalar_lea.vmem [#allocation6], %s998
        // Predicated region
        $region133: #{tpu_custom_call.1} parent=131 // pred_check
          %p1000 = pneg %p88
        $region134: #{tpu_custom_call.1} parent=131 // pred_check_branch
          %1002 = sbr.rel (%p1000) target = $region136
        $region135: #{tpu_custom_call.1} parent=131 // pred_region
          %1004 = dma.done %s996, 512
        $region136: #{tpu_custom_call.1} parent=131 // pred_fallthru
          _
        %s1005 = sand.u32 %s55, 1
        %s1006 = scalar_lea.sflag [#allocation10], %s1005
        %s1007 = sand.u32 %s101, 1
        %s1008 = smul.addr %s1007, 64
        %s1009 = scalar_lea.vmem [#allocation9], %s1008
        // Predicated region
        $region137: #{tpu_custom_call.1} parent=131 // pred_check
          %p1010 = pneg %p114
        $region138: #{tpu_custom_call.1} parent=131 // pred_check_branch
          %1012 = sbr.rel (%p1010) target = $region140
        $region139: #{tpu_custom_call.1} parent=131 // pred_region
          %1014 = dma.done %s1006, 1024
        $region140: #{tpu_custom_call.1} parent=131 // pred_fallthru
          _
        // Predicated region
        $region141: #{tpu_custom_call.1} parent=131 // pred_check
          %p1015 = pneg %p135
        $region142: #{tpu_custom_call.1} parent=131 // pred_check_branch
          %1017 = sbr.rel (%p1015) target = $region144
        $region143: #{tpu_custom_call.1} parent=131 // pred_region
          %1019 = dma.done [#allocation10], 4096
        $region144: #{tpu_custom_call.1} parent=131 // pred_fallthru
          _
        // Predicated region
        $region145: #{tpu_custom_call.1} parent=131 // pred_check
          %p1020 = pneg %p177
        $region146: #{tpu_custom_call.1} parent=131 // pred_check_branch
          %1022 = sbr.rel (%p1020) target = $region148
        $region147: #{tpu_custom_call.1} parent=131 // pred_region
          %1024 = dma.done [#allocation13], 4096
        $region148: #{tpu_custom_call.1} parent=131 // pred_fallthru
          _
        // Predicated region
        $region149: #{tpu_custom_call.1} parent=131 // pred_check
          %p1025 = pneg %p198
        $region150: #{tpu_custom_call.1} parent=131 // pred_check_branch
          %1027 = sbr.rel (%p1025) target = $region152
        $region151: #{tpu_custom_call.1} parent=131 // pred_region
          %1029 = dma.done [#allocation13], 32
        $region152: #{tpu_custom_call.1} parent=131 // pred_fallthru
          _
        // Predicated region
        $region153: #{tpu_custom_call.1} parent=131 // pred_check
          %p1030 = pneg %p219
        $region154: #{tpu_custom_call.1} parent=131 // pred_check_branch
          %1032 = sbr.rel (%p1030) target = $region156
        $region155: #{tpu_custom_call.1} parent=131 // pred_region
          %1034 = dma.done [#allocation16], 4096
        $region156: #{tpu_custom_call.1} parent=131 // pred_fallthru
          _
        // Predicated region
        $region157: #{tpu_custom_call.1} parent=131 // pred_check
          %p1035 = pneg %p240
        $region158: #{tpu_custom_call.1} parent=131 // pred_check_branch
          %1037 = sbr.rel (%p1035) target = $region160
        $region159: #{tpu_custom_call.1} parent=131 // pred_region
          %1039 = dma.done [#allocation16], 32
        $region160: #{tpu_custom_call.1} parent=131 // pred_fallthru
          _
        // Predicated region
        $region161: #{tpu_custom_call.1} parent=131 // pred_check
          %p1040 = pneg %p261
        $region162: #{tpu_custom_call.1} parent=131 // pred_check_branch
          %1042 = sbr.rel (%p1040) target = $region164
        $region163: #{tpu_custom_call.1} parent=131 // pred_region
          %1044 = dma.done [#allocation19], 4096
        $region164: #{tpu_custom_call.1} parent=131 // pred_fallthru
          _
        // Predicated region
        $region165: #{tpu_custom_call.1} parent=131 // pred_check
          %p1045 = pneg %p303
        $region166: #{tpu_custom_call.1} parent=131 // pred_check_branch
          %1047 = sbr.rel (%p1045) target = $region168
        $region167: #{tpu_custom_call.1} parent=131 // pred_region
          %1049 = dma.done [#allocation19], 4096
        $region168: #{tpu_custom_call.1} parent=131 // pred_fallthru
          _
        // Predicated region
        $region169: #{tpu_custom_call.1} parent=131 // pred_check
          %p1050 = pneg %p345
        $region170: #{tpu_custom_call.1} parent=131 // pred_check_branch
          %1052 = sbr.rel (%p1050) target = $region172
        $region171: #{tpu_custom_call.1} parent=131 // pred_region
          %1054 = dma.done [#allocation22], 4096
        $region172: #{tpu_custom_call.1} parent=131 // pred_fallthru
          _
        // Predicated region
        $region173: #{tpu_custom_call.1} parent=131 // pred_check
          %p1055 = pneg %p387
        $region174: #{tpu_custom_call.1} parent=131 // pred_check_branch
          %1057 = sbr.rel (%p1055) target = $region176
        $region175: #{tpu_custom_call.1} parent=131 // pred_region
          %1059 = dma.done [#allocation22], 4096
        $region176: #{tpu_custom_call.1} parent=131 // pred_fallthru
          _
        // Predicated region
        $region177: #{tpu_custom_call.1} parent=131 // pred_check
          %p1060 = pneg %p429
        $region178: #{tpu_custom_call.1} parent=131 // pred_check_branch
          %1062 = sbr.rel (%p1060) target = $region180
        $region179: #{tpu_custom_call.1} parent=131 // pred_region
          %1064 = dma.done [#allocation25], 4096
        $region180: #{tpu_custom_call.1} parent=131 // pred_fallthru
          _
        // Predicated region
        $region181: #{tpu_custom_call.1} parent=131 // pred_check
          %p1065 = pneg %p471
        $region182: #{tpu_custom_call.1} parent=131 // pred_check_branch
          %1067 = sbr.rel (%p1065) target = $region184
        $region183: #{tpu_custom_call.1} parent=131 // pred_region
          %1069 = dma.done [#allocation25], 8192
        $region184: #{tpu_custom_call.1} parent=131 // pred_fallthru
          _
        // Predicated region
        $region185: #{tpu_custom_call.1} parent=131 // pred_check
          %p1070 = pneg %p513
        $region186: #{tpu_custom_call.1} parent=131 // pred_check_branch
          %1072 = sbr.rel (%p1070) target = $region188
        $region187: #{tpu_custom_call.1} parent=131 // pred_region
          %1074 = dma.done [#allocation28], 8192
        $region188: #{tpu_custom_call.1} parent=131 // pred_fallthru
          _
        // Predicated region
        $region189: #{tpu_custom_call.1} parent=131 // pred_check
          %p1075 = pneg %p597
        $region190: #{tpu_custom_call.1} parent=131 // pred_check_branch
          %1077 = sbr.rel (%p1075) target = $region192
        $region191: #{tpu_custom_call.1} parent=131 // pred_region
          %1079 = dma.done [#allocation28], 32
        $region192: #{tpu_custom_call.1} parent=131 // pred_fallthru
          _
        // Predicated region
        $region193: #{tpu_custom_call.1} parent=131 // pred_check
          %p1080 = pneg %p639
        $region194: #{tpu_custom_call.1} parent=131 // pred_check_branch
          %1082 = sbr.rel (%p1080) target = $region196
        $region195: #{tpu_custom_call.1} parent=131 // pred_region
          %1084 = dma.done [#allocation31], 32
        $region196: #{tpu_custom_call.1} parent=131 // pred_fallthru
          _
        // Predicated region
        $region197: #{tpu_custom_call.1} parent=131 // pred_check
          %p1085 = pneg %p660
        $region198: #{tpu_custom_call.1} parent=131 // pred_check_branch
          %1087 = sbr.rel (%p1085) target = $region200
        $region199: #{tpu_custom_call.1} parent=131 // pred_region
          %1089 = dma.done [#allocation31], 32
        $region200: #{tpu_custom_call.1} parent=131 // pred_fallthru
          _
        %s1090 = sand.u32 %s75, 1
        %s1091 = scalar_lea.sflag [#allocation7], %s1090
        %s1092 = sand.u32 %s75, 1
        %s1093 = smul.addr %s1092, 32
        %s1094 = scalar_lea.vmem [#allocation6], %s1093
        %p1095 = pneg %p88
        %p1096 = pneg %p85
        %s1097 = sand.u32 %s55, 1
        %s1098 = scalar_lea.sflag [#allocation10], %s1097
        %s1099 = sand.u32 %s101, 1
        %s1100 = smul.addr %s1099, 64
        %s1101 = scalar_lea.vmem [#allocation9], %s1100
        %p1102 = pneg %p114
        %p1103 = pneg %p111
        %p1104 = pneg %p135
        %p1105 = pneg %p132
        %p1106 = pneg %p156
        %p1107 = pneg %p153
        %p1108 = pneg %p177
        %p1109 = pneg %p174
        %p1110 = pneg %p198
        %p1111 = pneg %p195
        %p1112 = pneg %p219
        %p1113 = pneg %p216
        %p1114 = pneg %p240
        %p1115 = pneg %p237
        %p1116 = pneg %p261
        %p1117 = pneg %p258
        %p1118 = pneg %p282
        %p1119 = pneg %p279
        %p1120 = pneg %p303
        %p1121 = pneg %p300
        %p1122 = pneg %p324
        %p1123 = pneg %p321
        %p1124 = pneg %p345
        %p1125 = pneg %p342
        %p1126 = pneg %p366
        %p1127 = pneg %p363
        %p1128 = pneg %p387
        %p1129 = pneg %p384
        %p1130 = pneg %p408
        %p1131 = pneg %p405
        %p1132 = pneg %p429
        %p1133 = pneg %p426
        %p1134 = pneg %p450
        %p1135 = pneg %p447
        %p1136 = pneg %p471
        %p1137 = pneg %p468
        %p1138 = pneg %p492
        %p1139 = pneg %p489
        %p1140 = pneg %p513
        %p1141 = pneg %p510
        %p1142 = pneg %p534
        %p1143 = pneg %p531
        %p1144 = pneg %p555
        %p1145 = pneg %p552
        %p1146 = pneg %p576
        %p1147 = pneg %p573
        %p1148 = pneg %p597
        %p1149 = pneg %p594
        %p1150 = pneg %p618
        %p1151 = pneg %p615
        %p1152 = pneg %p639
        %p1153 = pneg %p636
        %p1154 = pneg %p660
        %p1155 = pneg %p657
        %p1156 = pneg %p688
        %p1157 = pneg %p685
        %s1158 = sand.u32 %s675, 1
        %s1159 = scalar_lea.sflag [#allocation8], %s1158
        %s1160 = sand.u32 %s675, 1
        %s1161 = smul.addr %s1160, 32
        %s1162 = scalar_lea.vmem [#allocation33], %s1161
        %s1163 = smul.u32 2, %s60
        %p1165 = scmp.eq.s32.totalorder %s60, 0
        // Predicated region
        $region201: #{tpu_custom_call.1} parent=131 // pred_check
          %p1166 = pneg %p1165
        $region202: #{tpu_custom_call.1} parent=131 // pred_check_branch
          %1168 = sbr.rel (%p1166) target = $region204
        $region203: #{tpu_custom_call.1} parent=131 // pred_region
          %v1169 = vld [vmem:[%s999] sm:$0xff]
          %v1170 = vld [vmem:[%s999 + $0x8] sm:$0xff]
          %v1171 = vld [vmem:[%s999 + $0x10] sm:$0xff]
          %v1172 = vld [vmem:[%s999 + $0x18] sm:$0xff]
          %v1173 = vld [vmem:[%s1009] sm:$0xff]
          %v1174 = vld [vmem:[%s1009 + $0x8] sm:$0xff]
          %v1175 = vld [vmem:[%s1009 + $0x10] sm:$0xff]
          %v1176 = vld [vmem:[%s1009 + $0x18] sm:$0xff]
          %v1177 = vld [vmem:[%s1009 + $0x20] sm:$0xff]
          %v1178 = vld [vmem:[%s1009 + $0x28] sm:$0xff]
          %v1179 = vld [vmem:[%s1009 + $0x30] sm:$0xff]
          %v1180 = vld [vmem:[%s1009 + $0x38] sm:$0xff]
          %v1181 = vld [vmem:[#allocation12] sm:$0xf]
          %v1182 = vld [vmem:[#allocation12 + $0x4] sm:$0xf]
          %v1183 = vld [vmem:[#allocation12 + $0x8] sm:$0xf]
          %v1184 = vld [vmem:[#allocation12 + $0xc] sm:$0xf]
          %v1185 = vld [vmem:[#allocation12 + $0x10] sm:$0xf]
          %v1186 = vld [vmem:[#allocation12 + $0x14] sm:$0xf]
          %v1187 = vld [vmem:[#allocation12 + $0x18] sm:$0xf]
          %v1188 = vld [vmem:[#allocation12 + $0x1c] sm:$0xf]
          %v1189 = vld [vmem:[#allocation12 + $0x20] sm:$0xf]
          %v1190 = vld [vmem:[#allocation12 + $0x24] sm:$0xf]
          %v1191 = vld [vmem:[#allocation12 + $0x28] sm:$0xf]
          %v1192 = vld [vmem:[#allocation12 + $0x2c] sm:$0xf]
          %v1193 = vld [vmem:[#allocation12 + $0x30] sm:$0xf]
          %v1194 = vld [vmem:[#allocation12 + $0x34] sm:$0xf]
          %v1195 = vld [vmem:[#allocation12 + $0x38] sm:$0xf]
          %v1196 = vld [vmem:[#allocation12 + $0x3c] sm:$0xf]
          %v1197 = vld [vmem:[#allocation12 + $0x40] sm:$0xf]
          %v1198 = vld [vmem:[#allocation12 + $0x44] sm:$0xf]
          %v1199 = vld [vmem:[#allocation12 + $0x48] sm:$0xf]
          %v1200 = vld [vmem:[#allocation12 + $0x4c] sm:$0xf]
          %v1201 = vld [vmem:[#allocation12 + $0x50] sm:$0xf]
          %v1202 = vld [vmem:[#allocation12 + $0x54] sm:$0xf]
          %v1203 = vld [vmem:[#allocation12 + $0x58] sm:$0xf]
          %v1204 = vld [vmem:[#allocation12 + $0x5c] sm:$0xf]
          %v1205 = vld [vmem:[#allocation12 + $0x60] sm:$0xf]
          %v1206 = vld [vmem:[#allocation12 + $0x64] sm:$0xf]
          %v1207 = vld [vmem:[#allocation12 + $0x68] sm:$0xf]
          %v1208 = vld [vmem:[#allocation12 + $0x6c] sm:$0xf]
          %v1209 = vld [vmem:[#allocation12 + $0x70] sm:$0xf]
          %v1210 = vld [vmem:[#allocation12 + $0x74] sm:$0xf]
          %v1211 = vld [vmem:[#allocation12 + $0x78] sm:$0xf]
          %v1212 = vld [vmem:[#allocation12 + $0x7c] sm:$0xf]
          %v1213 = vld [vmem:[#allocation14] sm:$0x1]
          %v1215 = vperm.slane %v1213, 0
          %v1221 = vunpack.c.l.b16 %v1169
          %v1222 = vunpack.c.h.b16 %v1169
          %v1223 = vunpack.c.l.b16 %v1170
          %v1224 = vunpack.c.h.b16 %v1170
          %v1225 = vunpack.c.l.b16 %v1171
          %v1226 = vunpack.c.h.b16 %v1171
          %v1227 = vunpack.c.l.b16 %v1172
          %v1228 = vunpack.c.h.b16 %v1172
          %v1229 = vpack.c.b16 %v1223, %v1221
          %v1230 = vpack.c.b16 %v1224, %v1222
          %v1231 = vpack.c.b16 %v1227, %v1225
          %v1232 = vpack.c.b16 %v1228, %v1226
          %v1269 = vunpack.c.l.b16 %v1181
          %v1270 = vunpack.c.l.b16 %v1182
          %v1271 = vunpack.c.l.b16 %v1183
          %v1272 = vunpack.c.l.b16 %v1184
          %v1273 = vunpack.c.l.b16 %v1185
          %v1274 = vunpack.c.l.b16 %v1186
          %v1275 = vunpack.c.l.b16 %v1187
          %v1276 = vunpack.c.l.b16 %v1188
          %v1277 = vunpack.c.l.b16 %v1189
          %v1278 = vunpack.c.l.b16 %v1190
          %v1279 = vunpack.c.l.b16 %v1191
          %v1280 = vunpack.c.l.b16 %v1192
          %v1281 = vunpack.c.l.b16 %v1193
          %v1282 = vunpack.c.l.b16 %v1194
          %v1283 = vunpack.c.l.b16 %v1195
          %v1284 = vunpack.c.l.b16 %v1196
          %v1285 = vunpack.c.l.b16 %v1197
          %v1286 = vunpack.c.l.b16 %v1198
          %v1287 = vunpack.c.l.b16 %v1199
          %v1288 = vunpack.c.l.b16 %v1200
          %v1289 = vunpack.c.l.b16 %v1201
          %v1290 = vunpack.c.l.b16 %v1202
          %v1291 = vunpack.c.l.b16 %v1203
          %v1292 = vunpack.c.l.b16 %v1204
          %v1293 = vunpack.c.l.b16 %v1205
          %v1294 = vunpack.c.l.b16 %v1206
          %v1295 = vunpack.c.l.b16 %v1207
          %v1296 = vunpack.c.l.b16 %v1208
          %v1297 = vunpack.c.l.b16 %v1209
          %v1298 = vunpack.c.l.b16 %v1210
          %v1299 = vunpack.c.l.b16 %v1211
          %v1300 = vunpack.c.l.b16 %v1212
          %v1301 = vpack.c.b16 %v1270, %v1269
          %v1302 = vpack.c.b16 %v1272, %v1271
          %v1303 = vpack.c.b16 %v1274, %v1273
          %v1304 = vpack.c.b16 %v1276, %v1275
          %v1305 = vpack.c.b16 %v1278, %v1277
          %v1306 = vpack.c.b16 %v1280, %v1279
          %v1307 = vpack.c.b16 %v1282, %v1281
          %v1308 = vpack.c.b16 %v1284, %v1283
          %v1309 = vpack.c.b16 %v1286, %v1285
          %v1310 = vpack.c.b16 %v1288, %v1287
          %v1311 = vpack.c.b16 %v1290, %v1289
          %v1312 = vpack.c.b16 %v1292, %v1291
          %v1313 = vpack.c.b16 %v1294, %v1293
          %v1314 = vpack.c.b16 %v1296, %v1295
          %v1315 = vpack.c.b16 %v1298, %v1297
          %v1316 = vpack.c.b16 %v1300, %v1299
          %1333 = vmatpush.bf16.msra.mxu0 %v1308
          %1334 = vmatpush.bf16.msra.mxu0 %v1307
          %1335 = vmatpush.bf16.msra.mxu0 %v1306
          %1336 = vmatpush.bf16.msra.mxu0 %v1305
          %1337 = vmatpush.bf16.msra.mxu0 %v1304
          %1338 = vmatpush.bf16.msra.mxu0 %v1303
          %1339 = vmatpush.bf16.msra.mxu0 %v1302
          %1340 = vmatpush.bf16.msra.mxu0 %v1301
          %1341 = vmatmul.bf16.gmra.mxu0 %v1229
          %v1342 = vpop.f32.mrf.mxu0
          %v1343 = vadd.f32 %v1215, %v1342
          %v1344 = vpop.f32.mrf.mxu0
          %v1345 = vadd.f32 %v1215, %v1344
          %1346 = vmatmul.bf16.gmra.mxu0 %v1231
          %v1347 = vpop.f32.mrf.mxu0
          %v1348 = vadd.f32 %v1215, %v1347
          %v1349 = vpop.f32.mrf.mxu0
          %v1350 = vadd.f32 %v1215, %v1349
          %1351 = vdwg.mxu0
          %1352 = vmatpush.bf16.msra.mxu0 %v1316
          %1353 = vmatpush.bf16.msra.mxu0 %v1315
          %1354 = vmatpush.bf16.msra.mxu0 %v1314
          %1355 = vmatpush.bf16.msra.mxu0 %v1313
          %1356 = vmatpush.bf16.msra.mxu0 %v1312
          %1357 = vmatpush.bf16.msra.mxu0 %v1311
          %1358 = vmatpush.bf16.msra.mxu0 %v1310
          %1359 = vmatpush.bf16.msra.mxu0 %v1309
          %1360 = vmatmul.bf16.gmra.mxu0 %v1230
          %v1361 = vpop.f32.mrf.mxu0
          %v1362 = vadd.f32 %v1343, %v1361
          %v1363 = vpop.f32.mrf.mxu0
          %v1364 = vadd.f32 %v1345, %v1363
          %1365 = vmatmul.bf16.gmra.mxu0 %v1232
          %v1366 = vpop.f32.mrf.mxu0
          %v1367 = vadd.f32 %v1348, %v1366
          %v1368 = vpop.f32.mrf.mxu0
          %v1369 = vadd.f32 %v1350, %v1368
          %1370 = vdwg.mxu0
          %v1371 = vpack.c.bf16 %v1362, %v1362
          %v1372 = vpack.c.bf16 %v1364, %v1364
          %v1373 = vpack.c.bf16 %v1367, %v1367
          %v1374 = vpack.c.bf16 %v1369, %v1369
          %1375 = vst [vmem:[#allocation2] sm:$0xf] %v1371
          %1376 = vst [vmem:[#allocation2 + $0x4] sm:$0xf] %v1372
          %1377 = vst [vmem:[#allocation2 + $0x8] sm:$0xf] %v1373
          %1378 = vst [vmem:[#allocation2 + $0xc] sm:$0xf] %v1374
          %v1379 = vld [vmem:[#allocation15] sm:$0xf]
          %v1380 = vld [vmem:[#allocation15 + $0x4] sm:$0xf]
          %v1381 = vld [vmem:[#allocation15 + $0x8] sm:$0xf]
          %v1382 = vld [vmem:[#allocation15 + $0xc] sm:$0xf]
          %v1383 = vld [vmem:[#allocation15 + $0x10] sm:$0xf]
          %v1384 = vld [vmem:[#allocation15 + $0x14] sm:$0xf]
          %v1385 = vld [vmem:[#allocation15 + $0x18] sm:$0xf]
          %v1386 = vld [vmem:[#allocation15 + $0x1c] sm:$0xf]
          %v1387 = vld [vmem:[#allocation15 + $0x20] sm:$0xf]
          %v1388 = vld [vmem:[#allocation15 + $0x24] sm:$0xf]
          %v1389 = vld [vmem:[#allocation15 + $0x28] sm:$0xf]
          %v1390 = vld [vmem:[#allocation15 + $0x2c] sm:$0xf]
          %v1391 = vld [vmem:[#allocation15 + $0x30] sm:$0xf]
          %v1392 = vld [vmem:[#allocation15 + $0x34] sm:$0xf]
          %v1393 = vld [vmem:[#allocation15 + $0x38] sm:$0xf]
          %v1394 = vld [vmem:[#allocation15 + $0x3c] sm:$0xf]
          %v1395 = vld [vmem:[#allocation15 + $0x40] sm:$0xf]
          %v1396 = vld [vmem:[#allocation15 + $0x44] sm:$0xf]
          %v1397 = vld [vmem:[#allocation15 + $0x48] sm:$0xf]
          %v1398 = vld [vmem:[#allocation15 + $0x4c] sm:$0xf]
          %v1399 = vld [vmem:[#allocation15 + $0x50] sm:$0xf]
          %v1400 = vld [vmem:[#allocation15 + $0x54] sm:$0xf]
          %v1401 = vld [vmem:[#allocation15 + $0x58] sm:$0xf]
          %v1402 = vld [vmem:[#allocation15 + $0x5c] sm:$0xf]
          %v1403 = vld [vmem:[#allocation15 + $0x60] sm:$0xf]
          %v1404 = vld [vmem:[#allocation15 + $0x64] sm:$0xf]
          %v1405 = vld [vmem:[#allocation15 + $0x68] sm:$0xf]
          %v1406 = vld [vmem:[#allocation15 + $0x6c] sm:$0xf]
          %v1407 = vld [vmem:[#allocation15 + $0x70] sm:$0xf]
          %v1408 = vld [vmem:[#allocation15 + $0x74] sm:$0xf]
          %v1409 = vld [vmem:[#allocation15 + $0x78] sm:$0xf]
          %v1410 = vld [vmem:[#allocation15 + $0x7c] sm:$0xf]
          %v1411 = vld [vmem:[#allocation17] sm:$0x1]
          %v1413 = vperm.slane %v1411, 0
          %v1447 = vunpack.c.l.b16 %v1379
          %v1448 = vunpack.c.l.b16 %v1380
          %v1449 = vunpack.c.l.b16 %v1381
          %v1450 = vunpack.c.l.b16 %v1382
          %v1451 = vunpack.c.l.b16 %v1383
          %v1452 = vunpack.c.l.b16 %v1384
          %v1453 = vunpack.c.l.b16 %v1385
          %v1454 = vunpack.c.l.b16 %v1386
          %v1455 = vunpack.c.l.b16 %v1387
          %v1456 = vunpack.c.l.b16 %v1388
          %v1457 = vunpack.c.l.b16 %v1389
          %v1458 = vunpack.c.l.b16 %v1390
          %v1459 = vunpack.c.l.b16 %v1391
          %v1460 = vunpack.c.l.b16 %v1392
          %v1461 = vunpack.c.l.b16 %v1393
          %v1462 = vunpack.c.l.b16 %v1394
          %v1463 = vunpack.c.l.b16 %v1395
          %v1464 = vunpack.c.l.b16 %v1396
          %v1465 = vunpack.c.l.b16 %v1397
          %v1466 = vunpack.c.l.b16 %v1398
          %v1467 = vunpack.c.l.b16 %v1399
          %v1468 = vunpack.c.l.b16 %v1400
          %v1469 = vunpack.c.l.b16 %v1401
          %v1470 = vunpack.c.l.b16 %v1402
          %v1471 = vunpack.c.l.b16 %v1403
          %v1472 = vunpack.c.l.b16 %v1404
          %v1473 = vunpack.c.l.b16 %v1405
          %v1474 = vunpack.c.l.b16 %v1406
          %v1475 = vunpack.c.l.b16 %v1407
          %v1476 = vunpack.c.l.b16 %v1408
          %v1477 = vunpack.c.l.b16 %v1409
          %v1478 = vunpack.c.l.b16 %v1410
          %v1479 = vpack.c.b16 %v1448, %v1447
          %v1480 = vpack.c.b16 %v1450, %v1449
          %v1481 = vpack.c.b16 %v1452, %v1451
          %v1482 = vpack.c.b16 %v1454, %v1453
          %v1483 = vpack.c.b16 %v1456, %v1455
          %v1484 = vpack.c.b16 %v1458, %v1457
          %v1485 = vpack.c.b16 %v1460, %v1459
          %v1486 = vpack.c.b16 %v1462, %v1461
          %v1487 = vpack.c.b16 %v1464, %v1463
          %v1488 = vpack.c.b16 %v1466, %v1465
          %v1489 = vpack.c.b16 %v1468, %v1467
          %v1490 = vpack.c.b16 %v1470, %v1469
          %v1491 = vpack.c.b16 %v1472, %v1471
          %v1492 = vpack.c.b16 %v1474, %v1473
          %v1493 = vpack.c.b16 %v1476, %v1475
          %v1494 = vpack.c.b16 %v1478, %v1477
          %1511 = vmatpush.bf16.msra.mxu0 %v1486
          %1512 = vmatpush.bf16.msra.mxu0 %v1485
          %1513 = vmatpush.bf16.msra.mxu0 %v1484
          %1514 = vmatpush.bf16.msra.mxu0 %v1483
          %1515 = vmatpush.bf16.msra.mxu0 %v1482
          %1516 = vmatpush.bf16.msra.mxu0 %v1481
          %1517 = vmatpush.bf16.msra.mxu0 %v1480
          %1518 = vmatpush.bf16.msra.mxu0 %v1479
          %1519 = vmatmul.bf16.gmra.mxu0 %v1229
          %v1520 = vpop.f32.mrf.mxu0
          %v1521 = vadd.f32 %v1413, %v1520
          %v1522 = vpop.f32.mrf.mxu0
          %v1523 = vadd.f32 %v1413, %v1522
          %1524 = vmatmul.bf16.gmra.mxu0 %v1231
          %v1525 = vpop.f32.mrf.mxu0
          %v1526 = vadd.f32 %v1413, %v1525
          %v1527 = vpop.f32.mrf.mxu0
          %v1528 = vadd.f32 %v1413, %v1527
          %1529 = vdwg.mxu0
          %1530 = vmatpush.bf16.msra.mxu0 %v1494
          %1531 = vmatpush.bf16.msra.mxu0 %v1493
          %1532 = vmatpush.bf16.msra.mxu0 %v1492
          %1533 = vmatpush.bf16.msra.mxu0 %v1491
          %1534 = vmatpush.bf16.msra.mxu0 %v1490
          %1535 = vmatpush.bf16.msra.mxu0 %v1489
          %1536 = vmatpush.bf16.msra.mxu0 %v1488
          %1537 = vmatpush.bf16.msra.mxu0 %v1487
          %1538 = vmatmul.bf16.gmra.mxu0 %v1230
          %v1539 = vpop.f32.mrf.mxu0
          %v1540 = vadd.f32 %v1521, %v1539
          %v1541 = vpop.f32.mrf.mxu0
          %v1542 = vadd.f32 %v1523, %v1541
          %1543 = vmatmul.bf16.gmra.mxu0 %v1232
          %v1544 = vpop.f32.mrf.mxu0
          %v1545 = vadd.f32 %v1526, %v1544
          %v1546 = vpop.f32.mrf.mxu0
          %v1547 = vadd.f32 %v1528, %v1546
          %1548 = vdwg.mxu0
          %v1549 = vpack.c.bf16 %v1540, %v1540
          %v1550 = vpack.c.bf16 %v1542, %v1542
          %v1551 = vpack.c.bf16 %v1545, %v1545
          %v1552 = vpack.c.bf16 %v1547, %v1547
          %1553 = vst [vmem:[#allocation3] sm:$0xf] %v1549
          %1554 = vst [vmem:[#allocation3 + $0x4] sm:$0xf] %v1550
          %1555 = vst [vmem:[#allocation3 + $0x8] sm:$0xf] %v1551
          %1556 = vst [vmem:[#allocation3 + $0xc] sm:$0xf] %v1552
          %v1557 = vld [vmem:[#allocation21] sm:$0xf]
          %v1558 = vld [vmem:[#allocation21 + $0x4] sm:$0xf]
          %v1559 = vld [vmem:[#allocation21 + $0x8] sm:$0xf]
          %v1560 = vld [vmem:[#allocation21 + $0xc] sm:$0xf]
          %v1561 = vld [vmem:[#allocation21 + $0x10] sm:$0xf]
          %v1562 = vld [vmem:[#allocation21 + $0x14] sm:$0xf]
          %v1563 = vld [vmem:[#allocation21 + $0x18] sm:$0xf]
          %v1564 = vld [vmem:[#allocation21 + $0x1c] sm:$0xf]
          %v1565 = vld [vmem:[#allocation21 + $0x20] sm:$0xf]
          %v1566 = vld [vmem:[#allocation21 + $0x24] sm:$0xf]
          %v1567 = vld [vmem:[#allocation21 + $0x28] sm:$0xf]
          %v1568 = vld [vmem:[#allocation21 + $0x2c] sm:$0xf]
          %v1569 = vld [vmem:[#allocation21 + $0x30] sm:$0xf]
          %v1570 = vld [vmem:[#allocation21 + $0x34] sm:$0xf]
          %v1571 = vld [vmem:[#allocation21 + $0x38] sm:$0xf]
          %v1572 = vld [vmem:[#allocation21 + $0x3c] sm:$0xf]
          %v1573 = vld [vmem:[#allocation21 + $0x40] sm:$0xf]
          %v1574 = vld [vmem:[#allocation21 + $0x44] sm:$0xf]
          %v1575 = vld [vmem:[#allocation21 + $0x48] sm:$0xf]
          %v1576 = vld [vmem:[#allocation21 + $0x4c] sm:$0xf]
          %v1577 = vld [vmem:[#allocation21 + $0x50] sm:$0xf]
          %v1578 = vld [vmem:[#allocation21 + $0x54] sm:$0xf]
          %v1579 = vld [vmem:[#allocation21 + $0x58] sm:$0xf]
          %v1580 = vld [vmem:[#allocation21 + $0x5c] sm:$0xf]
          %v1581 = vld [vmem:[#allocation21 + $0x60] sm:$0xf]
          %v1582 = vld [vmem:[#allocation21 + $0x64] sm:$0xf]
          %v1583 = vld [vmem:[#allocation21 + $0x68] sm:$0xf]
          %v1584 = vld [vmem:[#allocation21 + $0x6c] sm:$0xf]
          %v1585 = vld [vmem:[#allocation21 + $0x70] sm:$0xf]
          %v1586 = vld [vmem:[#allocation21 + $0x74] sm:$0xf]
          %v1587 = vld [vmem:[#allocation21 + $0x78] sm:$0xf]
          %v1588 = vld [vmem:[#allocation21 + $0x7c] sm:$0xf]
          %v1589 = vld [vmem:[%s13] sm:$0x1]
          %v1591 = vperm.slane %v1589, 0
          %v1601 = vunpack.c.l.b16 %v1173
          %v1602 = vunpack.c.h.b16 %v1173
          %v1603 = vunpack.c.l.b16 %v1174
          %v1604 = vunpack.c.h.b16 %v1174
          %v1605 = vunpack.c.l.b16 %v1175
          %v1606 = vunpack.c.h.b16 %v1175
          %v1607 = vunpack.c.l.b16 %v1176
          %v1608 = vunpack.c.h.b16 %v1176
          %v1609 = vunpack.c.l.b16 %v1177
          %v1610 = vunpack.c.h.b16 %v1177
          %v1611 = vunpack.c.l.b16 %v1178
          %v1612 = vunpack.c.h.b16 %v1178
          %v1613 = vunpack.c.l.b16 %v1179
          %v1614 = vunpack.c.h.b16 %v1179
          %v1615 = vunpack.c.l.b16 %v1180
          %v1616 = vunpack.c.h.b16 %v1180
          %v1617 = vpack.c.b16 %v1603, %v1601
          %v1618 = vpack.c.b16 %v1604, %v1602
          %v1619 = vpack.c.b16 %v1607, %v1605
          %v1620 = vpack.c.b16 %v1608, %v1606
          %v1621 = vpack.c.b16 %v1611, %v1609
          %v1622 = vpack.c.b16 %v1612, %v1610
          %v1623 = vpack.c.b16 %v1615, %v1613
          %v1624 = vpack.c.b16 %v1616, %v1614
          %v1665 = vunpack.c.l.b16 %v1557
          %v1666 = vunpack.c.l.b16 %v1558
          %v1667 = vunpack.c.l.b16 %v1559
          %v1668 = vunpack.c.l.b16 %v1560
          %v1669 = vunpack.c.l.b16 %v1561
          %v1670 = vunpack.c.l.b16 %v1562
          %v1671 = vunpack.c.l.b16 %v1563
          %v1672 = vunpack.c.l.b16 %v1564
          %v1673 = vunpack.c.l.b16 %v1565
          %v1674 = vunpack.c.l.b16 %v1566
          %v1675 = vunpack.c.l.b16 %v1567
          %v1676 = vunpack.c.l.b16 %v1568
          %v1677 = vunpack.c.l.b16 %v1569
          %v1678 = vunpack.c.l.b16 %v1570
          %v1679 = vunpack.c.l.b16 %v1571
          %v1680 = vunpack.c.l.b16 %v1572
          %v1681 = vunpack.c.l.b16 %v1573
          %v1682 = vunpack.c.l.b16 %v1574
          %v1683 = vunpack.c.l.b16 %v1575
          %v1684 = vunpack.c.l.b16 %v1576
          %v1685 = vunpack.c.l.b16 %v1577
          %v1686 = vunpack.c.l.b16 %v1578
          %v1687 = vunpack.c.l.b16 %v1579
          %v1688 = vunpack.c.l.b16 %v1580
          %v1689 = vunpack.c.l.b16 %v1581
          %v1690 = vunpack.c.l.b16 %v1582
          %v1691 = vunpack.c.l.b16 %v1583
          %v1692 = vunpack.c.l.b16 %v1584
          %v1693 = vunpack.c.l.b16 %v1585
          %v1694 = vunpack.c.l.b16 %v1586
          %v1695 = vunpack.c.l.b16 %v1587
          %v1696 = vunpack.c.l.b16 %v1588
          %v1697 = vpack.c.b16 %v1666, %v1665
          %v1698 = vpack.c.b16 %v1668, %v1667
          %v1699 = vpack.c.b16 %v1670, %v1669
          %v1700 = vpack.c.b16 %v1672, %v1671
          %v1701 = vpack.c.b16 %v1674, %v1673
          %v1702 = vpack.c.b16 %v1676, %v1675
          %v1703 = vpack.c.b16 %v1678, %v1677
          %v1704 = vpack.c.b16 %v1680, %v1679
          %v1705 = vpack.c.b16 %v1682, %v1681
          %v1706 = vpack.c.b16 %v1684, %v1683
          %v1707 = vpack.c.b16 %v1686, %v1685
          %v1708 = vpack.c.b16 %v1688, %v1687
          %v1709 = vpack.c.b16 %v1690, %v1689
          %v1710 = vpack.c.b16 %v1692, %v1691
          %v1711 = vpack.c.b16 %v1694, %v1693
          %v1712 = vpack.c.b16 %v1696, %v1695
          %1729 = vmatpush.bf16.msra.mxu0 %v1704
          %1730 = vmatpush.bf16.msra.mxu0 %v1703
          %1731 = vmatpush.bf16.msra.mxu0 %v1702
          %1732 = vmatpush.bf16.msra.mxu0 %v1701
          %1733 = vmatpush.bf16.msra.mxu0 %v1700
          %1734 = vmatpush.bf16.msra.mxu0 %v1699
          %1735 = vmatpush.bf16.msra.mxu0 %v1698
          %1736 = vmatpush.bf16.msra.mxu0 %v1697
          %1737 = vmatmul.bf16.gmra.mxu0 %v1617
          %v1738 = vpop.f32.mrf.mxu0
          %v1739 = vadd.f32 %v1591, %v1738
          %v1740 = vpop.f32.mrf.mxu0
          %v1741 = vadd.f32 %v1591, %v1740
          %1742 = vmatmul.bf16.gmra.mxu0 %v1619
          %v1743 = vpop.f32.mrf.mxu0
          %v1744 = vadd.f32 %v1591, %v1743
          %v1745 = vpop.f32.mrf.mxu0
          %v1746 = vadd.f32 %v1591, %v1745
          %1747 = vmatmul.bf16.gmra.mxu0 %v1621
          %v1748 = vpop.f32.mrf.mxu0
          %v1749 = vadd.f32 %v1591, %v1748
          %v1750 = vpop.f32.mrf.mxu0
          %v1751 = vadd.f32 %v1591, %v1750
          %1752 = vmatmul.bf16.gmra.mxu0 %v1623
          %v1753 = vpop.f32.mrf.mxu0
          %v1754 = vadd.f32 %v1591, %v1753
          %v1755 = vpop.f32.mrf.mxu0
          %v1756 = vadd.f32 %v1591, %v1755
          %1757 = vdwg.mxu0
          %1758 = vmatpush.bf16.msra.mxu0 %v1712
          %1759 = vmatpush.bf16.msra.mxu0 %v1711
          %1760 = vmatpush.bf16.msra.mxu0 %v1710
          %1761 = vmatpush.bf16.msra.mxu0 %v1709
          %1762 = vmatpush.bf16.msra.mxu0 %v1708
          %1763 = vmatpush.bf16.msra.mxu0 %v1707
          %1764 = vmatpush.bf16.msra.mxu0 %v1706
          %1765 = vmatpush.bf16.msra.mxu0 %v1705
          %1766 = vmatmul.bf16.gmra.mxu0 %v1618
          %v1767 = vpop.f32.mrf.mxu0
          %v1768 = vadd.f32 %v1739, %v1767
          %v1769 = vpop.f32.mrf.mxu0
          %v1770 = vadd.f32 %v1741, %v1769
          %1771 = vmatmul.bf16.gmra.mxu0 %v1620
          %v1772 = vpop.f32.mrf.mxu0
          %v1773 = vadd.f32 %v1744, %v1772
          %v1774 = vpop.f32.mrf.mxu0
          %v1775 = vadd.f32 %v1746, %v1774
          %1776 = vmatmul.bf16.gmra.mxu0 %v1622
          %v1777 = vpop.f32.mrf.mxu0
          %v1778 = vadd.f32 %v1749, %v1777
          %v1779 = vpop.f32.mrf.mxu0
          %v1780 = vadd.f32 %v1751, %v1779
          %1781 = vmatmul.bf16.gmra.mxu0 %v1624
          %v1782 = vpop.f32.mrf.mxu0
          %v1783 = vadd.f32 %v1754, %v1782
          %v1784 = vpop.f32.mrf.mxu0
          %v1785 = vadd.f32 %v1756, %v1784
          %1786 = vdwg.mxu0
          %v1787 = vpack.c.bf16 %v1768, %v1768
          %v1788 = vpack.c.bf16 %v1770, %v1770
          %v1789 = vpack.c.bf16 %v1773, %v1773
          %v1790 = vpack.c.bf16 %v1775, %v1775
          %v1791 = vpack.c.bf16 %v1778, %v1778
          %v1792 = vpack.c.bf16 %v1780, %v1780
          %v1793 = vpack.c.bf16 %v1783, %v1783
          %v1794 = vpack.c.bf16 %v1785, %v1785
          %1795 = vst [vmem:[#allocation4] sm:$0xf] %v1787
          %1796 = vst [vmem:[#allocation4 + $0x4] sm:$0xf] %v1788
          %1797 = vst [vmem:[#allocation4 + $0x8] sm:$0xf] %v1789
          %1798 = vst [vmem:[#allocation4 + $0xc] sm:$0xf] %v1790
          %1799 = vst [vmem:[#allocation4 + $0x10] sm:$0xf] %v1791
          %1800 = vst [vmem:[#allocation4 + $0x14] sm:$0xf] %v1792
          %1801 = vst [vmem:[#allocation4 + $0x18] sm:$0xf] %v1793
          %1802 = vst [vmem:[#allocation4 + $0x1c] sm:$0xf] %v1794
          %v1803 = vld [vmem:[#allocation23] sm:$0xf]
          %v1804 = vld [vmem:[#allocation23 + $0x4] sm:$0xf]
          %v1805 = vld [vmem:[#allocation23 + $0x8] sm:$0xf]
          %v1806 = vld [vmem:[#allocation23 + $0xc] sm:$0xf]
          %v1807 = vld [vmem:[#allocation23 + $0x10] sm:$0xf]
          %v1808 = vld [vmem:[#allocation23 + $0x14] sm:$0xf]
          %v1809 = vld [vmem:[#allocation23 + $0x18] sm:$0xf]
          %v1810 = vld [vmem:[#allocation23 + $0x1c] sm:$0xf]
          %v1811 = vld [vmem:[#allocation23 + $0x20] sm:$0xf]
          %v1812 = vld [vmem:[#allocation23 + $0x24] sm:$0xf]
          %v1813 = vld [vmem:[#allocation23 + $0x28] sm:$0xf]
          %v1814 = vld [vmem:[#allocation23 + $0x2c] sm:$0xf]
          %v1815 = vld [vmem:[#allocation23 + $0x30] sm:$0xf]
          %v1816 = vld [vmem:[#allocation23 + $0x34] sm:$0xf]
          %v1817 = vld [vmem:[#allocation23 + $0x38] sm:$0xf]
          %v1818 = vld [vmem:[#allocation23 + $0x3c] sm:$0xf]
          %v1819 = vld [vmem:[#allocation23 + $0x40] sm:$0xf]
          %v1820 = vld [vmem:[#allocation23 + $0x44] sm:$0xf]
          %v1821 = vld [vmem:[#allocation23 + $0x48] sm:$0xf]
          %v1822 = vld [vmem:[#allocation23 + $0x4c] sm:$0xf]
          %v1823 = vld [vmem:[#allocation23 + $0x50] sm:$0xf]
          %v1824 = vld [vmem:[#allocation23 + $0x54] sm:$0xf]
          %v1825 = vld [vmem:[#allocation23 + $0x58] sm:$0xf]
          %v1826 = vld [vmem:[#allocation23 + $0x5c] sm:$0xf]
          %v1827 = vld [vmem:[#allocation23 + $0x60] sm:$0xf]
          %v1828 = vld [vmem:[#allocation23 + $0x64] sm:$0xf]
          %v1829 = vld [vmem:[#allocation23 + $0x68] sm:$0xf]
          %v1830 = vld [vmem:[#allocation23 + $0x6c] sm:$0xf]
          %v1831 = vld [vmem:[#allocation23 + $0x70] sm:$0xf]
          %v1832 = vld [vmem:[#allocation23 + $0x74] sm:$0xf]
          %v1833 = vld [vmem:[#allocation23 + $0x78] sm:$0xf]
          %v1834 = vld [vmem:[#allocation23 + $0x7c] sm:$0xf]
          %v1835 = vld [vmem:[%s15] sm:$0x1]
          %v1837 = vperm.slane %v1835, 0
          %v1871 = vunpack.c.l.b16 %v1803
          %v1872 = vunpack.c.l.b16 %v1804
          %v1873 = vunpack.c.l.b16 %v1805
          %v1874 = vunpack.c.l.b16 %v1806
          %v1875 = vunpack.c.l.b16 %v1807
          %v1876 = vunpack.c.l.b16 %v1808
          %v1877 = vunpack.c.l.b16 %v1809
          %v1878 = vunpack.c.l.b16 %v1810
          %v1879 = vunpack.c.l.b16 %v1811
          %v1880 = vunpack.c.l.b16 %v1812
          %v1881 = vunpack.c.l.b16 %v1813
          %v1882 = vunpack.c.l.b16 %v1814
          %v1883 = vunpack.c.l.b16 %v1815
          %v1884 = vunpack.c.l.b16 %v1816
          %v1885 = vunpack.c.l.b16 %v1817
          %v1886 = vunpack.c.l.b16 %v1818
          %v1887 = vunpack.c.l.b16 %v1819
          %v1888 = vunpack.c.l.b16 %v1820
          %v1889 = vunpack.c.l.b16 %v1821
          %v1890 = vunpack.c.l.b16 %v1822
          %v1891 = vunpack.c.l.b16 %v1823
          %v1892 = vunpack.c.l.b16 %v1824
          %v1893 = vunpack.c.l.b16 %v1825
          %v1894 = vunpack.c.l.b16 %v1826
          %v1895 = vunpack.c.l.b16 %v1827
          %v1896 = vunpack.c.l.b16 %v1828
          %v1897 = vunpack.c.l.b16 %v1829
          %v1898 = vunpack.c.l.b16 %v1830
          %v1899 = vunpack.c.l.b16 %v1831
          %v1900 = vunpack.c.l.b16 %v1832
          %v1901 = vunpack.c.l.b16 %v1833
          %v1902 = vunpack.c.l.b16 %v1834
          %v1903 = vpack.c.b16 %v1872, %v1871
          %v1904 = vpack.c.b16 %v1874, %v1873
          %v1905 = vpack.c.b16 %v1876, %v1875
          %v1906 = vpack.c.b16 %v1878, %v1877
          %v1907 = vpack.c.b16 %v1880, %v1879
          %v1908 = vpack.c.b16 %v1882, %v1881
          %v1909 = vpack.c.b16 %v1884, %v1883
          %v1910 = vpack.c.b16 %v1886, %v1885
          %v1911 = vpack.c.b16 %v1888, %v1887
          %v1912 = vpack.c.b16 %v1890, %v1889
          %v1913 = vpack.c.b16 %v1892, %v1891
          %v1914 = vpack.c.b16 %v1894, %v1893
          %v1915 = vpack.c.b16 %v1896, %v1895
          %v1916 = vpack.c.b16 %v1898, %v1897
          %v1917 = vpack.c.b16 %v1900, %v1899
          %v1918 = vpack.c.b16 %v1902, %v1901
          %1935 = vmatpush.bf16.msra.mxu0 %v1910
          %1936 = vmatpush.bf16.msra.mxu0 %v1909
          %1937 = vmatpush.bf16.msra.mxu0 %v1908
          %1938 = vmatpush.bf16.msra.mxu0 %v1907
          %1939 = vmatpush.bf16.msra.mxu0 %v1906
          %1940 = vmatpush.bf16.msra.mxu0 %v1905
          %1941 = vmatpush.bf16.msra.mxu0 %v1904
          %1942 = vmatpush.bf16.msra.mxu0 %v1903
          %1943 = vmatmul.bf16.gmra.mxu0 %v1617
          %v1944 = vpop.f32.mrf.mxu0
          %v1945 = vadd.f32 %v1837, %v1944
          %v1946 = vpop.f32.mrf.mxu0
          %v1947 = vadd.f32 %v1837, %v1946
          %1948 = vmatmul.bf16.gmra.mxu0 %v1619
          %v1949 = vpop.f32.mrf.mxu0
          %v1950 = vadd.f32 %v1837, %v1949
          %v1951 = vpop.f32.mrf.mxu0
          %v1952 = vadd.f32 %v1837, %v1951
          %1953 = vmatmul.bf16.gmra.mxu0 %v1621
          %v1954 = vpop.f32.mrf.mxu0
          %v1955 = vadd.f32 %v1837, %v1954
          %v1956 = vpop.f32.mrf.mxu0
          %v1957 = vadd.f32 %v1837, %v1956
          %1958 = vmatmul.bf16.gmra.mxu0 %v1623
          %v1959 = vpop.f32.mrf.mxu0
          %v1960 = vadd.f32 %v1837, %v1959
          %v1961 = vpop.f32.mrf.mxu0
          %v1962 = vadd.f32 %v1837, %v1961
          %1963 = vdwg.mxu0
          %1964 = vmatpush.bf16.msra.mxu0 %v1918
          %1965 = vmatpush.bf16.msra.mxu0 %v1917
          %1966 = vmatpush.bf16.msra.mxu0 %v1916
          %1967 = vmatpush.bf16.msra.mxu0 %v1915
          %1968 = vmatpush.bf16.msra.mxu0 %v1914
          %1969 = vmatpush.bf16.msra.mxu0 %v1913
          %1970 = vmatpush.bf16.msra.mxu0 %v1912
          %1971 = vmatpush.bf16.msra.mxu0 %v1911
          %1972 = vmatmul.bf16.gmra.mxu0 %v1618
          %v1973 = vpop.f32.mrf.mxu0
          %v1974 = vadd.f32 %v1945, %v1973
          %v1975 = vpop.f32.mrf.mxu0
          %v1976 = vadd.f32 %v1947, %v1975
          %1977 = vmatmul.bf16.gmra.mxu0 %v1620
          %v1978 = vpop.f32.mrf.mxu0
          %v1979 = vadd.f32 %v1950, %v1978
          %v1980 = vpop.f32.mrf.mxu0
          %v1981 = vadd.f32 %v1952, %v1980
          %1982 = vmatmul.bf16.gmra.mxu0 %v1622
          %v1983 = vpop.f32.mrf.mxu0
          %v1984 = vadd.f32 %v1955, %v1983
          %v1985 = vpop.f32.mrf.mxu0
          %v1986 = vadd.f32 %v1957, %v1985
          %1987 = vmatmul.bf16.gmra.mxu0 %v1624
          %v1988 = vpop.f32.mrf.mxu0
          %v1989 = vadd.f32 %v1960, %v1988
          %v1990 = vpop.f32.mrf.mxu0
          %v1991 = vadd.f32 %v1962, %v1990
          %1992 = vdwg.mxu0
          %v1993 = vpack.c.bf16 %v1974, %v1974
          %v1994 = vpack.c.bf16 %v1976, %v1976
          %v1995 = vpack.c.bf16 %v1979, %v1979
          %v1996 = vpack.c.bf16 %v1981, %v1981
          %v1997 = vpack.c.bf16 %v1984, %v1984
          %v1998 = vpack.c.bf16 %v1986, %v1986
          %v1999 = vpack.c.bf16 %v1989, %v1989
          %v2000 = vpack.c.bf16 %v1991, %v1991
          %2001 = vst [vmem:[#allocation5] sm:$0xf] %v1993
          %2002 = vst [vmem:[#allocation5 + $0x4] sm:$0xf] %v1994
          %2003 = vst [vmem:[#allocation5 + $0x8] sm:$0xf] %v1995
          %2004 = vst [vmem:[#allocation5 + $0xc] sm:$0xf] %v1996
          %2005 = vst [vmem:[#allocation5 + $0x10] sm:$0xf] %v1997
          %2006 = vst [vmem:[#allocation5 + $0x14] sm:$0xf] %v1998
          %2007 = vst [vmem:[#allocation5 + $0x18] sm:$0xf] %v1999
          %2008 = vst [vmem:[#allocation5 + $0x1c] sm:$0xf] %v2000
          %s2009 = scalar_lea.vmem [#allocation12], 128
          %v2010 = vld [vmem:[%s2009] sm:$0xf]
          %v2011 = vld [vmem:[%s2009 + $0x4] sm:$0xf]
          %v2012 = vld [vmem:[%s2009 + $0x8] sm:$0xf]
          %v2013 = vld [vmem:[%s2009 + $0xc] sm:$0xf]
          %v2014 = vld [vmem:[%s2009 + $0x10] sm:$0xf]
          %v2015 = vld [vmem:[%s2009 + $0x14] sm:$0xf]
          %v2016 = vld [vmem:[%s2009 + $0x18] sm:$0xf]
          %v2017 = vld [vmem:[%s2009 + $0x1c] sm:$0xf]
          %v2018 = vld [vmem:[%s2009 + $0x20] sm:$0xf]
          %v2019 = vld [vmem:[%s2009 + $0x24] sm:$0xf]
          %v2020 = vld [vmem:[%s2009 + $0x28] sm:$0xf]
          %v2021 = vld [vmem:[%s2009 + $0x2c] sm:$0xf]
          %v2022 = vld [vmem:[%s2009 + $0x30] sm:$0xf]
          %v2023 = vld [vmem:[%s2009 + $0x34] sm:$0xf]
          %v2024 = vld [vmem:[%s2009 + $0x38] sm:$0xf]
          %v2025 = vld [vmem:[%s2009 + $0x3c] sm:$0xf]
          %v2026 = vld [vmem:[%s2009 + $0x40] sm:$0xf]
          %v2027 = vld [vmem:[%s2009 + $0x44] sm:$0xf]
          %v2028 = vld [vmem:[%s2009 + $0x48] sm:$0xf]
          %v2029 = vld [vmem:[%s2009 + $0x4c] sm:$0xf]
          %v2030 = vld [vmem:[%s2009 + $0x50] sm:$0xf]
          %v2031 = vld [vmem:[%s2009 + $0x54] sm:$0xf]
          %v2032 = vld [vmem:[%s2009 + $0x58] sm:$0xf]
          %v2033 = vld [vmem:[%s2009 + $0x5c] sm:$0xf]
          %v2034 = vld [vmem:[%s2009 + $0x60] sm:$0xf]
          %v2035 = vld [vmem:[%s2009 + $0x64] sm:$0xf]
          %v2036 = vld [vmem:[%s2009 + $0x68] sm:$0xf]
          %v2037 = vld [vmem:[%s2009 + $0x6c] sm:$0xf]
          %v2038 = vld [vmem:[%s2009 + $0x70] sm:$0xf]
          %v2039 = vld [vmem:[%s2009 + $0x74] sm:$0xf]
          %v2040 = vld [vmem:[%s2009 + $0x78] sm:$0xf]
          %v2041 = vld [vmem:[%s2009 + $0x7c] sm:$0xf]
          %s2042 = scalar_lea.vmem [#allocation14], 1
          %v2043 = vld [vmem:[%s2042] sm:$0x1]
          %v2045 = vperm.slane %v2043, 0
          %v2079 = vunpack.c.l.b16 %v2010
          %v2080 = vunpack.c.l.b16 %v2011
          %v2081 = vunpack.c.l.b16 %v2012
          %v2082 = vunpack.c.l.b16 %v2013
          %v2083 = vunpack.c.l.b16 %v2014
          %v2084 = vunpack.c.l.b16 %v2015
          %v2085 = vunpack.c.l.b16 %v2016
          %v2086 = vunpack.c.l.b16 %v2017
          %v2087 = vunpack.c.l.b16 %v2018
          %v2088 = vunpack.c.l.b16 %v2019
          %v2089 = vunpack.c.l.b16 %v2020
          %v2090 = vunpack.c.l.b16 %v2021
          %v2091 = vunpack.c.l.b16 %v2022
          %v2092 = vunpack.c.l.b16 %v2023
          %v2093 = vunpack.c.l.b16 %v2024
          %v2094 = vunpack.c.l.b16 %v2025
          %v2095 = vunpack.c.l.b16 %v2026
          %v2096 = vunpack.c.l.b16 %v2027
          %v2097 = vunpack.c.l.b16 %v2028
          %v2098 = vunpack.c.l.b16 %v2029
          %v2099 = vunpack.c.l.b16 %v2030
          %v2100 = vunpack.c.l.b16 %v2031
          %v2101 = vunpack.c.l.b16 %v2032
          %v2102 = vunpack.c.l.b16 %v2033
          %v2103 = vunpack.c.l.b16 %v2034
          %v2104 = vunpack.c.l.b16 %v2035
          %v2105 = vunpack.c.l.b16 %v2036
          %v2106 = vunpack.c.l.b16 %v2037
          %v2107 = vunpack.c.l.b16 %v2038
          %v2108 = vunpack.c.l.b16 %v2039
          %v2109 = vunpack.c.l.b16 %v2040
          %v2110 = vunpack.c.l.b16 %v2041
          %v2111 = vpack.c.b16 %v2080, %v2079
          %v2112 = vpack.c.b16 %v2082, %v2081
          %v2113 = vpack.c.b16 %v2084, %v2083
          %v2114 = vpack.c.b16 %v2086, %v2085
          %v2115 = vpack.c.b16 %v2088, %v2087
          %v2116 = vpack.c.b16 %v2090, %v2089
          %v2117 = vpack.c.b16 %v2092, %v2091
          %v2118 = vpack.c.b16 %v2094, %v2093
          %v2119 = vpack.c.b16 %v2096, %v2095
          %v2120 = vpack.c.b16 %v2098, %v2097
          %v2121 = vpack.c.b16 %v2100, %v2099
          %v2122 = vpack.c.b16 %v2102, %v2101
          %v2123 = vpack.c.b16 %v2104, %v2103
          %v2124 = vpack.c.b16 %v2106, %v2105
          %v2125 = vpack.c.b16 %v2108, %v2107
          %v2126 = vpack.c.b16 %v2110, %v2109
          %2143 = vmatpush.bf16.msra.mxu0 %v2118
          %2144 = vmatpush.bf16.msra.mxu0 %v2117
          %2145 = vmatpush.bf16.msra.mxu0 %v2116
          %2146 = vmatpush.bf16.msra.mxu0 %v2115
          %2147 = vmatpush.bf16.msra.mxu0 %v2114
          %2148 = vmatpush.bf16.msra.mxu0 %v2113
          %2149 = vmatpush.bf16.msra.mxu0 %v2112
          %2150 = vmatpush.bf16.msra.mxu0 %v2111
          %2151 = vmatmul.bf16.gmra.mxu0 %v1229
          %v2152 = vpop.f32.mrf.mxu0
          %v2153 = vadd.f32 %v2045, %v2152
          %v2154 = vpop.f32.mrf.mxu0
          %v2155 = vadd.f32 %v2045, %v2154
          %2156 = vmatmul.bf16.gmra.mxu0 %v1231
          %v2157 = vpop.f32.mrf.mxu0
          %v2158 = vadd.f32 %v2045, %v2157
          %v2159 = vpop.f32.mrf.mxu0
          %v2160 = vadd.f32 %v2045, %v2159
          %2161 = vdwg.mxu0
          %2162 = vmatpush.bf16.msra.mxu0 %v2126
          %2163 = vmatpush.bf16.msra.mxu0 %v2125
          %2164 = vmatpush.bf16.msra.mxu0 %v2124
          %2165 = vmatpush.bf16.msra.mxu0 %v2123
          %2166 = vmatpush.bf16.msra.mxu0 %v2122
          %2167 = vmatpush.bf16.msra.mxu0 %v2121
          %2168 = vmatpush.bf16.msra.mxu0 %v2120
          %2169 = vmatpush.bf16.msra.mxu0 %v2119
          %2170 = vmatmul.bf16.gmra.mxu0 %v1230
          %v2171 = vpop.f32.mrf.mxu0
          %v2172 = vadd.f32 %v2153, %v2171
          %v2173 = vpop.f32.mrf.mxu0
          %v2174 = vadd.f32 %v2155, %v2173
          %2175 = vmatmul.bf16.gmra.mxu0 %v1232
          %v2176 = vpop.f32.mrf.mxu0
          %v2177 = vadd.f32 %v2158, %v2176
          %v2178 = vpop.f32.mrf.mxu0
          %v2179 = vadd.f32 %v2160, %v2178
          %2180 = vdwg.mxu0
          %v2181 = vpack.c.bf16 %v2172, %v2172
          %v2182 = vpack.c.bf16 %v2174, %v2174
          %v2183 = vpack.c.bf16 %v2177, %v2177
          %v2184 = vpack.c.bf16 %v2179, %v2179
          %s2185 = scalar_lea.vmem [#allocation2], 16
          %2186 = vst [vmem:[%s2185] sm:$0xf] %v2181
          %2187 = vst [vmem:[%s2185 + $0x4] sm:$0xf] %v2182
          %2188 = vst [vmem:[%s2185 + $0x8] sm:$0xf] %v2183
          %2189 = vst [vmem:[%s2185 + $0xc] sm:$0xf] %v2184
          %s2190 = scalar_lea.vmem [#allocation15], 128
          %v2191 = vld [vmem:[%s2190] sm:$0xf]
          %v2192 = vld [vmem:[%s2190 + $0x4] sm:$0xf]
          %v2193 = vld [vmem:[%s2190 + $0x8] sm:$0xf]
          %v2194 = vld [vmem:[%s2190 + $0xc] sm:$0xf]
          %v2195 = vld [vmem:[%s2190 + $0x10] sm:$0xf]
          %v2196 = vld [vmem:[%s2190 + $0x14] sm:$0xf]
          %v2197 = vld [vmem:[%s2190 + $0x18] sm:$0xf]
          %v2198 = vld [vmem:[%s2190 + $0x1c] sm:$0xf]
          %v2199 = vld [vmem:[%s2190 + $0x20] sm:$0xf]
          %v2200 = vld [vmem:[%s2190 + $0x24] sm:$0xf]
          %v2201 = vld [vmem:[%s2190 + $0x28] sm:$0xf]
          %v2202 = vld [vmem:[%s2190 + $0x2c] sm:$0xf]
          %v2203 = vld [vmem:[%s2190 + $0x30] sm:$0xf]
          %v2204 = vld [vmem:[%s2190 + $0x34] sm:$0xf]
          %v2205 = vld [vmem:[%s2190 + $0x38] sm:$0xf]
          %v2206 = vld [vmem:[%s2190 + $0x3c] sm:$0xf]
          %v2207 = vld [vmem:[%s2190 + $0x40] sm:$0xf]
          %v2208 = vld [vmem:[%s2190 + $0x44] sm:$0xf]
          %v2209 = vld [vmem:[%s2190 + $0x48] sm:$0xf]
          %v2210 = vld [vmem:[%s2190 + $0x4c] sm:$0xf]
          %v2211 = vld [vmem:[%s2190 + $0x50] sm:$0xf]
          %v2212 = vld [vmem:[%s2190 + $0x54] sm:$0xf]
          %v2213 = vld [vmem:[%s2190 + $0x58] sm:$0xf]
          %v2214 = vld [vmem:[%s2190 + $0x5c] sm:$0xf]
          %v2215 = vld [vmem:[%s2190 + $0x60] sm:$0xf]
          %v2216 = vld [vmem:[%s2190 + $0x64] sm:$0xf]
          %v2217 = vld [vmem:[%s2190 + $0x68] sm:$0xf]
          %v2218 = vld [vmem:[%s2190 + $0x6c] sm:$0xf]
          %v2219 = vld [vmem:[%s2190 + $0x70] sm:$0xf]
          %v2220 = vld [vmem:[%s2190 + $0x74] sm:$0xf]
          %v2221 = vld [vmem:[%s2190 + $0x78] sm:$0xf]
          %v2222 = vld [vmem:[%s2190 + $0x7c] sm:$0xf]
          %s2223 = scalar_lea.vmem [#allocation17], 1
          %v2224 = vld [vmem:[%s2223] sm:$0x1]
          %v2226 = vperm.slane %v2224, 0
          %v2260 = vunpack.c.l.b16 %v2191
          %v2261 = vunpack.c.l.b16 %v2192
          %v2262 = vunpack.c.l.b16 %v2193
          %v2263 = vunpack.c.l.b16 %v2194
          %v2264 = vunpack.c.l.b16 %v2195
          %v2265 = vunpack.c.l.b16 %v2196
          %v2266 = vunpack.c.l.b16 %v2197
          %v2267 = vunpack.c.l.b16 %v2198
          %v2268 = vunpack.c.l.b16 %v2199
          %v2269 = vunpack.c.l.b16 %v2200
          %v2270 = vunpack.c.l.b16 %v2201
          %v2271 = vunpack.c.l.b16 %v2202
          %v2272 = vunpack.c.l.b16 %v2203
          %v2273 = vunpack.c.l.b16 %v2204
          %v2274 = vunpack.c.l.b16 %v2205
          %v2275 = vunpack.c.l.b16 %v2206
          %v2276 = vunpack.c.l.b16 %v2207
          %v2277 = vunpack.c.l.b16 %v2208
          %v2278 = vunpack.c.l.b16 %v2209
          %v2279 = vunpack.c.l.b16 %v2210
          %v2280 = vunpack.c.l.b16 %v2211
          %v2281 = vunpack.c.l.b16 %v2212
          %v2282 = vunpack.c.l.b16 %v2213
          %v2283 = vunpack.c.l.b16 %v2214
          %v2284 = vunpack.c.l.b16 %v2215
          %v2285 = vunpack.c.l.b16 %v2216
          %v2286 = vunpack.c.l.b16 %v2217
          %v2287 = vunpack.c.l.b16 %v2218
          %v2288 = vunpack.c.l.b16 %v2219
          %v2289 = vunpack.c.l.b16 %v2220
          %v2290 = vunpack.c.l.b16 %v2221
          %v2291 = vunpack.c.l.b16 %v2222
          %v2292 = vpack.c.b16 %v2261, %v2260
          %v2293 = vpack.c.b16 %v2263, %v2262
          %v2294 = vpack.c.b16 %v2265, %v2264
          %v2295 = vpack.c.b16 %v2267, %v2266
          %v2296 = vpack.c.b16 %v2269, %v2268
          %v2297 = vpack.c.b16 %v2271, %v2270
          %v2298 = vpack.c.b16 %v2273, %v2272
          %v2299 = vpack.c.b16 %v2275, %v2274
          %v2300 = vpack.c.b16 %v2277, %v2276
          %v2301 = vpack.c.b16 %v2279, %v2278
          %v2302 = vpack.c.b16 %v2281, %v2280
          %v2303 = vpack.c.b16 %v2283, %v2282
          %v2304 = vpack.c.b16 %v2285, %v2284
          %v2305 = vpack.c.b16 %v2287, %v2286
          %v2306 = vpack.c.b16 %v2289, %v2288
          %v2307 = vpack.c.b16 %v2291, %v2290
          %2324 = vmatpush.bf16.msra.mxu0 %v2299
          %2325 = vmatpush.bf16.msra.mxu0 %v2298
          %2326 = vmatpush.bf16.msra.mxu0 %v2297
          %2327 = vmatpush.bf16.msra.mxu0 %v2296
          %2328 = vmatpush.bf16.msra.mxu0 %v2295
          %2329 = vmatpush.bf16.msra.mxu0 %v2294
          %2330 = vmatpush.bf16.msra.mxu0 %v2293
          %2331 = vmatpush.bf16.msra.mxu0 %v2292
          %2332 = vmatmul.bf16.gmra.mxu0 %v1229
          %v2333 = vpop.f32.mrf.mxu0
          %v2334 = vadd.f32 %v2226, %v2333
          %v2335 = vpop.f32.mrf.mxu0
          %v2336 = vadd.f32 %v2226, %v2335
          %2337 = vmatmul.bf16.gmra.mxu0 %v1231
          %v2338 = vpop.f32.mrf.mxu0
          %v2339 = vadd.f32 %v2226, %v2338
          %v2340 = vpop.f32.mrf.mxu0
          %v2341 = vadd.f32 %v2226, %v2340
          %2342 = vdwg.mxu0
          %2343 = vmatpush.bf16.msra.mxu0 %v2307
          %2344 = vmatpush.bf16.msra.mxu0 %v2306
          %2345 = vmatpush.bf16.msra.mxu0 %v2305
          %2346 = vmatpush.bf16.msra.mxu0 %v2304
          %2347 = vmatpush.bf16.msra.mxu0 %v2303
          %2348 = vmatpush.bf16.msra.mxu0 %v2302
          %2349 = vmatpush.bf16.msra.mxu0 %v2301
          %2350 = vmatpush.bf16.msra.mxu0 %v2300
          %2351 = vmatmul.bf16.gmra.mxu0 %v1230
          %v2352 = vpop.f32.mrf.mxu0
          %v2353 = vadd.f32 %v2334, %v2352
          %v2354 = vpop.f32.mrf.mxu0
          %v2355 = vadd.f32 %v2336, %v2354
          %2356 = vmatmul.bf16.gmra.mxu0 %v1232
          %v2357 = vpop.f32.mrf.mxu0
          %v2358 = vadd.f32 %v2339, %v2357
          %v2359 = vpop.f32.mrf.mxu0
          %v2360 = vadd.f32 %v2341, %v2359
          %2361 = vdwg.mxu0
          %v2362 = vpack.c.bf16 %v2353, %v2353
          %v2363 = vpack.c.bf16 %v2355, %v2355
          %v2364 = vpack.c.bf16 %v2358, %v2358
          %v2365 = vpack.c.bf16 %v2360, %v2360
          %s2366 = scalar_lea.vmem [#allocation3], 16
          %2367 = vst [vmem:[%s2366] sm:$0xf] %v2362
          %2368 = vst [vmem:[%s2366 + $0x4] sm:$0xf] %v2363
          %2369 = vst [vmem:[%s2366 + $0x8] sm:$0xf] %v2364
          %2370 = vst [vmem:[%s2366 + $0xc] sm:$0xf] %v2365
          %s2371 = scalar_lea.vmem [#allocation21], 128
          %v2372 = vld [vmem:[%s2371] sm:$0xf]
          %v2373 = vld [vmem:[%s2371 + $0x4] sm:$0xf]
          %v2374 = vld [vmem:[%s2371 + $0x8] sm:$0xf]
          %v2375 = vld [vmem:[%s2371 + $0xc] sm:$0xf]
          %v2376 = vld [vmem:[%s2371 + $0x10] sm:$0xf]
          %v2377 = vld [vmem:[%s2371 + $0x14] sm:$0xf]
          %v2378 = vld [vmem:[%s2371 + $0x18] sm:$0xf]
          %v2379 = vld [vmem:[%s2371 + $0x1c] sm:$0xf]
          %v2380 = vld [vmem:[%s2371 + $0x20] sm:$0xf]
          %v2381 = vld [vmem:[%s2371 + $0x24] sm:$0xf]
          %v2382 = vld [vmem:[%s2371 + $0x28] sm:$0xf]
          %v2383 = vld [vmem:[%s2371 + $0x2c] sm:$0xf]
          %v2384 = vld [vmem:[%s2371 + $0x30] sm:$0xf]
          %v2385 = vld [vmem:[%s2371 + $0x34] sm:$0xf]
          %v2386 = vld [vmem:[%s2371 + $0x38] sm:$0xf]
          %v2387 = vld [vmem:[%s2371 + $0x3c] sm:$0xf]
          %v2388 = vld [vmem:[%s2371 + $0x40] sm:$0xf]
          %v2389 = vld [vmem:[%s2371 + $0x44] sm:$0xf]
          %v2390 = vld [vmem:[%s2371 + $0x48] sm:$0xf]
          %v2391 = vld [vmem:[%s2371 + $0x4c] sm:$0xf]
          %v2392 = vld [vmem:[%s2371 + $0x50] sm:$0xf]
          %v2393 = vld [vmem:[%s2371 + $0x54] sm:$0xf]
          %v2394 = vld [vmem:[%s2371 + $0x58] sm:$0xf]
          %v2395 = vld [vmem:[%s2371 + $0x5c] sm:$0xf]
          %v2396 = vld [vmem:[%s2371 + $0x60] sm:$0xf]
          %v2397 = vld [vmem:[%s2371 + $0x64] sm:$0xf]
          %v2398 = vld [vmem:[%s2371 + $0x68] sm:$0xf]
          %v2399 = vld [vmem:[%s2371 + $0x6c] sm:$0xf]
          %v2400 = vld [vmem:[%s2371 + $0x70] sm:$0xf]
          %v2401 = vld [vmem:[%s2371 + $0x74] sm:$0xf]
          %v2402 = vld [vmem:[%s2371 + $0x78] sm:$0xf]
          %v2403 = vld [vmem:[%s2371 + $0x7c] sm:$0xf]
          %s2404 = scalar_lea.vmem %s13, 1
          %v2405 = vld [vmem:[%s2404] sm:$0x1]
          %v2407 = vperm.slane %v2405, 0
          %v2441 = vunpack.c.l.b16 %v2372
          %v2442 = vunpack.c.l.b16 %v2373
          %v2443 = vunpack.c.l.b16 %v2374
          %v2444 = vunpack.c.l.b16 %v2375
          %v2445 = vunpack.c.l.b16 %v2376
          %v2446 = vunpack.c.l.b16 %v2377
          %v2447 = vunpack.c.l.b16 %v2378
          %v2448 = vunpack.c.l.b16 %v2379
          %v2449 = vunpack.c.l.b16 %v2380
          %v2450 = vunpack.c.l.b16 %v2381
          %v2451 = vunpack.c.l.b16 %v2382
          %v2452 = vunpack.c.l.b16 %v2383
          %v2453 = vunpack.c.l.b16 %v2384
          %v2454 = vunpack.c.l.b16 %v2385
          %v2455 = vunpack.c.l.b16 %v2386
          %v2456 = vunpack.c.l.b16 %v2387
          %v2457 = vunpack.c.l.b16 %v2388
          %v2458 = vunpack.c.l.b16 %v2389
          %v2459 = vunpack.c.l.b16 %v2390
          %v2460 = vunpack.c.l.b16 %v2391
          %v2461 = vunpack.c.l.b16 %v2392
          %v2462 = vunpack.c.l.b16 %v2393
          %v2463 = vunpack.c.l.b16 %v2394
          %v2464 = vunpack.c.l.b16 %v2395
          %v2465 = vunpack.c.l.b16 %v2396
          %v2466 = vunpack.c.l.b16 %v2397
          %v2467 = vunpack.c.l.b16 %v2398
          %v2468 = vunpack.c.l.b16 %v2399
          %v2469 = vunpack.c.l.b16 %v2400
          %v2470 = vunpack.c.l.b16 %v2401
          %v2471 = vunpack.c.l.b16 %v2402
          %v2472 = vunpack.c.l.b16 %v2403
          %v2473 = vpack.c.b16 %v2442, %v2441
          %v2474 = vpack.c.b16 %v2444, %v2443
          %v2475 = vpack.c.b16 %v2446, %v2445
          %v2476 = vpack.c.b16 %v2448, %v2447
          %v2477 = vpack.c.b16 %v2450, %v2449
          %v2478 = vpack.c.b16 %v2452, %v2451
          %v2479 = vpack.c.b16 %v2454, %v2453
          %v2480 = vpack.c.b16 %v2456, %v2455
          %v2481 = vpack.c.b16 %v2458, %v2457
          %v2482 = vpack.c.b16 %v2460, %v2459
          %v2483 = vpack.c.b16 %v2462, %v2461
          %v2484 = vpack.c.b16 %v2464, %v2463
          %v2485 = vpack.c.b16 %v2466, %v2465
          %v2486 = vpack.c.b16 %v2468, %v2467
          %v2487 = vpack.c.b16 %v2470, %v2469
          %v2488 = vpack.c.b16 %v2472, %v2471
          %2505 = vmatpush.bf16.msra.mxu0 %v2480
          %2506 = vmatpush.bf16.msra.mxu0 %v2479
          %2507 = vmatpush.bf16.msra.mxu0 %v2478
          %2508 = vmatpush.bf16.msra.mxu0 %v2477
          %2509 = vmatpush.bf16.msra.mxu0 %v2476
          %2510 = vmatpush.bf16.msra.mxu0 %v2475
          %2511 = vmatpush.bf16.msra.mxu0 %v2474
          %2512 = vmatpush.bf16.msra.mxu0 %v2473
          %2513 = vmatmul.bf16.gmra.mxu0 %v1617
          %v2514 = vpop.f32.mrf.mxu0
          %v2515 = vadd.f32 %v2407, %v2514
          %v2516 = vpop.f32.mrf.mxu0
          %v2517 = vadd.f32 %v2407, %v2516
          %2518 = vmatmul.bf16.gmra.mxu0 %v1619
          %v2519 = vpop.f32.mrf.mxu0
          %v2520 = vadd.f32 %v2407, %v2519
          %v2521 = vpop.f32.mrf.mxu0
          %v2522 = vadd.f32 %v2407, %v2521
          %2523 = vmatmul.bf16.gmra.mxu0 %v1621
          %v2524 = vpop.f32.mrf.mxu0
          %v2525 = vadd.f32 %v2407, %v2524
          %v2526 = vpop.f32.mrf.mxu0
          %v2527 = vadd.f32 %v2407, %v2526
          %2528 = vmatmul.bf16.gmra.mxu0 %v1623
          %v2529 = vpop.f32.mrf.mxu0
          %v2530 = vadd.f32 %v2407, %v2529
          %v2531 = vpop.f32.mrf.mxu0
          %v2532 = vadd.f32 %v2407, %v2531
          %2533 = vdwg.mxu0
          %2534 = vmatpush.bf16.msra.mxu0 %v2488
          %2535 = vmatpush.bf16.msra.mxu0 %v2487
          %2536 = vmatpush.bf16.msra.mxu0 %v2486
          %2537 = vmatpush.bf16.msra.mxu0 %v2485
          %2538 = vmatpush.bf16.msra.mxu0 %v2484
          %2539 = vmatpush.bf16.msra.mxu0 %v2483
          %2540 = vmatpush.bf16.msra.mxu0 %v2482
          %2541 = vmatpush.bf16.msra.mxu0 %v2481
          %2542 = vmatmul.bf16.gmra.mxu0 %v1618
          %v2543 = vpop.f32.mrf.mxu0
          %v2544 = vadd.f32 %v2515, %v2543
          %v2545 = vpop.f32.mrf.mxu0
          %v2546 = vadd.f32 %v2517, %v2545
          %2547 = vmatmul.bf16.gmra.mxu0 %v1620
          %v2548 = vpop.f32.mrf.mxu0
          %v2549 = vadd.f32 %v2520, %v2548
          %v2550 = vpop.f32.mrf.mxu0
          %v2551 = vadd.f32 %v2522, %v2550
          %2552 = vmatmul.bf16.gmra.mxu0 %v1622
          %v2553 = vpop.f32.mrf.mxu0
          %v2554 = vadd.f32 %v2525, %v2553
          %v2555 = vpop.f32.mrf.mxu0
          %v2556 = vadd.f32 %v2527, %v2555
          %2557 = vmatmul.bf16.gmra.mxu0 %v1624
          %v2558 = vpop.f32.mrf.mxu0
          %v2559 = vadd.f32 %v2530, %v2558
          %v2560 = vpop.f32.mrf.mxu0
          %v2561 = vadd.f32 %v2532, %v2560
          %2562 = vdwg.mxu0
          %v2563 = vpack.c.bf16 %v2544, %v2544
          %v2564 = vpack.c.bf16 %v2546, %v2546
          %v2565 = vpack.c.bf16 %v2549, %v2549
          %v2566 = vpack.c.bf16 %v2551, %v2551
          %v2567 = vpack.c.bf16 %v2554, %v2554
          %v2568 = vpack.c.bf16 %v2556, %v2556
          %v2569 = vpack.c.bf16 %v2559, %v2559
          %v2570 = vpack.c.bf16 %v2561, %v2561
          %s2571 = scalar_lea.vmem [#allocation4], 32
          %2572 = vst [vmem:[%s2571] sm:$0xf] %v2563
          %2573 = vst [vmem:[%s2571 + $0x4] sm:$0xf] %v2564
          %2574 = vst [vmem:[%s2571 + $0x8] sm:$0xf] %v2565
          %2575 = vst [vmem:[%s2571 + $0xc] sm:$0xf] %v2566
          %2576 = vst [vmem:[%s2571 + $0x10] sm:$0xf] %v2567
          %2577 = vst [vmem:[%s2571 + $0x14] sm:$0xf] %v2568
          %2578 = vst [vmem:[%s2571 + $0x18] sm:$0xf] %v2569
          %2579 = vst [vmem:[%s2571 + $0x1c] sm:$0xf] %v2570
          %s2580 = scalar_lea.vmem [#allocation23], 128
          %v2581 = vld [vmem:[%s2580] sm:$0xf]
          %v2582 = vld [vmem:[%s2580 + $0x4] sm:$0xf]
          %v2583 = vld [vmem:[%s2580 + $0x8] sm:$0xf]
          %v2584 = vld [vmem:[%s2580 + $0xc] sm:$0xf]
          %v2585 = vld [vmem:[%s2580 + $0x10] sm:$0xf]
          %v2586 = vld [vmem:[%s2580 + $0x14] sm:$0xf]
          %v2587 = vld [vmem:[%s2580 + $0x18] sm:$0xf]
          %v2588 = vld [vmem:[%s2580 + $0x1c] sm:$0xf]
          %v2589 = vld [vmem:[%s2580 + $0x20] sm:$0xf]
          %v2590 = vld [vmem:[%s2580 + $0x24] sm:$0xf]
          %v2591 = vld [vmem:[%s2580 + $0x28] sm:$0xf]
          %v2592 = vld [vmem:[%s2580 + $0x2c] sm:$0xf]
          %v2593 = vld [vmem:[%s2580 + $0x30] sm:$0xf]
          %v2594 = vld [vmem:[%s2580 + $0x34] sm:$0xf]
          %v2595 = vld [vmem:[%s2580 + $0x38] sm:$0xf]
          %v2596 = vld [vmem:[%s2580 + $0x3c] sm:$0xf]
          %v2597 = vld [vmem:[%s2580 + $0x40] sm:$0xf]
          %v2598 = vld [vmem:[%s2580 + $0x44] sm:$0xf]
          %v2599 = vld [vmem:[%s2580 + $0x48] sm:$0xf]
          %v2600 = vld [vmem:[%s2580 + $0x4c] sm:$0xf]
          %v2601 = vld [vmem:[%s2580 + $0x50] sm:$0xf]
          %v2602 = vld [vmem:[%s2580 + $0x54] sm:$0xf]
          %v2603 = vld [vmem:[%s2580 + $0x58] sm:$0xf]
          %v2604 = vld [vmem:[%s2580 + $0x5c] sm:$0xf]
          %v2605 = vld [vmem:[%s2580 + $0x60] sm:$0xf]
          %v2606 = vld [vmem:[%s2580 + $0x64] sm:$0xf]
          %v2607 = vld [vmem:[%s2580 + $0x68] sm:$0xf]
          %v2608 = vld [vmem:[%s2580 + $0x6c] sm:$0xf]
          %v2609 = vld [vmem:[%s2580 + $0x70] sm:$0xf]
          %v2610 = vld [vmem:[%s2580 + $0x74] sm:$0xf]
          %v2611 = vld [vmem:[%s2580 + $0x78] sm:$0xf]
          %v2612 = vld [vmem:[%s2580 + $0x7c] sm:$0xf]
          %s2613 = scalar_lea.vmem %s15, 1
          %v2614 = vld [vmem:[%s2613] sm:$0x1]
          %v2616 = vperm.slane %v2614, 0
          %v2650 = vunpack.c.l.b16 %v2581
          %v2651 = vunpack.c.l.b16 %v2582
          %v2652 = vunpack.c.l.b16 %v2583
          %v2653 = vunpack.c.l.b16 %v2584
          %v2654 = vunpack.c.l.b16 %v2585
          %v2655 = vunpack.c.l.b16 %v2586
          %v2656 = vunpack.c.l.b16 %v2587
          %v2657 = vunpack.c.l.b16 %v2588
          %v2658 = vunpack.c.l.b16 %v2589
          %v2659 = vunpack.c.l.b16 %v2590
          %v2660 = vunpack.c.l.b16 %v2591
          %v2661 = vunpack.c.l.b16 %v2592
          %v2662 = vunpack.c.l.b16 %v2593
          %v2663 = vunpack.c.l.b16 %v2594
          %v2664 = vunpack.c.l.b16 %v2595
          %v2665 = vunpack.c.l.b16 %v2596
          %v2666 = vunpack.c.l.b16 %v2597
          %v2667 = vunpack.c.l.b16 %v2598
          %v2668 = vunpack.c.l.b16 %v2599
          %v2669 = vunpack.c.l.b16 %v2600
          %v2670 = vunpack.c.l.b16 %v2601
          %v2671 = vunpack.c.l.b16 %v2602
          %v2672 = vunpack.c.l.b16 %v2603
          %v2673 = vunpack.c.l.b16 %v2604
          %v2674 = vunpack.c.l.b16 %v2605
          %v2675 = vunpack.c.l.b16 %v2606
          %v2676 = vunpack.c.l.b16 %v2607
          %v2677 = vunpack.c.l.b16 %v2608
          %v2678 = vunpack.c.l.b16 %v2609
          %v2679 = vunpack.c.l.b16 %v2610
          %v2680 = vunpack.c.l.b16 %v2611
          %v2681 = vunpack.c.l.b16 %v2612
          %v2682 = vpack.c.b16 %v2651, %v2650
          %v2683 = vpack.c.b16 %v2653, %v2652
          %v2684 = vpack.c.b16 %v2655, %v2654
          %v2685 = vpack.c.b16 %v2657, %v2656
          %v2686 = vpack.c.b16 %v2659, %v2658
          %v2687 = vpack.c.b16 %v2661, %v2660
          %v2688 = vpack.c.b16 %v2663, %v2662
          %v2689 = vpack.c.b16 %v2665, %v2664
          %v2690 = vpack.c.b16 %v2667, %v2666
          %v2691 = vpack.c.b16 %v2669, %v2668
          %v2692 = vpack.c.b16 %v2671, %v2670
          %v2693 = vpack.c.b16 %v2673, %v2672
          %v2694 = vpack.c.b16 %v2675, %v2674
          %v2695 = vpack.c.b16 %v2677, %v2676
          %v2696 = vpack.c.b16 %v2679, %v2678
          %v2697 = vpack.c.b16 %v2681, %v2680
          %2714 = vmatpush.bf16.msra.mxu0 %v2689
          %2715 = vmatpush.bf16.msra.mxu0 %v2688
          %2716 = vmatpush.bf16.msra.mxu0 %v2687
          %2717 = vmatpush.bf16.msra.mxu0 %v2686
          %2718 = vmatpush.bf16.msra.mxu0 %v2685
          %2719 = vmatpush.bf16.msra.mxu0 %v2684
          %2720 = vmatpush.bf16.msra.mxu0 %v2683
          %2721 = vmatpush.bf16.msra.mxu0 %v2682
          %2722 = vmatmul.bf16.gmra.mxu0 %v1617
          %v2723 = vpop.f32.mrf.mxu0
          %v2724 = vadd.f32 %v2616, %v2723
          %v2725 = vpop.f32.mrf.mxu0
          %v2726 = vadd.f32 %v2616, %v2725
          %2727 = vmatmul.bf16.gmra.mxu0 %v1619
          %v2728 = vpop.f32.mrf.mxu0
          %v2729 = vadd.f32 %v2616, %v2728
          %v2730 = vpop.f32.mrf.mxu0
          %v2731 = vadd.f32 %v2616, %v2730
          %2732 = vmatmul.bf16.gmra.mxu0 %v1621
          %v2733 = vpop.f32.mrf.mxu0
          %v2734 = vadd.f32 %v2616, %v2733
          %v2735 = vpop.f32.mrf.mxu0
          %v2736 = vadd.f32 %v2616, %v2735
          %2737 = vmatmul.bf16.gmra.mxu0 %v1623
          %v2738 = vpop.f32.mrf.mxu0
          %v2739 = vadd.f32 %v2616, %v2738
          %v2740 = vpop.f32.mrf.mxu0
          %v2741 = vadd.f32 %v2616, %v2740
          %2742 = vdwg.mxu0
          %2743 = vmatpush.bf16.msra.mxu0 %v2697
          %2744 = vmatpush.bf16.msra.mxu0 %v2696
          %2745 = vmatpush.bf16.msra.mxu0 %v2695
          %2746 = vmatpush.bf16.msra.mxu0 %v2694
          %2747 = vmatpush.bf16.msra.mxu0 %v2693
          %2748 = vmatpush.bf16.msra.mxu0 %v2692
          %2749 = vmatpush.bf16.msra.mxu0 %v2691
          %2750 = vmatpush.bf16.msra.mxu0 %v2690
          %2751 = vmatmul.bf16.gmra.mxu0 %v1618
          %v2752 = vpop.f32.mrf.mxu0
          %v2753 = vadd.f32 %v2724, %v2752
          %v2754 = vpop.f32.mrf.mxu0
          %v2755 = vadd.f32 %v2726, %v2754
          %2756 = vmatmul.bf16.gmra.mxu0 %v1620
          %v2757 = vpop.f32.mrf.mxu0
          %v2758 = vadd.f32 %v2729, %v2757
          %v2759 = vpop.f32.mrf.mxu0
          %v2760 = vadd.f32 %v2731, %v2759
          %2761 = vmatmul.bf16.gmra.mxu0 %v1622
          %v2762 = vpop.f32.mrf.mxu0
          %v2763 = vadd.f32 %v2734, %v2762
          %v2764 = vpop.f32.mrf.mxu0
          %v2765 = vadd.f32 %v2736, %v2764
          %2766 = vmatmul.bf16.gmra.mxu0 %v1624
          %v2767 = vpop.f32.mrf.mxu0
          %v2768 = vadd.f32 %v2739, %v2767
          %v2769 = vpop.f32.mrf.mxu0
          %v2770 = vadd.f32 %v2741, %v2769
          %2771 = vdwg.mxu0
          %v2772 = vpack.c.bf16 %v2753, %v2753
          %v2773 = vpack.c.bf16 %v2755, %v2755
          %v2774 = vpack.c.bf16 %v2758, %v2758
          %v2775 = vpack.c.bf16 %v2760, %v2760
          %v2776 = vpack.c.bf16 %v2763, %v2763
          %v2777 = vpack.c.bf16 %v2765, %v2765
          %v2778 = vpack.c.bf16 %v2768, %v2768
          %v2779 = vpack.c.bf16 %v2770, %v2770
          %s2780 = scalar_lea.vmem [#allocation5], 32
          %2781 = vst [vmem:[%s2780] sm:$0xf] %v2772
          %2782 = vst [vmem:[%s2780 + $0x4] sm:$0xf] %v2773
          %2783 = vst [vmem:[%s2780 + $0x8] sm:$0xf] %v2774
          %2784 = vst [vmem:[%s2780 + $0xc] sm:$0xf] %v2775
          %2785 = vst [vmem:[%s2780 + $0x10] sm:$0xf] %v2776
          %2786 = vst [vmem:[%s2780 + $0x14] sm:$0xf] %v2777
          %2787 = vst [vmem:[%s2780 + $0x18] sm:$0xf] %v2778
          %2788 = vst [vmem:[%s2780 + $0x1c] sm:$0xf] %v2779
        $region204: #{tpu_custom_call.1} parent=131 // pred_fallthru
          _
        %s2789 = smul.u32 %s60, 16
        %s2790 = sshra.s32 %s2789, 3
        %s2791 = sand.u32 %s2789, 7
        %s2792 = smul.u32 %s2790, 2
        %s2793 = smul.addr %s2792, 4
        %s2794 = scalar_lea.vmem %s999, %s2793 [#allocation6]
        %v2795 = vld [vmem:[%s2794] sm:$0xff]
        %v2796 = vld [vmem:[%s2794 + $0x8] sm:$0xff]
        %v2797 = vunpack.c.l.bf16 %v2795
        %v2798 = vunpack.c.h.bf16 %v2795
        %v2799 = vunpack.c.l.bf16 %v2796
        %v2800 = vunpack.c.h.bf16 %v2796
        %v2801 = vld [vmem:[#allocation11] sm:$0xf]
        %v2802 = vld [vmem:[#allocation11 + $0x4] sm:$0xf]
        %v2803 = vld [vmem:[#allocation11 + $0x8] sm:$0xf]
        %v2804 = vld [vmem:[#allocation11 + $0xc] sm:$0xf]
        %v2805 = vld [vmem:[#allocation11 + $0x10] sm:$0xf]
        %v2806 = vld [vmem:[#allocation11 + $0x14] sm:$0xf]
        %v2807 = vld [vmem:[#allocation11 + $0x18] sm:$0xf]
        %v2808 = vld [vmem:[#allocation11 + $0x1c] sm:$0xf]
        %v2809 = vld [vmem:[#allocation11 + $0x20] sm:$0xf]
        %v2810 = vld [vmem:[#allocation11 + $0x24] sm:$0xf]
        %v2811 = vld [vmem:[#allocation11 + $0x28] sm:$0xf]
        %v2812 = vld [vmem:[#allocation11 + $0x2c] sm:$0xf]
        %v2813 = vld [vmem:[#allocation11 + $0x30] sm:$0xf]
        %v2814 = vld [vmem:[#allocation11 + $0x34] sm:$0xf]
        %v2815 = vld [vmem:[#allocation11 + $0x38] sm:$0xf]
        %v2816 = vld [vmem:[#allocation11 + $0x3c] sm:$0xf]
        %v2817 = vld [vmem:[#allocation11 + $0x40] sm:$0xf]
        %v2818 = vld [vmem:[#allocation11 + $0x44] sm:$0xf]
        %v2819 = vld [vmem:[#allocation11 + $0x48] sm:$0xf]
        %v2820 = vld [vmem:[#allocation11 + $0x4c] sm:$0xf]
        %v2821 = vld [vmem:[#allocation11 + $0x50] sm:$0xf]
        %v2822 = vld [vmem:[#allocation11 + $0x54] sm:$0xf]
        %v2823 = vld [vmem:[#allocation11 + $0x58] sm:$0xf]
        %v2824 = vld [vmem:[#allocation11 + $0x5c] sm:$0xf]
        %v2825 = vld [vmem:[#allocation11 + $0x60] sm:$0xf]
        %v2826 = vld [vmem:[#allocation11 + $0x64] sm:$0xf]
        %v2827 = vld [vmem:[#allocation11 + $0x68] sm:$0xf]
        %v2828 = vld [vmem:[#allocation11 + $0x6c] sm:$0xf]
        %v2829 = vld [vmem:[#allocation11 + $0x70] sm:$0xf]
        %v2830 = vld [vmem:[#allocation11 + $0x74] sm:$0xf]
        %v2831 = vld [vmem:[#allocation11 + $0x78] sm:$0xf]
        %v2832 = vld [vmem:[#allocation11 + $0x7c] sm:$0xf]
        %v2833 = vld [vmem:[%s3] sm:$0x1]
        %v2835 = vperm.slane %v2833, 0
        %v2839 = vunpack.c.l.b16 %v2795
        %v2840 = vunpack.c.h.b16 %v2795
        %v2841 = vunpack.c.l.b16 %v2796
        %v2842 = vunpack.c.h.b16 %v2796
        %v2843 = vpack.c.b16 %v2841, %v2839
        %v2844 = vpack.c.b16 %v2842, %v2840
        %v2879 = vunpack.c.l.b16 %v2801
        %v2880 = vunpack.c.l.b16 %v2802
        %v2881 = vunpack.c.l.b16 %v2803
        %v2882 = vunpack.c.l.b16 %v2804
        %v2883 = vunpack.c.l.b16 %v2805
        %v2884 = vunpack.c.l.b16 %v2806
        %v2885 = vunpack.c.l.b16 %v2807
        %v2886 = vunpack.c.l.b16 %v2808
        %v2887 = vunpack.c.l.b16 %v2809
        %v2888 = vunpack.c.l.b16 %v2810
        %v2889 = vunpack.c.l.b16 %v2811
        %v2890 = vunpack.c.l.b16 %v2812
        %v2891 = vunpack.c.l.b16 %v2813
        %v2892 = vunpack.c.l.b16 %v2814
        %v2893 = vunpack.c.l.b16 %v2815
        %v2894 = vunpack.c.l.b16 %v2816
        %v2895 = vunpack.c.l.b16 %v2817
        %v2896 = vunpack.c.l.b16 %v2818
        %v2897 = vunpack.c.l.b16 %v2819
        %v2898 = vunpack.c.l.b16 %v2820
        %v2899 = vunpack.c.l.b16 %v2821
        %v2900 = vunpack.c.l.b16 %v2822
        %v2901 = vunpack.c.l.b16 %v2823
        %v2902 = vunpack.c.l.b16 %v2824
        %v2903 = vunpack.c.l.b16 %v2825
        %v2904 = vunpack.c.l.b16 %v2826
        %v2905 = vunpack.c.l.b16 %v2827
        %v2906 = vunpack.c.l.b16 %v2828
        %v2907 = vunpack.c.l.b16 %v2829
        %v2908 = vunpack.c.l.b16 %v2830
        %v2909 = vunpack.c.l.b16 %v2831
        %v2910 = vunpack.c.l.b16 %v2832
        %v2911 = vpack.c.b16 %v2880, %v2879
        %v2912 = vpack.c.b16 %v2882, %v2881
        %v2913 = vpack.c.b16 %v2884, %v2883
        %v2914 = vpack.c.b16 %v2886, %v2885
        %v2915 = vpack.c.b16 %v2888, %v2887
        %v2916 = vpack.c.b16 %v2890, %v2889
        %v2917 = vpack.c.b16 %v2892, %v2891
        %v2918 = vpack.c.b16 %v2894, %v2893
        %v2919 = vpack.c.b16 %v2896, %v2895
        %v2920 = vpack.c.b16 %v2898, %v2897
        %v2921 = vpack.c.b16 %v2900, %v2899
        %v2922 = vpack.c.b16 %v2902, %v2901
        %v2923 = vpack.c.b16 %v2904, %v2903
        %v2924 = vpack.c.b16 %v2906, %v2905
        %v2925 = vpack.c.b16 %v2908, %v2907
        %v2926 = vpack.c.b16 %v2910, %v2909
        %2943 = vmatpush.bf16.msra.mxu0 %v2918
        %2944 = vmatpush.bf16.msra.mxu0 %v2917
        %2945 = vmatpush.bf16.msra.mxu0 %v2916
        %2946 = vmatpush.bf16.msra.mxu0 %v2915
        %2947 = vmatpush.bf16.msra.mxu0 %v2914
        %2948 = vmatpush.bf16.msra.mxu0 %v2913
        %2949 = vmatpush.bf16.msra.mxu0 %v2912
        %2950 = vmatpush.bf16.msra.mxu0 %v2911
        %2951 = vmatmul.bf16.gmra.mxu0 %v2843
        %v2952 = vpop.f32.mrf.mxu0
        %v2953 = vadd.f32 %v2835, %v2952
        %v2954 = vpop.f32.mrf.mxu0
        %v2955 = vadd.f32 %v2835, %v2954
        %2956 = vdwg.mxu0
        %2957 = vmatpush.bf16.msra.mxu0 %v2926
        %2958 = vmatpush.bf16.msra.mxu0 %v2925
        %2959 = vmatpush.bf16.msra.mxu0 %v2924
        %2960 = vmatpush.bf16.msra.mxu0 %v2923
        %2961 = vmatpush.bf16.msra.mxu0 %v2922
        %2962 = vmatpush.bf16.msra.mxu0 %v2921
        %2963 = vmatpush.bf16.msra.mxu0 %v2920
        %2964 = vmatpush.bf16.msra.mxu0 %v2919
        %2965 = vmatmul.bf16.gmra.mxu0 %v2844
        %v2966 = vpop.f32.mrf.mxu0
        %v2967 = vadd.f32 %v2953, %v2966
        %v2968 = vpop.f32.mrf.mxu0
        %v2969 = vadd.f32 %v2955, %v2968
        %2970 = vdwg.mxu0
        %v2971 = vmul.f32 %v2967, 0.088388346
        %v2972 = vmul.f32 %v2969, 0.088388346
        %v2973 = vpack.c.bf16 %v2972, %v2971
        %v2974 = vld [vmem:[#allocation2] sm:$0xf]
        %v2975 = vld [vmem:[#allocation2 + $0x4] sm:$0xf]
        %v2976 = vld [vmem:[#allocation2 + $0x8] sm:$0xf]
        %v2977 = vld [vmem:[#allocation2 + $0xc] sm:$0xf]
        %v2982 = vunpack.c.l.b16 %v2974
        %v2983 = vunpack.c.l.b16 %v2975
        %v2984 = vunpack.c.l.b16 %v2976
        %v2985 = vunpack.c.l.b16 %v2977
        %v2986 = vpack.c.b16 %v2983, %v2982
        %v2987 = vpack.c.b16 %v2985, %v2984
        %2990 = vmatpush.bf16.xpose.msra.mxu0 0
        %2991 = vmatpush.bf16.xpose.msra.mxu0 0
        %2992 = vmatpush.bf16.xpose.msra.mxu0 0
        %2993 = vmatpush.bf16.xpose.msra.mxu0 0
        %2994 = vmatpush.bf16.xpose.msra.mxu0 0
        %2995 = vmatpush.bf16.xpose.msra.mxu0 0
        %2996 = vmatpush.bf16.xpose.msra.mxu0 %v2987
        %2997 = vmatpush.bf16.xpose.msra.mxu0 %v2986
        %2998 = vmatmul.bf16.gmra.mxu0 %v2973
        %v2999 = vpop.f32.mrf.mxu0
        %v3000 = vadd.f32 0.0, %v2999
        %v3001 = vpop.f32.mrf.mxu0
        %v3002 = vadd.f32 0.0, %v3001
        %3003 = vdwg.mxu0
        %vm3004 = vcmask 261120
        %v3005 = vsel %vm3004, %v3000, -inf
        %3006 = vmax.xlane.f32.xlu0 %v3005
        %v3007 = vpop.xlane.xlu0 %3006
        %v3008 = vsel %vm3004, %v3002, -inf
        %3009 = vmax.xlane.f32.xlu0 %v3008
        %v3010 = vpop.xlane.xlu0 %3009
        %v3011 = vsub.f32 %v3000, %v3007
        %v3012 = vsub.f32 %v3002, %v3010
        %v3013 = vmul.f32 %v3011, 1.442695
        %v3014 = vpow.pop %v3013
        %v3015 = vmul.f32 %v3012, 1.442695
        %v3016 = vpow.pop %v3015
        %v3017 = vsel %vm3004, %v3014, 0.0
        %3018 = vadd.xlane.f32.xlu0 %v3017
        %v3019 = vpop.xlane.xlu0 %3018
        %v3020 = vsel %vm3004, %v3016, 0.0
        %3021 = vadd.xlane.f32.xlu0 %v3020
        %v3022 = vpop.xlane.xlu0 %3021
        %v3023 = vrcp.pop %v3019
        %v3024 = vrcp.pop %v3022
        %v3025 = vmul.f32 %v3014, %v3023
        %v3026 = vmul.f32 %v3016, %v3024
        %v3027 = vpack.c.bf16 %v3026, %v3025
        %v3028 = vld [vmem:[#allocation3] sm:$0xf]
        %v3029 = vld [vmem:[#allocation3 + $0x4] sm:$0xf]
        %v3030 = vld [vmem:[#allocation3 + $0x8] sm:$0xf]
        %v3031 = vld [vmem:[#allocation3 + $0xc] sm:$0xf]
        %v3036 = vunpack.c.l.b16 %v3028
        %v3037 = vunpack.c.l.b16 %v3029
        %v3038 = vunpack.c.l.b16 %v3030
        %v3039 = vunpack.c.l.b16 %v3031
        %v3040 = vpack.c.b16 %v3037, %v3036
        %v3041 = vpack.c.b16 %v3039, %v3038
        %v3045 = vsel %vm3004, %v3027, 0
        %3047 = vmatpush.bf16.msra.mxu0 0
        %3048 = vmatpush.bf16.msra.mxu0 0
        %3049 = vmatpush.bf16.msra.mxu0 0
        %3050 = vmatpush.bf16.msra.mxu0 0
        %3051 = vmatpush.bf16.msra.mxu0 0
        %3052 = vmatpush.bf16.msra.mxu0 0
        %3053 = vmatpush.bf16.msra.mxu0 %v3041
        %3054 = vmatpush.bf16.msra.mxu0 %v3040
        %3055 = vmatmul.bf16.gmra.mxu0 %v3045
        %v3056 = vpop.f32.mrf.mxu0
        %v3057 = vadd.f32 0.0, %v3056
        %v3058 = vpop.f32.mrf.mxu0
        %v3059 = vadd.f32 0.0, %v3058
        %3060 = vdwg.mxu0
        %v3061 = vpack.c.bf16 %v3059, %v3057
        %v3062 = vld [vmem:[#allocation18] sm:$0xff]
        %v3063 = vld [vmem:[#allocation18 + $0x8] sm:$0xff]
        %v3064 = vld [vmem:[#allocation18 + $0x10] sm:$0xff]
        %v3065 = vld [vmem:[#allocation18 + $0x18] sm:$0xff]
        %v3066 = vld [vmem:[#allocation18 + $0x20] sm:$0xff]
        %v3067 = vld [vmem:[#allocation18 + $0x28] sm:$0xff]
        %v3068 = vld [vmem:[#allocation18 + $0x30] sm:$0xff]
        %v3069 = vld [vmem:[#allocation18 + $0x38] sm:$0xff]
        %v3070 = vld [vmem:[#allocation18 + $0x40] sm:$0xff]
        %v3071 = vld [vmem:[#allocation18 + $0x48] sm:$0xff]
        %v3072 = vld [vmem:[#allocation18 + $0x50] sm:$0xff]
        %v3073 = vld [vmem:[#allocation18 + $0x58] sm:$0xff]
        %v3074 = vld [vmem:[#allocation18 + $0x60] sm:$0xff]
        %v3075 = vld [vmem:[#allocation18 + $0x68] sm:$0xff]
        %v3076 = vld [vmem:[#allocation18 + $0x70] sm:$0xff]
        %v3077 = vld [vmem:[#allocation18 + $0x78] sm:$0xff]
        %s3078 = scalar_lea.vmem [#allocation11], 128
        %v3079 = vld [vmem:[%s3078] sm:$0xf]
        %v3080 = vld [vmem:[%s3078 + $0x4] sm:$0xf]
        %v3081 = vld [vmem:[%s3078 + $0x8] sm:$0xf]
        %v3082 = vld [vmem:[%s3078 + $0xc] sm:$0xf]
        %v3083 = vld [vmem:[%s3078 + $0x10] sm:$0xf]
        %v3084 = vld [vmem:[%s3078 + $0x14] sm:$0xf]
        %v3085 = vld [vmem:[%s3078 + $0x18] sm:$0xf]
        %v3086 = vld [vmem:[%s3078 + $0x1c] sm:$0xf]
        %v3087 = vld [vmem:[%s3078 + $0x20] sm:$0xf]
        %v3088 = vld [vmem:[%s3078 + $0x24] sm:$0xf]
        %v3089 = vld [vmem:[%s3078 + $0x28] sm:$0xf]
        %v3090 = vld [vmem:[%s3078 + $0x2c] sm:$0xf]
        %v3091 = vld [vmem:[%s3078 + $0x30] sm:$0xf]
        %v3092 = vld [vmem:[%s3078 + $0x34] sm:$0xf]
        %v3093 = vld [vmem:[%s3078 + $0x38] sm:$0xf]
        %v3094 = vld [vmem:[%s3078 + $0x3c] sm:$0xf]
        %v3095 = vld [vmem:[%s3078 + $0x40] sm:$0xf]
        %v3096 = vld [vmem:[%s3078 + $0x44] sm:$0xf]
        %v3097 = vld [vmem:[%s3078 + $0x48] sm:$0xf]
        %v3098 = vld [vmem:[%s3078 + $0x4c] sm:$0xf]
        %v3099 = vld [vmem:[%s3078 + $0x50] sm:$0xf]
        %v3100 = vld [vmem:[%s3078 + $0x54] sm:$0xf]
        %v3101 = vld [vmem:[%s3078 + $0x58] sm:$0xf]
        %v3102 = vld [vmem:[%s3078 + $0x5c] sm:$0xf]
        %v3103 = vld [vmem:[%s3078 + $0x60] sm:$0xf]
        %v3104 = vld [vmem:[%s3078 + $0x64] sm:$0xf]
        %v3105 = vld [vmem:[%s3078 + $0x68] sm:$0xf]
        %v3106 = vld [vmem:[%s3078 + $0x6c] sm:$0xf]
        %v3107 = vld [vmem:[%s3078 + $0x70] sm:$0xf]
        %v3108 = vld [vmem:[%s3078 + $0x74] sm:$0xf]
        %v3109 = vld [vmem:[%s3078 + $0x78] sm:$0xf]
        %v3110 = vld [vmem:[%s3078 + $0x7c] sm:$0xf]
        %s3111 = scalar_lea.vmem %s3, 1
        %v3112 = vld [vmem:[%s3111] sm:$0x1]
        %v3114 = vperm.slane %v3112, 0
        %v3148 = vunpack.c.l.b16 %v3079
        %v3149 = vunpack.c.l.b16 %v3080
        %v3150 = vunpack.c.l.b16 %v3081
        %v3151 = vunpack.c.l.b16 %v3082
        %v3152 = vunpack.c.l.b16 %v3083
        %v3153 = vunpack.c.l.b16 %v3084
        %v3154 = vunpack.c.l.b16 %v3085
        %v3155 = vunpack.c.l.b16 %v3086
        %v3156 = vunpack.c.l.b16 %v3087
        %v3157 = vunpack.c.l.b16 %v3088
        %v3158 = vunpack.c.l.b16 %v3089
        %v3159 = vunpack.c.l.b16 %v3090
        %v3160 = vunpack.c.l.b16 %v3091
        %v3161 = vunpack.c.l.b16 %v3092
        %v3162 = vunpack.c.l.b16 %v3093
        %v3163 = vunpack.c.l.b16 %v3094
        %v3164 = vunpack.c.l.b16 %v3095
        %v3165 = vunpack.c.l.b16 %v3096
        %v3166 = vunpack.c.l.b16 %v3097
        %v3167 = vunpack.c.l.b16 %v3098
        %v3168 = vunpack.c.l.b16 %v3099
        %v3169 = vunpack.c.l.b16 %v3100
        %v3170 = vunpack.c.l.b16 %v3101
        %v3171 = vunpack.c.l.b16 %v3102
        %v3172 = vunpack.c.l.b16 %v3103
        %v3173 = vunpack.c.l.b16 %v3104
        %v3174 = vunpack.c.l.b16 %v3105
        %v3175 = vunpack.c.l.b16 %v3106
        %v3176 = vunpack.c.l.b16 %v3107
        %v3177 = vunpack.c.l.b16 %v3108
        %v3178 = vunpack.c.l.b16 %v3109
        %v3179 = vunpack.c.l.b16 %v3110
        %v3180 = vpack.c.b16 %v3149, %v3148
        %v3181 = vpack.c.b16 %v3151, %v3150
        %v3182 = vpack.c.b16 %v3153, %v3152
        %v3183 = vpack.c.b16 %v3155, %v3154
        %v3184 = vpack.c.b16 %v3157, %v3156
        %v3185 = vpack.c.b16 %v3159, %v3158
        %v3186 = vpack.c.b16 %v3161, %v3160
        %v3187 = vpack.c.b16 %v3163, %v3162
        %v3188 = vpack.c.b16 %v3165, %v3164
        %v3189 = vpack.c.b16 %v3167, %v3166
        %v3190 = vpack.c.b16 %v3169, %v3168
        %v3191 = vpack.c.b16 %v3171, %v3170
        %v3192 = vpack.c.b16 %v3173, %v3172
        %v3193 = vpack.c.b16 %v3175, %v3174
        %v3194 = vpack.c.b16 %v3177, %v3176
        %v3195 = vpack.c.b16 %v3179, %v3178
        %3212 = vmatpush.bf16.msra.mxu0 %v3187
        %3213 = vmatpush.bf16.msra.mxu0 %v3186
        %3214 = vmatpush.bf16.msra.mxu0 %v3185
        %3215 = vmatpush.bf16.msra.mxu0 %v3184
        %3216 = vmatpush.bf16.msra.mxu0 %v3183
        %3217 = vmatpush.bf16.msra.mxu0 %v3182
        %3218 = vmatpush.bf16.msra.mxu0 %v3181
        %3219 = vmatpush.bf16.msra.mxu0 %v3180
        %3220 = vmatmul.bf16.gmra.mxu0 %v2843
        %v3221 = vpop.f32.mrf.mxu0
        %v3222 = vadd.f32 %v3114, %v3221
        %v3223 = vpop.f32.mrf.mxu0
        %v3224 = vadd.f32 %v3114, %v3223
        %3225 = vdwg.mxu0
        %3226 = vmatpush.bf16.msra.mxu0 %v3195
        %3227 = vmatpush.bf16.msra.mxu0 %v3194
        %3228 = vmatpush.bf16.msra.mxu0 %v3193
        %3229 = vmatpush.bf16.msra.mxu0 %v3192
        %3230 = vmatpush.bf16.msra.mxu0 %v3191
        %3231 = vmatpush.bf16.msra.mxu0 %v3190
        %3232 = vmatpush.bf16.msra.mxu0 %v3189
        %3233 = vmatpush.bf16.msra.mxu0 %v3188
        %3234 = vmatmul.bf16.gmra.mxu0 %v2844
        %v3235 = vpop.f32.mrf.mxu0
        %v3236 = vadd.f32 %v3222, %v3235
        %v3237 = vpop.f32.mrf.mxu0
        %v3238 = vadd.f32 %v3224, %v3237
        %3239 = vdwg.mxu0
        %v3240 = vmul.f32 %v3236, 0.088388346
        %v3241 = vmul.f32 %v3238, 0.088388346
        %v3242 = vpack.c.bf16 %v3241, %v3240
        %s3243 = scalar_lea.vmem [#allocation2], 16
        %v3244 = vld [vmem:[%s3243] sm:$0xf]
        %v3245 = vld [vmem:[%s3243 + $0x4] sm:$0xf]
        %v3246 = vld [vmem:[%s3243 + $0x8] sm:$0xf]
        %v3247 = vld [vmem:[%s3243 + $0xc] sm:$0xf]
        %v3252 = vunpack.c.l.b16 %v3244
        %v3253 = vunpack.c.l.b16 %v3245
        %v3254 = vunpack.c.l.b16 %v3246
        %v3255 = vunpack.c.l.b16 %v3247
        %v3256 = vpack.c.b16 %v3253, %v3252
        %v3257 = vpack.c.b16 %v3255, %v3254
        %3260 = vmatpush.bf16.xpose.msra.mxu0 0
        %3261 = vmatpush.bf16.xpose.msra.mxu0 0
        %3262 = vmatpush.bf16.xpose.msra.mxu0 0
        %3263 = vmatpush.bf16.xpose.msra.mxu0 0
        %3264 = vmatpush.bf16.xpose.msra.mxu0 0
        %3265 = vmatpush.bf16.xpose.msra.mxu0 0
        %3266 = vmatpush.bf16.xpose.msra.mxu0 %v3257
        %3267 = vmatpush.bf16.xpose.msra.mxu0 %v3256
        %3268 = vmatmul.bf16.gmra.mxu0 %v3242
        %v3269 = vpop.f32.mrf.mxu0
        %v3270 = vadd.f32 0.0, %v3269
        %v3271 = vpop.f32.mrf.mxu0
        %v3272 = vadd.f32 0.0, %v3271
        %3273 = vdwg.mxu0
        %v3274 = vsel %vm3004, %v3270, -inf
        %3275 = vmax.xlane.f32.xlu0 %v3274
        %v3276 = vpop.xlane.xlu0 %3275
        %v3277 = vsel %vm3004, %v3272, -inf
        %3278 = vmax.xlane.f32.xlu0 %v3277
        %v3279 = vpop.xlane.xlu0 %3278
        %v3280 = vsub.f32 %v3270, %v3276
        %v3281 = vsub.f32 %v3272, %v3279
        %v3282 = vmul.f32 %v3280, 1.442695
        %v3283 = vpow.pop %v3282
        %v3284 = vmul.f32 %v3281, 1.442695
        %v3285 = vpow.pop %v3284
        %v3286 = vsel %vm3004, %v3283, 0.0
        %3287 = vadd.xlane.f32.xlu0 %v3286
        %v3288 = vpop.xlane.xlu0 %3287
        %v3289 = vsel %vm3004, %v3285, 0.0
        %3290 = vadd.xlane.f32.xlu0 %v3289
        %v3291 = vpop.xlane.xlu0 %3290
        %v3292 = vrcp.pop %v3288
        %v3293 = vrcp.pop %v3291
        %v3294 = vmul.f32 %v3283, %v3292
        %v3295 = vmul.f32 %v3285, %v3293
        %v3296 = vpack.c.bf16 %v3295, %v3294
        %s3297 = scalar_lea.vmem [#allocation3], 16
        %v3298 = vld [vmem:[%s3297] sm:$0xf]
        %v3299 = vld [vmem:[%s3297 + $0x4] sm:$0xf]
        %v3300 = vld [vmem:[%s3297 + $0x8] sm:$0xf]
        %v3301 = vld [vmem:[%s3297 + $0xc] sm:$0xf]
        %v3306 = vunpack.c.l.b16 %v3298
        %v3307 = vunpack.c.l.b16 %v3299
        %v3308 = vunpack.c.l.b16 %v3300
        %v3309 = vunpack.c.l.b16 %v3301
        %v3310 = vpack.c.b16 %v3307, %v3306
        %v3311 = vpack.c.b16 %v3309, %v3308
        %v3315 = vsel %vm3004, %v3296, 0
        %3317 = vmatpush.bf16.msra.mxu0 0
        %3318 = vmatpush.bf16.msra.mxu0 0
        %3319 = vmatpush.bf16.msra.mxu0 0
        %3320 = vmatpush.bf16.msra.mxu0 0
        %3321 = vmatpush.bf16.msra.mxu0 0
        %3322 = vmatpush.bf16.msra.mxu0 0
        %3323 = vmatpush.bf16.msra.mxu0 %v3311
        %3324 = vmatpush.bf16.msra.mxu0 %v3310
        %3325 = vmatmul.bf16.gmra.mxu0 %v3315
        %v3326 = vpop.f32.mrf.mxu0
        %v3327 = vadd.f32 0.0, %v3326
        %v3328 = vpop.f32.mrf.mxu0
        %v3329 = vadd.f32 0.0, %v3328
        %3330 = vdwg.mxu0
        %v3331 = vpack.c.bf16 %v3329, %v3327
        %s3332 = scalar_lea.vmem [#allocation18], 128
        %v3333 = vld [vmem:[%s3332] sm:$0xff]
        %v3334 = vld [vmem:[%s3332 + $0x8] sm:$0xff]
        %v3335 = vld [vmem:[%s3332 + $0x10] sm:$0xff]
        %v3336 = vld [vmem:[%s3332 + $0x18] sm:$0xff]
        %v3337 = vld [vmem:[%s3332 + $0x20] sm:$0xff]
        %v3338 = vld [vmem:[%s3332 + $0x28] sm:$0xff]
        %v3339 = vld [vmem:[%s3332 + $0x30] sm:$0xff]
        %v3340 = vld [vmem:[%s3332 + $0x38] sm:$0xff]
        %v3341 = vld [vmem:[%s3332 + $0x40] sm:$0xff]
        %v3342 = vld [vmem:[%s3332 + $0x48] sm:$0xff]
        %v3343 = vld [vmem:[%s3332 + $0x50] sm:$0xff]
        %v3344 = vld [vmem:[%s3332 + $0x58] sm:$0xff]
        %v3345 = vld [vmem:[%s3332 + $0x60] sm:$0xff]
        %v3346 = vld [vmem:[%s3332 + $0x68] sm:$0xff]
        %v3347 = vld [vmem:[%s3332 + $0x70] sm:$0xff]
        %v3348 = vld [vmem:[%s3332 + $0x78] sm:$0xff]
        %v3365 = vunpack.c.l.b16 %v3333
        %v3366 = vunpack.c.h.b16 %v3333
        %v3367 = vunpack.c.l.b16 %v3334
        %v3368 = vunpack.c.h.b16 %v3334
        %v3369 = vunpack.c.l.b16 %v3335
        %v3370 = vunpack.c.h.b16 %v3335
        %v3371 = vunpack.c.l.b16 %v3336
        %v3372 = vunpack.c.h.b16 %v3336
        %v3373 = vunpack.c.l.b16 %v3337
        %v3374 = vunpack.c.h.b16 %v3337
        %v3375 = vunpack.c.l.b16 %v3338
        %v3376 = vunpack.c.h.b16 %v3338
        %v3377 = vunpack.c.l.b16 %v3339
        %v3378 = vunpack.c.h.b16 %v3339
        %v3379 = vunpack.c.l.b16 %v3340
        %v3380 = vunpack.c.h.b16 %v3340
        %v3381 = vunpack.c.l.b16 %v3341
        %v3382 = vunpack.c.h.b16 %v3341
        %v3383 = vunpack.c.l.b16 %v3342
        %v3384 = vunpack.c.h.b16 %v3342
        %v3385 = vunpack.c.l.b16 %v3343
        %v3386 = vunpack.c.h.b16 %v3343
        %v3387 = vunpack.c.l.b16 %v3344
        %v3388 = vunpack.c.h.b16 %v3344
        %v3389 = vunpack.c.l.b16 %v3345
        %v3390 = vunpack.c.h.b16 %v3345
        %v3391 = vunpack.c.l.b16 %v3346
        %v3392 = vunpack.c.h.b16 %v3346
        %v3393 = vunpack.c.l.b16 %v3347
        %v3394 = vunpack.c.h.b16 %v3347
        %v3395 = vunpack.c.l.b16 %v3348
        %v3396 = vunpack.c.h.b16 %v3348
        %v3397 = vpack.c.b16 %v3367, %v3365
        %v3398 = vpack.c.b16 %v3368, %v3366
        %v3399 = vpack.c.b16 %v3371, %v3369
        %v3400 = vpack.c.b16 %v3372, %v3370
        %v3401 = vpack.c.b16 %v3375, %v3373
        %v3402 = vpack.c.b16 %v3376, %v3374
        %v3403 = vpack.c.b16 %v3379, %v3377
        %v3404 = vpack.c.b16 %v3380, %v3378
        %v3405 = vpack.c.b16 %v3383, %v3381
        %v3406 = vpack.c.b16 %v3384, %v3382
        %v3407 = vpack.c.b16 %v3387, %v3385
        %v3408 = vpack.c.b16 %v3388, %v3386
        %v3409 = vpack.c.b16 %v3391, %v3389
        %v3410 = vpack.c.b16 %v3392, %v3390
        %v3411 = vpack.c.b16 %v3395, %v3393
        %v3412 = vpack.c.b16 %v3396, %v3394
        %3429 = vmatpush.bf16.msra.mxu0 %v3411
        %3430 = vmatpush.bf16.msra.mxu0 %v3409
        %3431 = vmatpush.bf16.msra.mxu0 %v3407
        %3432 = vmatpush.bf16.msra.mxu0 %v3405
        %3433 = vmatpush.bf16.msra.mxu0 %v3403
        %3434 = vmatpush.bf16.msra.mxu0 %v3401
        %3435 = vmatpush.bf16.msra.mxu0 %v3399
        %3436 = vmatpush.bf16.msra.mxu0 %v3397
        %3437 = vmatmul.bf16.gmra.mxu0 %v3331
        %v3438 = vpop.f32.mrf.mxu0
        %v3439 = vadd.f32 0.0, %v3438
        %v3440 = vpop.f32.mrf.mxu0
        %v3441 = vadd.f32 0.0, %v3440
        %3442 = vdwg.mxu0
        %3443 = vmatpush.bf16.msra.mxu0 %v3412
        %3444 = vmatpush.bf16.msra.mxu0 %v3410
        %3445 = vmatpush.bf16.msra.mxu0 %v3408
        %3446 = vmatpush.bf16.msra.mxu0 %v3406
        %3447 = vmatpush.bf16.msra.mxu0 %v3404
        %3448 = vmatpush.bf16.msra.mxu0 %v3402
        %3449 = vmatpush.bf16.msra.mxu0 %v3400
        %3450 = vmatpush.bf16.msra.mxu0 %v3398
        %3451 = vmatmul.bf16.gmra.mxu0 %v3331
        %v3452 = vpop.f32.mrf.mxu0
        %v3453 = vadd.f32 0.0, %v3452
        %v3454 = vpop.f32.mrf.mxu0
        %v3455 = vadd.f32 0.0, %v3454
        %3456 = vdwg.mxu0
        %v3473 = vunpack.c.l.b16 %v3062
        %v3474 = vunpack.c.h.b16 %v3062
        %v3475 = vunpack.c.l.b16 %v3063
        %v3476 = vunpack.c.h.b16 %v3063
        %v3477 = vunpack.c.l.b16 %v3064
        %v3478 = vunpack.c.h.b16 %v3064
        %v3479 = vunpack.c.l.b16 %v3065
        %v3480 = vunpack.c.h.b16 %v3065
        %v3481 = vunpack.c.l.b16 %v3066
        %v3482 = vunpack.c.h.b16 %v3066
        %v3483 = vunpack.c.l.b16 %v3067
        %v3484 = vunpack.c.h.b16 %v3067
        %v3485 = vunpack.c.l.b16 %v3068
        %v3486 = vunpack.c.h.b16 %v3068
        %v3487 = vunpack.c.l.b16 %v3069
        %v3488 = vunpack.c.h.b16 %v3069
        %v3489 = vunpack.c.l.b16 %v3070
        %v3490 = vunpack.c.h.b16 %v3070
        %v3491 = vunpack.c.l.b16 %v3071
        %v3492 = vunpack.c.h.b16 %v3071
        %v3493 = vunpack.c.l.b16 %v3072
        %v3494 = vunpack.c.h.b16 %v3072
        %v3495 = vunpack.c.l.b16 %v3073
        %v3496 = vunpack.c.h.b16 %v3073
        %v3497 = vunpack.c.l.b16 %v3074
        %v3498 = vunpack.c.h.b16 %v3074
        %v3499 = vunpack.c.l.b16 %v3075
        %v3500 = vunpack.c.h.b16 %v3075
        %v3501 = vunpack.c.l.b16 %v3076
        %v3502 = vunpack.c.h.b16 %v3076
        %v3503 = vunpack.c.l.b16 %v3077
        %v3504 = vunpack.c.h.b16 %v3077
        %v3505 = vpack.c.b16 %v3475, %v3473
        %v3506 = vpack.c.b16 %v3476, %v3474
        %v3507 = vpack.c.b16 %v3479, %v3477
        %v3508 = vpack.c.b16 %v3480, %v3478
        %v3509 = vpack.c.b16 %v3483, %v3481
        %v3510 = vpack.c.b16 %v3484, %v3482
        %v3511 = vpack.c.b16 %v3487, %v3485
        %v3512 = vpack.c.b16 %v3488, %v3486
        %v3513 = vpack.c.b16 %v3491, %v3489
        %v3514 = vpack.c.b16 %v3492, %v3490
        %v3515 = vpack.c.b16 %v3495, %v3493
        %v3516 = vpack.c.b16 %v3496, %v3494
        %v3517 = vpack.c.b16 %v3499, %v3497
        %v3518 = vpack.c.b16 %v3500, %v3498
        %v3519 = vpack.c.b16 %v3503, %v3501
        %v3520 = vpack.c.b16 %v3504, %v3502
        %3537 = vmatpush.bf16.msra.mxu0 %v3519
        %3538 = vmatpush.bf16.msra.mxu0 %v3517
        %3539 = vmatpush.bf16.msra.mxu0 %v3515
        %3540 = vmatpush.bf16.msra.mxu0 %v3513
        %3541 = vmatpush.bf16.msra.mxu0 %v3511
        %3542 = vmatpush.bf16.msra.mxu0 %v3509
        %3543 = vmatpush.bf16.msra.mxu0 %v3507
        %3544 = vmatpush.bf16.msra.mxu0 %v3505
        %3545 = vmatmul.bf16.gmra.mxu0 %v3061
        %v3546 = vpop.f32.mrf.mxu0
        %v3547 = vadd.f32 %v3439, %v3546
        %v3548 = vpop.f32.mrf.mxu0
        %v3549 = vadd.f32 %v3441, %v3548
        %3550 = vdwg.mxu0
        %3551 = vmatpush.bf16.msra.mxu0 %v3520
        %3552 = vmatpush.bf16.msra.mxu0 %v3518
        %3553 = vmatpush.bf16.msra.mxu0 %v3516
        %3554 = vmatpush.bf16.msra.mxu0 %v3514
        %3555 = vmatpush.bf16.msra.mxu0 %v3512
        %3556 = vmatpush.bf16.msra.mxu0 %v3510
        %3557 = vmatpush.bf16.msra.mxu0 %v3508
        %3558 = vmatpush.bf16.msra.mxu0 %v3506
        %3559 = vmatmul.bf16.gmra.mxu0 %v3061
        %v3560 = vpop.f32.mrf.mxu0
        %v3561 = vadd.f32 %v3453, %v3560
        %v3562 = vpop.f32.mrf.mxu0
        %v3563 = vadd.f32 %v3455, %v3562
        %3564 = vdwg.mxu0
        %v3565 = vld [vmem:[%s9] sm:$0x3]
        %v3567 = vperm.slane %v3565, 0
        %v3568 = vperm.slane %v3565, 1
        %v3571 = vadd.f32 %v3547, %v3567
        %v3572 = vadd.f32 %v3561, %v3568
        %v3573 = vadd.f32 %v3549, %v3567
        %v3574 = vadd.f32 %v3563, %v3568
        %v3575 = vadd.f32 %v3571, %v2797
        %v3576 = vadd.f32 %v3572, %v2798
        %v3577 = vadd.f32 %v3573, %v2799
        %v3578 = vadd.f32 %v3574, %v2800
        %v3579 = vld [vmem:[%s22] sm:$0x3]
        %v3580 = vld [vmem:[%s23] sm:$0x3]
        %v3581 = vadd.f32 %v3575, %v3576
        %3582 = vadd.xlane.f32.xlu0 %v3581
        %v3583 = vpop.xlane.xlu0 %3582
        %v3584 = vadd.f32 %v3577, %v3578
        %3585 = vadd.xlane.f32.xlu0 %v3584
        %v3586 = vpop.xlane.xlu0 %3585
        %v3587 = vrcp.pop 256.0
        %v3588 = vmul.f32 256.0, %v3587
        %v3589 = vsub.f32 1.0, %v3588
        %v3590 = vmul.f32 %v3587, %v3589
        %v3591 = vadd.f32 %v3587, %v3590
        %vm3592 = vweird.f32 %v3587
        %v3593 = vsel %vm3592, %v3587, %v3591
        %v3594 = vmul.f32 %v3583, %v3593
        %v3595 = vmul.f32 %v3586, %v3593
        %v3596 = vsub.f32 %v3575, %v3594
        %v3597 = vsub.f32 %v3576, %v3594
        %v3598 = vsub.f32 %v3577, %v3595
        %v3599 = vsub.f32 %v3578, %v3595
        %v3600 = vmul.f32 %v3596, %v3596
        %v3601 = vmul.f32 %v3597, %v3597
        %v3602 = vmul.f32 %v3598, %v3598
        %v3603 = vmul.f32 %v3599, %v3599
        %v3604 = vadd.f32 %v3600, %v3601
        %3605 = vadd.xlane.f32.xlu0 %v3604
        %v3606 = vpop.xlane.xlu0 %3605
        %v3607 = vadd.f32 %v3602, %v3603
        %3608 = vadd.xlane.f32.xlu0 %v3607
        %v3609 = vpop.xlane.xlu0 %3608
        %v3610 = vmul.f32 %v3606, %v3593
        %v3611 = vmul.f32 %v3609, %v3593
        %v3612 = vadd.f32 %v3610, 1e-05
        %v3613 = vadd.f32 %v3611, 1e-05
        %v3614 = vrsqrt.pop %v3612
        %v3615 = vmul.f32 %v3614, %v3612
        %v3616 = vmul.f32 %v3615, %v3614
        %v3617 = vmul.f32 0.5, %v3616
        %v3618 = vsub.f32 1.5, %v3617
        %v3619 = vmul.f32 %v3614, %v3618
        %vm3620 = vweird.f32 %v3612
        %vm3621 = vweird.f32 %v3614
        %vm3622 = vmor %vm3620, %vm3621
        %v3623 = vsel %vm3622, %v3614, %v3619
        %v3624 = vrsqrt.pop %v3613
        %v3625 = vmul.f32 %v3624, %v3613
        %v3626 = vmul.f32 %v3625, %v3624
        %v3627 = vmul.f32 0.5, %v3626
        %v3628 = vsub.f32 1.5, %v3627
        %v3629 = vmul.f32 %v3624, %v3628
        %vm3630 = vweird.f32 %v3613
        %vm3631 = vweird.f32 %v3624
        %vm3632 = vmor %vm3630, %vm3631
        %v3633 = vsel %vm3632, %v3624, %v3629
        %v3634 = vmul.f32 %v3596, %v3623
        %v3635 = vmul.f32 %v3597, %v3623
        %v3636 = vmul.f32 %v3598, %v3633
        %v3637 = vmul.f32 %v3599, %v3633
        %v3639 = vperm.slane %v3579, 0
        %v3640 = vperm.slane %v3579, 1
        %v3643 = vmul.f32 %v3634, %v3639
        %v3644 = vmul.f32 %v3635, %v3640
        %v3645 = vmul.f32 %v3636, %v3639
        %v3646 = vmul.f32 %v3637, %v3640
        %v3648 = vperm.slane %v3580, 0
        %v3649 = vperm.slane %v3580, 1
        %v3652 = vadd.f32 %v3643, %v3648
        %v3653 = vadd.f32 %v3644, %v3649
        %v3654 = vadd.f32 %v3645, %v3648
        %v3655 = vadd.f32 %v3646, %v3649
        %v3656 = vpack.c.bf16 %v3654, %v3652
        %v3657 = vpack.c.bf16 %v3655, %v3653
        %v3658 = vld [vmem:[#allocation20] sm:$0xf]
        %v3659 = vld [vmem:[#allocation20 + $0x4] sm:$0xf]
        %v3660 = vld [vmem:[#allocation20 + $0x8] sm:$0xf]
        %v3661 = vld [vmem:[#allocation20 + $0xc] sm:$0xf]
        %v3662 = vld [vmem:[#allocation20 + $0x10] sm:$0xf]
        %v3663 = vld [vmem:[#allocation20 + $0x14] sm:$0xf]
        %v3664 = vld [vmem:[#allocation20 + $0x18] sm:$0xf]
        %v3665 = vld [vmem:[#allocation20 + $0x1c] sm:$0xf]
        %v3666 = vld [vmem:[#allocation20 + $0x20] sm:$0xf]
        %v3667 = vld [vmem:[#allocation20 + $0x24] sm:$0xf]
        %v3668 = vld [vmem:[#allocation20 + $0x28] sm:$0xf]
        %v3669 = vld [vmem:[#allocation20 + $0x2c] sm:$0xf]
        %v3670 = vld [vmem:[#allocation20 + $0x30] sm:$0xf]
        %v3671 = vld [vmem:[#allocation20 + $0x34] sm:$0xf]
        %v3672 = vld [vmem:[#allocation20 + $0x38] sm:$0xf]
        %v3673 = vld [vmem:[#allocation20 + $0x3c] sm:$0xf]
        %v3674 = vld [vmem:[#allocation20 + $0x40] sm:$0xf]
        %v3675 = vld [vmem:[#allocation20 + $0x44] sm:$0xf]
        %v3676 = vld [vmem:[#allocation20 + $0x48] sm:$0xf]
        %v3677 = vld [vmem:[#allocation20 + $0x4c] sm:$0xf]
        %v3678 = vld [vmem:[#allocation20 + $0x50] sm:$0xf]
        %v3679 = vld [vmem:[#allocation20 + $0x54] sm:$0xf]
        %v3680 = vld [vmem:[#allocation20 + $0x58] sm:$0xf]
        %v3681 = vld [vmem:[#allocation20 + $0x5c] sm:$0xf]
        %v3682 = vld [vmem:[#allocation20 + $0x60] sm:$0xf]
        %v3683 = vld [vmem:[#allocation20 + $0x64] sm:$0xf]
        %v3684 = vld [vmem:[#allocation20 + $0x68] sm:$0xf]
        %v3685 = vld [vmem:[#allocation20 + $0x6c] sm:$0xf]
        %v3686 = vld [vmem:[#allocation20 + $0x70] sm:$0xf]
        %v3687 = vld [vmem:[#allocation20 + $0x74] sm:$0xf]
        %v3688 = vld [vmem:[#allocation20 + $0x78] sm:$0xf]
        %v3689 = vld [vmem:[#allocation20 + $0x7c] sm:$0xf]
        %v3690 = vld [vmem:[%s11] sm:$0x1]
        %v3692 = vperm.slane %v3690, 0
        %v3726 = vunpack.c.l.b16 %v3658
        %v3727 = vunpack.c.l.b16 %v3659
        %v3728 = vunpack.c.l.b16 %v3660
        %v3729 = vunpack.c.l.b16 %v3661
        %v3730 = vunpack.c.l.b16 %v3662
        %v3731 = vunpack.c.l.b16 %v3663
        %v3732 = vunpack.c.l.b16 %v3664
        %v3733 = vunpack.c.l.b16 %v3665
        %v3734 = vunpack.c.l.b16 %v3666
        %v3735 = vunpack.c.l.b16 %v3667
        %v3736 = vunpack.c.l.b16 %v3668
        %v3737 = vunpack.c.l.b16 %v3669
        %v3738 = vunpack.c.l.b16 %v3670
        %v3739 = vunpack.c.l.b16 %v3671
        %v3740 = vunpack.c.l.b16 %v3672
        %v3741 = vunpack.c.l.b16 %v3673
        %v3742 = vunpack.c.l.b16 %v3674
        %v3743 = vunpack.c.l.b16 %v3675
        %v3744 = vunpack.c.l.b16 %v3676
        %v3745 = vunpack.c.l.b16 %v3677
        %v3746 = vunpack.c.l.b16 %v3678
        %v3747 = vunpack.c.l.b16 %v3679
        %v3748 = vunpack.c.l.b16 %v3680
        %v3749 = vunpack.c.l.b16 %v3681
        %v3750 = vunpack.c.l.b16 %v3682
        %v3751 = vunpack.c.l.b16 %v3683
        %v3752 = vunpack.c.l.b16 %v3684
        %v3753 = vunpack.c.l.b16 %v3685
        %v3754 = vunpack.c.l.b16 %v3686
        %v3755 = vunpack.c.l.b16 %v3687
        %v3756 = vunpack.c.l.b16 %v3688
        %v3757 = vunpack.c.l.b16 %v3689
        %v3758 = vpack.c.b16 %v3727, %v3726
        %v3759 = vpack.c.b16 %v3729, %v3728
        %v3760 = vpack.c.b16 %v3731, %v3730
        %v3761 = vpack.c.b16 %v3733, %v3732
        %v3762 = vpack.c.b16 %v3735, %v3734
        %v3763 = vpack.c.b16 %v3737, %v3736
        %v3764 = vpack.c.b16 %v3739, %v3738
        %v3765 = vpack.c.b16 %v3741, %v3740
        %v3766 = vpack.c.b16 %v3743, %v3742
        %v3767 = vpack.c.b16 %v3745, %v3744
        %v3768 = vpack.c.b16 %v3747, %v3746
        %v3769 = vpack.c.b16 %v3749, %v3748
        %v3770 = vpack.c.b16 %v3751, %v3750
        %v3771 = vpack.c.b16 %v3753, %v3752
        %v3772 = vpack.c.b16 %v3755, %v3754
        %v3773 = vpack.c.b16 %v3757, %v3756
        %3790 = vmatpush.bf16.msra.mxu0 %v3765
        %3791 = vmatpush.bf16.msra.mxu0 %v3764
        %3792 = vmatpush.bf16.msra.mxu0 %v3763
        %3793 = vmatpush.bf16.msra.mxu0 %v3762
        %3794 = vmatpush.bf16.msra.mxu0 %v3761
        %3795 = vmatpush.bf16.msra.mxu0 %v3760
        %3796 = vmatpush.bf16.msra.mxu0 %v3759
        %3797 = vmatpush.bf16.msra.mxu0 %v3758
        %3798 = vmatmul.bf16.gmra.mxu0 %v3656
        %v3799 = vpop.f32.mrf.mxu0
        %v3800 = vadd.f32 %v3692, %v3799
        %v3801 = vpop.f32.mrf.mxu0
        %v3802 = vadd.f32 %v3692, %v3801
        %3803 = vdwg.mxu0
        %3804 = vmatpush.bf16.msra.mxu0 %v3773
        %3805 = vmatpush.bf16.msra.mxu0 %v3772
        %3806 = vmatpush.bf16.msra.mxu0 %v3771
        %3807 = vmatpush.bf16.msra.mxu0 %v3770
        %3808 = vmatpush.bf16.msra.mxu0 %v3769
        %3809 = vmatpush.bf16.msra.mxu0 %v3768
        %3810 = vmatpush.bf16.msra.mxu0 %v3767
        %3811 = vmatpush.bf16.msra.mxu0 %v3766
        %3812 = vmatmul.bf16.gmra.mxu0 %v3657
        %v3813 = vpop.f32.mrf.mxu0
        %v3814 = vadd.f32 %v3800, %v3813
        %v3815 = vpop.f32.mrf.mxu0
        %v3816 = vadd.f32 %v3802, %v3815
        %3817 = vdwg.mxu0
        %v3818 = vmul.f32 %v3814, 0.088388346
        %v3819 = vmul.f32 %v3816, 0.088388346
        %v3820 = vpack.c.bf16 %v3819, %v3818
        %v3821 = vld [vmem:[#allocation4] sm:$0xf]
        %v3822 = vld [vmem:[#allocation4 + $0x4] sm:$0xf]
        %v3823 = vld [vmem:[#allocation4 + $0x8] sm:$0xf]
        %v3824 = vld [vmem:[#allocation4 + $0xc] sm:$0xf]
        %v3825 = vld [vmem:[#allocation4 + $0x10] sm:$0xf]
        %v3826 = vld [vmem:[#allocation4 + $0x14] sm:$0xf]
        %v3827 = vld [vmem:[#allocation4 + $0x18] sm:$0xf]
        %v3828 = vld [vmem:[#allocation4 + $0x1c] sm:$0xf]
        %v3837 = vunpack.c.l.b16 %v3821
        %v3838 = vunpack.c.l.b16 %v3822
        %v3839 = vunpack.c.l.b16 %v3823
        %v3840 = vunpack.c.l.b16 %v3824
        %v3841 = vunpack.c.l.b16 %v3825
        %v3842 = vunpack.c.l.b16 %v3826
        %v3843 = vunpack.c.l.b16 %v3827
        %v3844 = vunpack.c.l.b16 %v3828
        %v3845 = vpack.c.b16 %v3838, %v3837
        %v3846 = vpack.c.b16 %v3840, %v3839
        %v3847 = vpack.c.b16 %v3842, %v3841
        %v3848 = vpack.c.b16 %v3844, %v3843
        %3853 = vmatpush.bf16.xpose.msra.mxu0 0
        %3854 = vmatpush.bf16.xpose.msra.mxu0 0
        %3855 = vmatpush.bf16.xpose.msra.mxu0 0
        %3856 = vmatpush.bf16.xpose.msra.mxu0 0
        %3857 = vmatpush.bf16.xpose.msra.mxu0 %v3848
        %3858 = vmatpush.bf16.xpose.msra.mxu0 %v3847
        %3859 = vmatpush.bf16.xpose.msra.mxu0 %v3846
        %3860 = vmatpush.bf16.xpose.msra.mxu0 %v3845
        %3861 = vmatmul.bf16.gmra.mxu0 %v3820
        %v3862 = vpop.f32.mrf.mxu0
        %v3863 = vadd.f32 0.0, %v3862
        %v3864 = vpop.f32.mrf.mxu0
        %v3865 = vadd.f32 0.0, %v3864
        %3866 = vdwg.mxu0
        %vm3867 = vcmask 523264
        %v3868 = vsel %vm3867, %v3863, -inf
        %3869 = vmax.xlane.f32.xlu0 %v3868
        %v3870 = vpop.xlane.xlu0 %3869
        %v3871 = vsel %vm3867, %v3865, -inf
        %3872 = vmax.xlane.f32.xlu0 %v3871
        %v3873 = vpop.xlane.xlu0 %3872
        %v3874 = vsub.f32 %v3863, %v3870
        %v3875 = vsub.f32 %v3865, %v3873
        %v3876 = vmul.f32 %v3874, 1.442695
        %v3877 = vpow.pop %v3876
        %v3878 = vmul.f32 %v3875, 1.442695
        %v3879 = vpow.pop %v3878
        %v3880 = vsel %vm3867, %v3877, 0.0
        %3881 = vadd.xlane.f32.xlu0 %v3880
        %v3882 = vpop.xlane.xlu0 %3881
        %v3883 = vsel %vm3867, %v3879, 0.0
        %3884 = vadd.xlane.f32.xlu0 %v3883
        %v3885 = vpop.xlane.xlu0 %3884
        %v3886 = vrcp.pop %v3882
        %v3887 = vrcp.pop %v3885
        %v3888 = vmul.f32 %v3877, %v3886
        %v3889 = vmul.f32 %v3879, %v3887
        %v3890 = vpack.c.bf16 %v3889, %v3888
        %v3891 = vld [vmem:[#allocation5] sm:$0xf]
        %v3892 = vld [vmem:[#allocation5 + $0x4] sm:$0xf]
        %v3893 = vld [vmem:[#allocation5 + $0x8] sm:$0xf]
        %v3894 = vld [vmem:[#allocation5 + $0xc] sm:$0xf]
        %v3895 = vld [vmem:[#allocation5 + $0x10] sm:$0xf]
        %v3896 = vld [vmem:[#allocation5 + $0x14] sm:$0xf]
        %v3897 = vld [vmem:[#allocation5 + $0x18] sm:$0xf]
        %v3898 = vld [vmem:[#allocation5 + $0x1c] sm:$0xf]
        %v3907 = vunpack.c.l.b16 %v3891
        %v3908 = vunpack.c.l.b16 %v3892
        %v3909 = vunpack.c.l.b16 %v3893
        %v3910 = vunpack.c.l.b16 %v3894
        %v3911 = vunpack.c.l.b16 %v3895
        %v3912 = vunpack.c.l.b16 %v3896
        %v3913 = vunpack.c.l.b16 %v3897
        %v3914 = vunpack.c.l.b16 %v3898
        %v3915 = vpack.c.b16 %v3908, %v3907
        %v3916 = vpack.c.b16 %v3910, %v3909
        %v3917 = vpack.c.b16 %v3912, %v3911
        %v3918 = vpack.c.b16 %v3914, %v3913
        %v3924 = vsel %vm3867, %v3890, 0
        %3926 = vmatpush.bf16.msra.mxu0 0
        %3927 = vmatpush.bf16.msra.mxu0 0
        %3928 = vmatpush.bf16.msra.mxu0 0
        %3929 = vmatpush.bf16.msra.mxu0 0
        %3930 = vmatpush.bf16.msra.mxu0 %v3918
        %3931 = vmatpush.bf16.msra.mxu0 %v3917
        %3932 = vmatpush.bf16.msra.mxu0 %v3916
        %3933 = vmatpush.bf16.msra.mxu0 %v3915
        %3934 = vmatmul.bf16.gmra.mxu0 %v3924
        %v3935 = vpop.f32.mrf.mxu0
        %v3936 = vadd.f32 0.0, %v3935
        %v3937 = vpop.f32.mrf.mxu0
        %v3938 = vadd.f32 0.0, %v3937
        %3939 = vdwg.mxu0
        %v3940 = vpack.c.bf16 %v3938, %v3936
        %v3941 = vld [vmem:[#allocation24] sm:$0xff]
        %v3942 = vld [vmem:[#allocation24 + $0x8] sm:$0xff]
        %v3943 = vld [vmem:[#allocation24 + $0x10] sm:$0xff]
        %v3944 = vld [vmem:[#allocation24 + $0x18] sm:$0xff]
        %v3945 = vld [vmem:[#allocation24 + $0x20] sm:$0xff]
        %v3946 = vld [vmem:[#allocation24 + $0x28] sm:$0xff]
        %v3947 = vld [vmem:[#allocation24 + $0x30] sm:$0xff]
        %v3948 = vld [vmem:[#allocation24 + $0x38] sm:$0xff]
        %v3949 = vld [vmem:[#allocation24 + $0x40] sm:$0xff]
        %v3950 = vld [vmem:[#allocation24 + $0x48] sm:$0xff]
        %v3951 = vld [vmem:[#allocation24 + $0x50] sm:$0xff]
        %v3952 = vld [vmem:[#allocation24 + $0x58] sm:$0xff]
        %v3953 = vld [vmem:[#allocation24 + $0x60] sm:$0xff]
        %v3954 = vld [vmem:[#allocation24 + $0x68] sm:$0xff]
        %v3955 = vld [vmem:[#allocation24 + $0x70] sm:$0xff]
        %v3956 = vld [vmem:[#allocation24 + $0x78] sm:$0xff]
        %s3957 = scalar_lea.vmem [#allocation20], 128
        %v3958 = vld [vmem:[%s3957] sm:$0xf]
        %v3959 = vld [vmem:[%s3957 + $0x4] sm:$0xf]
        %v3960 = vld [vmem:[%s3957 + $0x8] sm:$0xf]
        %v3961 = vld [vmem:[%s3957 + $0xc] sm:$0xf]
        %v3962 = vld [vmem:[%s3957 + $0x10] sm:$0xf]
        %v3963 = vld [vmem:[%s3957 + $0x14] sm:$0xf]
        %v3964 = vld [vmem:[%s3957 + $0x18] sm:$0xf]
        %v3965 = vld [vmem:[%s3957 + $0x1c] sm:$0xf]
        %v3966 = vld [vmem:[%s3957 + $0x20] sm:$0xf]
        %v3967 = vld [vmem:[%s3957 + $0x24] sm:$0xf]
        %v3968 = vld [vmem:[%s3957 + $0x28] sm:$0xf]
        %v3969 = vld [vmem:[%s3957 + $0x2c] sm:$0xf]
        %v3970 = vld [vmem:[%s3957 + $0x30] sm:$0xf]
        %v3971 = vld [vmem:[%s3957 + $0x34] sm:$0xf]
        %v3972 = vld [vmem:[%s3957 + $0x38] sm:$0xf]
        %v3973 = vld [vmem:[%s3957 + $0x3c] sm:$0xf]
        %v3974 = vld [vmem:[%s3957 + $0x40] sm:$0xf]
        %v3975 = vld [vmem:[%s3957 + $0x44] sm:$0xf]
        %v3976 = vld [vmem:[%s3957 + $0x48] sm:$0xf]
        %v3977 = vld [vmem:[%s3957 + $0x4c] sm:$0xf]
        %v3978 = vld [vmem:[%s3957 + $0x50] sm:$0xf]
        %v3979 = vld [vmem:[%s3957 + $0x54] sm:$0xf]
        %v3980 = vld [vmem:[%s3957 + $0x58] sm:$0xf]
        %v3981 = vld [vmem:[%s3957 + $0x5c] sm:$0xf]
        %v3982 = vld [vmem:[%s3957 + $0x60] sm:$0xf]
        %v3983 = vld [vmem:[%s3957 + $0x64] sm:$0xf]
        %v3984 = vld [vmem:[%s3957 + $0x68] sm:$0xf]
        %v3985 = vld [vmem:[%s3957 + $0x6c] sm:$0xf]
        %v3986 = vld [vmem:[%s3957 + $0x70] sm:$0xf]
        %v3987 = vld [vmem:[%s3957 + $0x74] sm:$0xf]
        %v3988 = vld [vmem:[%s3957 + $0x78] sm:$0xf]
        %v3989 = vld [vmem:[%s3957 + $0x7c] sm:$0xf]
        %s3990 = scalar_lea.vmem %s11, 1
        %v3991 = vld [vmem:[%s3990] sm:$0x1]
        %v3993 = vperm.slane %v3991, 0
        %v4027 = vunpack.c.l.b16 %v3958
        %v4028 = vunpack.c.l.b16 %v3959
        %v4029 = vunpack.c.l.b16 %v3960
        %v4030 = vunpack.c.l.b16 %v3961
        %v4031 = vunpack.c.l.b16 %v3962
        %v4032 = vunpack.c.l.b16 %v3963
        %v4033 = vunpack.c.l.b16 %v3964
        %v4034 = vunpack.c.l.b16 %v3965
        %v4035 = vunpack.c.l.b16 %v3966
        %v4036 = vunpack.c.l.b16 %v3967
        %v4037 = vunpack.c.l.b16 %v3968
        %v4038 = vunpack.c.l.b16 %v3969
        %v4039 = vunpack.c.l.b16 %v3970
        %v4040 = vunpack.c.l.b16 %v3971
        %v4041 = vunpack.c.l.b16 %v3972
        %v4042 = vunpack.c.l.b16 %v3973
        %v4043 = vunpack.c.l.b16 %v3974
        %v4044 = vunpack.c.l.b16 %v3975
        %v4045 = vunpack.c.l.b16 %v3976
        %v4046 = vunpack.c.l.b16 %v3977
        %v4047 = vunpack.c.l.b16 %v3978
        %v4048 = vunpack.c.l.b16 %v3979
        %v4049 = vunpack.c.l.b16 %v3980
        %v4050 = vunpack.c.l.b16 %v3981
        %v4051 = vunpack.c.l.b16 %v3982
        %v4052 = vunpack.c.l.b16 %v3983
        %v4053 = vunpack.c.l.b16 %v3984
        %v4054 = vunpack.c.l.b16 %v3985
        %v4055 = vunpack.c.l.b16 %v3986
        %v4056 = vunpack.c.l.b16 %v3987
        %v4057 = vunpack.c.l.b16 %v3988
        %v4058 = vunpack.c.l.b16 %v3989
        %v4059 = vpack.c.b16 %v4028, %v4027
        %v4060 = vpack.c.b16 %v4030, %v4029
        %v4061 = vpack.c.b16 %v4032, %v4031
        %v4062 = vpack.c.b16 %v4034, %v4033
        %v4063 = vpack.c.b16 %v4036, %v4035
        %v4064 = vpack.c.b16 %v4038, %v4037
        %v4065 = vpack.c.b16 %v4040, %v4039
        %v4066 = vpack.c.b16 %v4042, %v4041
        %v4067 = vpack.c.b16 %v4044, %v4043
        %v4068 = vpack.c.b16 %v4046, %v4045
        %v4069 = vpack.c.b16 %v4048, %v4047
        %v4070 = vpack.c.b16 %v4050, %v4049
        %v4071 = vpack.c.b16 %v4052, %v4051
        %v4072 = vpack.c.b16 %v4054, %v4053
        %v4073 = vpack.c.b16 %v4056, %v4055
        %v4074 = vpack.c.b16 %v4058, %v4057
        %4091 = vmatpush.bf16.msra.mxu0 %v4066
        %4092 = vmatpush.bf16.msra.mxu0 %v4065
        %4093 = vmatpush.bf16.msra.mxu0 %v4064
        %4094 = vmatpush.bf16.msra.mxu0 %v4063
        %4095 = vmatpush.bf16.msra.mxu0 %v4062
        %4096 = vmatpush.bf16.msra.mxu0 %v4061
        %4097 = vmatpush.bf16.msra.mxu0 %v4060
        %4098 = vmatpush.bf16.msra.mxu0 %v4059
        %4099 = vmatmul.bf16.gmra.mxu0 %v3656
        %v4100 = vpop.f32.mrf.mxu0
        %v4101 = vadd.f32 %v3993, %v4100
        %v4102 = vpop.f32.mrf.mxu0
        %v4103 = vadd.f32 %v3993, %v4102
        %4104 = vdwg.mxu0
        %4105 = vmatpush.bf16.msra.mxu0 %v4074
        %4106 = vmatpush.bf16.msra.mxu0 %v4073
        %4107 = vmatpush.bf16.msra.mxu0 %v4072
        %4108 = vmatpush.bf16.msra.mxu0 %v4071
        %4109 = vmatpush.bf16.msra.mxu0 %v4070
        %4110 = vmatpush.bf16.msra.mxu0 %v4069
        %4111 = vmatpush.bf16.msra.mxu0 %v4068
        %4112 = vmatpush.bf16.msra.mxu0 %v4067
        %4113 = vmatmul.bf16.gmra.mxu0 %v3657
        %v4114 = vpop.f32.mrf.mxu0
        %v4115 = vadd.f32 %v4101, %v4114
        %v4116 = vpop.f32.mrf.mxu0
        %v4117 = vadd.f32 %v4103, %v4116
        %4118 = vdwg.mxu0
        %v4119 = vmul.f32 %v4115, 0.088388346
        %v4120 = vmul.f32 %v4117, 0.088388346
        %v4121 = vpack.c.bf16 %v4120, %v4119
        %s4122 = scalar_lea.vmem [#allocation4], 32
        %v4123 = vld [vmem:[%s4122] sm:$0xf]
        %v4124 = vld [vmem:[%s4122 + $0x4] sm:$0xf]
        %v4125 = vld [vmem:[%s4122 + $0x8] sm:$0xf]
        %v4126 = vld [vmem:[%s4122 + $0xc] sm:$0xf]
        %v4127 = vld [vmem:[%s4122 + $0x10] sm:$0xf]
        %v4128 = vld [vmem:[%s4122 + $0x14] sm:$0xf]
        %v4129 = vld [vmem:[%s4122 + $0x18] sm:$0xf]
        %v4130 = vld [vmem:[%s4122 + $0x1c] sm:$0xf]
        %v4139 = vunpack.c.l.b16 %v4123
        %v4140 = vunpack.c.l.b16 %v4124
        %v4141 = vunpack.c.l.b16 %v4125
        %v4142 = vunpack.c.l.b16 %v4126
        %v4143 = vunpack.c.l.b16 %v4127
        %v4144 = vunpack.c.l.b16 %v4128
        %v4145 = vunpack.c.l.b16 %v4129
        %v4146 = vunpack.c.l.b16 %v4130
        %v4147 = vpack.c.b16 %v4140, %v4139
        %v4148 = vpack.c.b16 %v4142, %v4141
        %v4149 = vpack.c.b16 %v4144, %v4143
        %v4150 = vpack.c.b16 %v4146, %v4145
        %4155 = vmatpush.bf16.xpose.msra.mxu0 0
        %4156 = vmatpush.bf16.xpose.msra.mxu0 0
        %4157 = vmatpush.bf16.xpose.msra.mxu0 0
        %4158 = vmatpush.bf16.xpose.msra.mxu0 0
        %4159 = vmatpush.bf16.xpose.msra.mxu0 %v4150
        %4160 = vmatpush.bf16.xpose.msra.mxu0 %v4149
        %4161 = vmatpush.bf16.xpose.msra.mxu0 %v4148
        %4162 = vmatpush.bf16.xpose.msra.mxu0 %v4147
        %4163 = vmatmul.bf16.gmra.mxu0 %v4121
        %v4164 = vpop.f32.mrf.mxu0
        %v4165 = vadd.f32 0.0, %v4164
        %v4166 = vpop.f32.mrf.mxu0
        %v4167 = vadd.f32 0.0, %v4166
        %4168 = vdwg.mxu0
        %v4169 = vsel %vm3867, %v4165, -inf
        %4170 = vmax.xlane.f32.xlu0 %v4169
        %v4171 = vpop.xlane.xlu0 %4170
        %v4172 = vsel %vm3867, %v4167, -inf
        %4173 = vmax.xlane.f32.xlu0 %v4172
        %v4174 = vpop.xlane.xlu0 %4173
        %v4175 = vsub.f32 %v4165, %v4171
        %v4176 = vsub.f32 %v4167, %v4174
        %v4177 = vmul.f32 %v4175, 1.442695
        %v4178 = vpow.pop %v4177
        %v4179 = vmul.f32 %v4176, 1.442695
        %v4180 = vpow.pop %v4179
        %v4181 = vsel %vm3867, %v4178, 0.0
        %4182 = vadd.xlane.f32.xlu0 %v4181
        %v4183 = vpop.xlane.xlu0 %4182
        %v4184 = vsel %vm3867, %v4180, 0.0
        %4185 = vadd.xlane.f32.xlu0 %v4184
        %v4186 = vpop.xlane.xlu0 %4185
        %v4187 = vrcp.pop %v4183
        %v4188 = vrcp.pop %v4186
        %v4189 = vmul.f32 %v4178, %v4187
        %v4190 = vmul.f32 %v4180, %v4188
        %v4191 = vpack.c.bf16 %v4190, %v4189
        %s4192 = scalar_lea.vmem [#allocation5], 32
        %v4193 = vld [vmem:[%s4192] sm:$0xf]
        %v4194 = vld [vmem:[%s4192 + $0x4] sm:$0xf]
        %v4195 = vld [vmem:[%s4192 + $0x8] sm:$0xf]
        %v4196 = vld [vmem:[%s4192 + $0xc] sm:$0xf]
        %v4197 = vld [vmem:[%s4192 + $0x10] sm:$0xf]
        %v4198 = vld [vmem:[%s4192 + $0x14] sm:$0xf]
        %v4199 = vld [vmem:[%s4192 + $0x18] sm:$0xf]
        %v4200 = vld [vmem:[%s4192 + $0x1c] sm:$0xf]
        %v4209 = vunpack.c.l.b16 %v4193
        %v4210 = vunpack.c.l.b16 %v4194
        %v4211 = vunpack.c.l.b16 %v4195
        %v4212 = vunpack.c.l.b16 %v4196
        %v4213 = vunpack.c.l.b16 %v4197
        %v4214 = vunpack.c.l.b16 %v4198
        %v4215 = vunpack.c.l.b16 %v4199
        %v4216 = vunpack.c.l.b16 %v4200
        %v4217 = vpack.c.b16 %v4210, %v4209
        %v4218 = vpack.c.b16 %v4212, %v4211
        %v4219 = vpack.c.b16 %v4214, %v4213
        %v4220 = vpack.c.b16 %v4216, %v4215
        %v4226 = vsel %vm3867, %v4191, 0
        %4228 = vmatpush.bf16.msra.mxu0 0
        %4229 = vmatpush.bf16.msra.mxu0 0
        %4230 = vmatpush.bf16.msra.mxu0 0
        %4231 = vmatpush.bf16.msra.mxu0 0
        %4232 = vmatpush.bf16.msra.mxu0 %v4220
        %4233 = vmatpush.bf16.msra.mxu0 %v4219
        %4234 = vmatpush.bf16.msra.mxu0 %v4218
        %4235 = vmatpush.bf16.msra.mxu0 %v4217
        %4236 = vmatmul.bf16.gmra.mxu0 %v4226
        %v4237 = vpop.f32.mrf.mxu0
        %v4238 = vadd.f32 0.0, %v4237
        %v4239 = vpop.f32.mrf.mxu0
        %v4240 = vadd.f32 0.0, %v4239
        %4241 = vdwg.mxu0
        %v4242 = vpack.c.bf16 %v4240, %v4238
        %s4243 = scalar_lea.vmem [#allocation24], 128
        %v4244 = vld [vmem:[%s4243] sm:$0xff]
        %v4245 = vld [vmem:[%s4243 + $0x8] sm:$0xff]
        %v4246 = vld [vmem:[%s4243 + $0x10] sm:$0xff]
        %v4247 = vld [vmem:[%s4243 + $0x18] sm:$0xff]
        %v4248 = vld [vmem:[%s4243 + $0x20] sm:$0xff]
        %v4249 = vld [vmem:[%s4243 + $0x28] sm:$0xff]
        %v4250 = vld [vmem:[%s4243 + $0x30] sm:$0xff]
        %v4251 = vld [vmem:[%s4243 + $0x38] sm:$0xff]
        %v4252 = vld [vmem:[%s4243 + $0x40] sm:$0xff]
        %v4253 = vld [vmem:[%s4243 + $0x48] sm:$0xff]
        %v4254 = vld [vmem:[%s4243 + $0x50] sm:$0xff]
        %v4255 = vld [vmem:[%s4243 + $0x58] sm:$0xff]
        %v4256 = vld [vmem:[%s4243 + $0x60] sm:$0xff]
        %v4257 = vld [vmem:[%s4243 + $0x68] sm:$0xff]
        %v4258 = vld [vmem:[%s4243 + $0x70] sm:$0xff]
        %v4259 = vld [vmem:[%s4243 + $0x78] sm:$0xff]
        %v4276 = vunpack.c.l.b16 %v4244
        %v4277 = vunpack.c.h.b16 %v4244
        %v4278 = vunpack.c.l.b16 %v4245
        %v4279 = vunpack.c.h.b16 %v4245
        %v4280 = vunpack.c.l.b16 %v4246
        %v4281 = vunpack.c.h.b16 %v4246
        %v4282 = vunpack.c.l.b16 %v4247
        %v4283 = vunpack.c.h.b16 %v4247
        %v4284 = vunpack.c.l.b16 %v4248
        %v4285 = vunpack.c.h.b16 %v4248
        %v4286 = vunpack.c.l.b16 %v4249
        %v4287 = vunpack.c.h.b16 %v4249
        %v4288 = vunpack.c.l.b16 %v4250
        %v4289 = vunpack.c.h.b16 %v4250
        %v4290 = vunpack.c.l.b16 %v4251
        %v4291 = vunpack.c.h.b16 %v4251
        %v4292 = vunpack.c.l.b16 %v4252
        %v4293 = vunpack.c.h.b16 %v4252
        %v4294 = vunpack.c.l.b16 %v4253
        %v4295 = vunpack.c.h.b16 %v4253
        %v4296 = vunpack.c.l.b16 %v4254
        %v4297 = vunpack.c.h.b16 %v4254
        %v4298 = vunpack.c.l.b16 %v4255
        %v4299 = vunpack.c.h.b16 %v4255
        %v4300 = vunpack.c.l.b16 %v4256
        %v4301 = vunpack.c.h.b16 %v4256
        %v4302 = vunpack.c.l.b16 %v4257
        %v4303 = vunpack.c.h.b16 %v4257
        %v4304 = vunpack.c.l.b16 %v4258
        %v4305 = vunpack.c.h.b16 %v4258
        %v4306 = vunpack.c.l.b16 %v4259
        %v4307 = vunpack.c.h.b16 %v4259
        %v4308 = vpack.c.b16 %v4278, %v4276
        %v4309 = vpack.c.b16 %v4279, %v4277
        %v4310 = vpack.c.b16 %v4282, %v4280
        %v4311 = vpack.c.b16 %v4283, %v4281
        %v4312 = vpack.c.b16 %v4286, %v4284
        %v4313 = vpack.c.b16 %v4287, %v4285
        %v4314 = vpack.c.b16 %v4290, %v4288
        %v4315 = vpack.c.b16 %v4291, %v4289
        %v4316 = vpack.c.b16 %v4294, %v4292
        %v4317 = vpack.c.b16 %v4295, %v4293
        %v4318 = vpack.c.b16 %v4298, %v4296
        %v4319 = vpack.c.b16 %v4299, %v4297
        %v4320 = vpack.c.b16 %v4302, %v4300
        %v4321 = vpack.c.b16 %v4303, %v4301
        %v4322 = vpack.c.b16 %v4306, %v4304
        %v4323 = vpack.c.b16 %v4307, %v4305
        %4340 = vmatpush.bf16.msra.mxu0 %v4322
        %4341 = vmatpush.bf16.msra.mxu0 %v4320
        %4342 = vmatpush.bf16.msra.mxu0 %v4318
        %4343 = vmatpush.bf16.msra.mxu0 %v4316
        %4344 = vmatpush.bf16.msra.mxu0 %v4314
        %4345 = vmatpush.bf16.msra.mxu0 %v4312
        %4346 = vmatpush.bf16.msra.mxu0 %v4310
        %4347 = vmatpush.bf16.msra.mxu0 %v4308
        %4348 = vmatmul.bf16.gmra.mxu0 %v4242
        %v4349 = vpop.f32.mrf.mxu0
        %v4350 = vadd.f32 0.0, %v4349
        %v4351 = vpop.f32.mrf.mxu0
        %v4352 = vadd.f32 0.0, %v4351
        %4353 = vdwg.mxu0
        %4354 = vmatpush.bf16.msra.mxu0 %v4323
        %4355 = vmatpush.bf16.msra.mxu0 %v4321
        %4356 = vmatpush.bf16.msra.mxu0 %v4319
        %4357 = vmatpush.bf16.msra.mxu0 %v4317
        %4358 = vmatpush.bf16.msra.mxu0 %v4315
        %4359 = vmatpush.bf16.msra.mxu0 %v4313
        %4360 = vmatpush.bf16.msra.mxu0 %v4311
        %4361 = vmatpush.bf16.msra.mxu0 %v4309
        %4362 = vmatmul.bf16.gmra.mxu0 %v4242
        %v4363 = vpop.f32.mrf.mxu0
        %v4364 = vadd.f32 0.0, %v4363
        %v4365 = vpop.f32.mrf.mxu0
        %v4366 = vadd.f32 0.0, %v4365
        %4367 = vdwg.mxu0
        %v4384 = vunpack.c.l.b16 %v3941
        %v4385 = vunpack.c.h.b16 %v3941
        %v4386 = vunpack.c.l.b16 %v3942
        %v4387 = vunpack.c.h.b16 %v3942
        %v4388 = vunpack.c.l.b16 %v3943
        %v4389 = vunpack.c.h.b16 %v3943
        %v4390 = vunpack.c.l.b16 %v3944
        %v4391 = vunpack.c.h.b16 %v3944
        %v4392 = vunpack.c.l.b16 %v3945
        %v4393 = vunpack.c.h.b16 %v3945
        %v4394 = vunpack.c.l.b16 %v3946
        %v4395 = vunpack.c.h.b16 %v3946
        %v4396 = vunpack.c.l.b16 %v3947
        %v4397 = vunpack.c.h.b16 %v3947
        %v4398 = vunpack.c.l.b16 %v3948
        %v4399 = vunpack.c.h.b16 %v3948
        %v4400 = vunpack.c.l.b16 %v3949
        %v4401 = vunpack.c.h.b16 %v3949
        %v4402 = vunpack.c.l.b16 %v3950
        %v4403 = vunpack.c.h.b16 %v3950
        %v4404 = vunpack.c.l.b16 %v3951
        %v4405 = vunpack.c.h.b16 %v3951
        %v4406 = vunpack.c.l.b16 %v3952
        %v4407 = vunpack.c.h.b16 %v3952
        %v4408 = vunpack.c.l.b16 %v3953
        %v4409 = vunpack.c.h.b16 %v3953
        %v4410 = vunpack.c.l.b16 %v3954
        %v4411 = vunpack.c.h.b16 %v3954
        %v4412 = vunpack.c.l.b16 %v3955
        %v4413 = vunpack.c.h.b16 %v3955
        %v4414 = vunpack.c.l.b16 %v3956
        %v4415 = vunpack.c.h.b16 %v3956
        %v4416 = vpack.c.b16 %v4386, %v4384
        %v4417 = vpack.c.b16 %v4387, %v4385
        %v4418 = vpack.c.b16 %v4390, %v4388
        %v4419 = vpack.c.b16 %v4391, %v4389
        %v4420 = vpack.c.b16 %v4394, %v4392
        %v4421 = vpack.c.b16 %v4395, %v4393
        %v4422 = vpack.c.b16 %v4398, %v4396
        %v4423 = vpack.c.b16 %v4399, %v4397
        %v4424 = vpack.c.b16 %v4402, %v4400
        %v4425 = vpack.c.b16 %v4403, %v4401
        %v4426 = vpack.c.b16 %v4406, %v4404
        %v4427 = vpack.c.b16 %v4407, %v4405
        %v4428 = vpack.c.b16 %v4410, %v4408
        %v4429 = vpack.c.b16 %v4411, %v4409
        %v4430 = vpack.c.b16 %v4414, %v4412
        %v4431 = vpack.c.b16 %v4415, %v4413
        %4448 = vmatpush.bf16.msra.mxu0 %v4430
        %4449 = vmatpush.bf16.msra.mxu0 %v4428
        %4450 = vmatpush.bf16.msra.mxu0 %v4426
        %4451 = vmatpush.bf16.msra.mxu0 %v4424
        %4452 = vmatpush.bf16.msra.mxu0 %v4422
        %4453 = vmatpush.bf16.msra.mxu0 %v4420
        %4454 = vmatpush.bf16.msra.mxu0 %v4418
        %4455 = vmatpush.bf16.msra.mxu0 %v4416
        %4456 = vmatmul.bf16.gmra.mxu0 %v3940
        %v4457 = vpop.f32.mrf.mxu0
        %v4458 = vadd.f32 %v4350, %v4457
        %v4459 = vpop.f32.mrf.mxu0
        %v4460 = vadd.f32 %v4352, %v4459
        %4461 = vdwg.mxu0
        %4462 = vmatpush.bf16.msra.mxu0 %v4431
        %4463 = vmatpush.bf16.msra.mxu0 %v4429
        %4464 = vmatpush.bf16.msra.mxu0 %v4427
        %4465 = vmatpush.bf16.msra.mxu0 %v4425
        %4466 = vmatpush.bf16.msra.mxu0 %v4423
        %4467 = vmatpush.bf16.msra.mxu0 %v4421
        %4468 = vmatpush.bf16.msra.mxu0 %v4419
        %4469 = vmatpush.bf16.msra.mxu0 %v4417
        %4470 = vmatmul.bf16.gmra.mxu0 %v3940
        %v4471 = vpop.f32.mrf.mxu0
        %v4472 = vadd.f32 %v4364, %v4471
        %v4473 = vpop.f32.mrf.mxu0
        %v4474 = vadd.f32 %v4366, %v4473
        %4475 = vdwg.mxu0
        %v4476 = vld [vmem:[%s17] sm:$0x3]
        %v4478 = vperm.slane %v4476, 0
        %v4479 = vperm.slane %v4476, 1
        %v4482 = vadd.f32 %v4458, %v4478
        %v4483 = vadd.f32 %v4472, %v4479
        %v4484 = vadd.f32 %v4460, %v4478
        %v4485 = vadd.f32 %v4474, %v4479
        %v4486 = vadd.f32 %v4482, %v3652
        %v4487 = vadd.f32 %v4483, %v3653
        %v4488 = vadd.f32 %v4484, %v3654
        %v4489 = vadd.f32 %v4485, %v3655
        %v4490 = vld [vmem:[#allocation29] sm:$0x3]
        %v4491 = vld [vmem:[%s25] sm:$0x3]
        %v4492 = vadd.f32 %v4486, %v4487
        %4493 = vadd.xlane.f32.xlu0 %v4492
        %v4494 = vpop.xlane.xlu0 %4493
        %v4495 = vadd.f32 %v4488, %v4489
        %4496 = vadd.xlane.f32.xlu0 %v4495
        %v4497 = vpop.xlane.xlu0 %4496
        %v4498 = vmul.f32 %v4494, %v3593
        %v4499 = vmul.f32 %v4497, %v3593
        %v4500 = vsub.f32 %v4486, %v4498
        %v4501 = vsub.f32 %v4487, %v4498
        %v4502 = vsub.f32 %v4488, %v4499
        %v4503 = vsub.f32 %v4489, %v4499
        %v4504 = vmul.f32 %v4500, %v4500
        %v4505 = vmul.f32 %v4501, %v4501
        %v4506 = vmul.f32 %v4502, %v4502
        %v4507 = vmul.f32 %v4503, %v4503
        %v4508 = vadd.f32 %v4504, %v4505
        %4509 = vadd.xlane.f32.xlu0 %v4508
        %v4510 = vpop.xlane.xlu0 %4509
        %v4511 = vadd.f32 %v4506, %v4507
        %4512 = vadd.xlane.f32.xlu0 %v4511
        %v4513 = vpop.xlane.xlu0 %4512
        %v4514 = vmul.f32 %v4510, %v3593
        %v4515 = vmul.f32 %v4513, %v3593
        %v4516 = vadd.f32 %v4514, 1e-05
        %v4517 = vadd.f32 %v4515, 1e-05
        %v4518 = vrsqrt.pop %v4516
        %v4519 = vmul.f32 %v4518, %v4516
        %v4520 = vmul.f32 %v4519, %v4518
        %v4521 = vmul.f32 0.5, %v4520
        %v4522 = vsub.f32 1.5, %v4521
        %v4523 = vmul.f32 %v4518, %v4522
        %vm4524 = vweird.f32 %v4516
        %vm4525 = vweird.f32 %v4518
        %vm4526 = vmor %vm4524, %vm4525
        %v4527 = vsel %vm4526, %v4518, %v4523
        %v4528 = vrsqrt.pop %v4517
        %v4529 = vmul.f32 %v4528, %v4517
        %v4530 = vmul.f32 %v4529, %v4528
        %v4531 = vmul.f32 0.5, %v4530
        %v4532 = vsub.f32 1.5, %v4531
        %v4533 = vmul.f32 %v4528, %v4532
        %vm4534 = vweird.f32 %v4517
        %vm4535 = vweird.f32 %v4528
        %vm4536 = vmor %vm4534, %vm4535
        %v4537 = vsel %vm4536, %v4528, %v4533
        %v4538 = vmul.f32 %v4500, %v4527
        %v4539 = vmul.f32 %v4501, %v4527
        %v4540 = vmul.f32 %v4502, %v4537
        %v4541 = vmul.f32 %v4503, %v4537
        %v4543 = vperm.slane %v4490, 0
        %v4544 = vperm.slane %v4490, 1
        %v4547 = vmul.f32 %v4538, %v4543
        %v4548 = vmul.f32 %v4539, %v4544
        %v4549 = vmul.f32 %v4540, %v4543
        %v4550 = vmul.f32 %v4541, %v4544
        %v4552 = vperm.slane %v4491, 0
        %v4553 = vperm.slane %v4491, 1
        %v4556 = vadd.f32 %v4547, %v4552
        %v4557 = vadd.f32 %v4548, %v4553
        %v4558 = vadd.f32 %v4549, %v4552
        %v4559 = vadd.f32 %v4550, %v4553
        %v4560 = vld [vmem:[#allocation26] sm:$0xff]
        %v4561 = vld [vmem:[#allocation26 + $0x8] sm:$0xff]
        %v4562 = vld [vmem:[#allocation26 + $0x10] sm:$0xff]
        %v4563 = vld [vmem:[#allocation26 + $0x18] sm:$0xff]
        %v4564 = vld [vmem:[#allocation26 + $0x20] sm:$0xff]
        %v4565 = vld [vmem:[#allocation26 + $0x28] sm:$0xff]
        %v4566 = vld [vmem:[#allocation26 + $0x30] sm:$0xff]
        %v4567 = vld [vmem:[#allocation26 + $0x38] sm:$0xff]
        %v4568 = vld [vmem:[#allocation26 + $0x40] sm:$0xff]
        %v4569 = vld [vmem:[#allocation26 + $0x48] sm:$0xff]
        %v4570 = vld [vmem:[#allocation26 + $0x50] sm:$0xff]
        %v4571 = vld [vmem:[#allocation26 + $0x58] sm:$0xff]
        %v4572 = vld [vmem:[#allocation26 + $0x60] sm:$0xff]
        %v4573 = vld [vmem:[#allocation26 + $0x68] sm:$0xff]
        %v4574 = vld [vmem:[#allocation26 + $0x70] sm:$0xff]
        %v4575 = vld [vmem:[#allocation26 + $0x78] sm:$0xff]
        %v4576 = vld [vmem:[#allocation26 + $0x80] sm:$0xff]
        %v4577 = vld [vmem:[#allocation26 + $0x88] sm:$0xff]
        %v4578 = vld [vmem:[#allocation26 + $0x90] sm:$0xff]
        %v4579 = vld [vmem:[#allocation26 + $0x98] sm:$0xff]
        %v4580 = vld [vmem:[#allocation26 + $0xa0] sm:$0xff]
        %v4581 = vld [vmem:[#allocation26 + $0xa8] sm:$0xff]
        %v4582 = vld [vmem:[#allocation26 + $0xb0] sm:$0xff]
        %v4583 = vld [vmem:[#allocation26 + $0xb8] sm:$0xff]
        %v4584 = vld [vmem:[#allocation26 + $0xc0] sm:$0xff]
        %v4585 = vld [vmem:[#allocation26 + $0xc8] sm:$0xff]
        %v4586 = vld [vmem:[#allocation26 + $0xd0] sm:$0xff]
        %v4587 = vld [vmem:[#allocation26 + $0xd8] sm:$0xff]
        %v4588 = vld [vmem:[#allocation26 + $0xe0] sm:$0xff]
        %v4589 = vld [vmem:[#allocation26 + $0xe8] sm:$0xff]
        %v4590 = vld [vmem:[#allocation26 + $0xf0] sm:$0xff]
        %v4591 = vld [vmem:[#allocation26 + $0xf8] sm:$0xff]
        %v4592 = vld [vmem:[#allocation26 + $0x100] sm:$0xff]
        %v4593 = vld [vmem:[#allocation26 + $0x108] sm:$0xff]
        %v4594 = vld [vmem:[#allocation26 + $0x110] sm:$0xff]
        %v4595 = vld [vmem:[#allocation26 + $0x118] sm:$0xff]
        %v4596 = vld [vmem:[#allocation26 + $0x120] sm:$0xff]
        %v4597 = vld [vmem:[#allocation26 + $0x128] sm:$0xff]
        %v4598 = vld [vmem:[#allocation26 + $0x130] sm:$0xff]
        %v4599 = vld [vmem:[#allocation26 + $0x138] sm:$0xff]
        %v4600 = vld [vmem:[#allocation26 + $0x140] sm:$0xff]
        %v4601 = vld [vmem:[#allocation26 + $0x148] sm:$0xff]
        %v4602 = vld [vmem:[#allocation26 + $0x150] sm:$0xff]
        %v4603 = vld [vmem:[#allocation26 + $0x158] sm:$0xff]
        %v4604 = vld [vmem:[#allocation26 + $0x160] sm:$0xff]
        %v4605 = vld [vmem:[#allocation26 + $0x168] sm:$0xff]
        %v4606 = vld [vmem:[#allocation26 + $0x170] sm:$0xff]
        %v4607 = vld [vmem:[#allocation26 + $0x178] sm:$0xff]
        %v4608 = vld [vmem:[#allocation26 + $0x180] sm:$0xff]
        %v4609 = vld [vmem:[#allocation26 + $0x188] sm:$0xff]
        %v4610 = vld [vmem:[#allocation26 + $0x190] sm:$0xff]
        %v4611 = vld [vmem:[#allocation26 + $0x198] sm:$0xff]
        %v4612 = vld [vmem:[#allocation26 + $0x1a0] sm:$0xff]
        %v4613 = vld [vmem:[#allocation26 + $0x1a8] sm:$0xff]
        %v4614 = vld [vmem:[#allocation26 + $0x1b0] sm:$0xff]
        %v4615 = vld [vmem:[#allocation26 + $0x1b8] sm:$0xff]
        %v4616 = vld [vmem:[#allocation26 + $0x1c0] sm:$0xff]
        %v4617 = vld [vmem:[#allocation26 + $0x1c8] sm:$0xff]
        %v4618 = vld [vmem:[#allocation26 + $0x1d0] sm:$0xff]
        %v4619 = vld [vmem:[#allocation26 + $0x1d8] sm:$0xff]
        %v4620 = vld [vmem:[#allocation26 + $0x1e0] sm:$0xff]
        %v4621 = vld [vmem:[#allocation26 + $0x1e8] sm:$0xff]
        %v4622 = vld [vmem:[#allocation26 + $0x1f0] sm:$0xff]
        %v4623 = vld [vmem:[#allocation26 + $0x1f8] sm:$0xff]
        %v4624 = vld [vmem:[#allocation27] sm:$0xff]
        %v4625 = vld [vmem:[#allocation27 + $0x8] sm:$0xff]
        %v4626 = vld [vmem:[#allocation27 + $0x10] sm:$0xff]
        %v4627 = vld [vmem:[#allocation27 + $0x18] sm:$0xff]
        %v4628 = vld [vmem:[#allocation27 + $0x20] sm:$0xff]
        %v4629 = vld [vmem:[#allocation27 + $0x28] sm:$0xff]
        %v4630 = vld [vmem:[#allocation27 + $0x30] sm:$0xff]
        %v4631 = vld [vmem:[#allocation27 + $0x38] sm:$0xff]
        %v4632 = vld [vmem:[#allocation27 + $0x40] sm:$0xff]
        %v4633 = vld [vmem:[#allocation27 + $0x48] sm:$0xff]
        %v4634 = vld [vmem:[#allocation27 + $0x50] sm:$0xff]
        %v4635 = vld [vmem:[#allocation27 + $0x58] sm:$0xff]
        %v4636 = vld [vmem:[#allocation27 + $0x60] sm:$0xff]
        %v4637 = vld [vmem:[#allocation27 + $0x68] sm:$0xff]
        %v4638 = vld [vmem:[#allocation27 + $0x70] sm:$0xff]
        %v4639 = vld [vmem:[#allocation27 + $0x78] sm:$0xff]
        %v4640 = vld [vmem:[#allocation27 + $0x80] sm:$0xff]
        %v4641 = vld [vmem:[#allocation27 + $0x88] sm:$0xff]
        %v4642 = vld [vmem:[#allocation27 + $0x90] sm:$0xff]
        %v4643 = vld [vmem:[#allocation27 + $0x98] sm:$0xff]
        %v4644 = vld [vmem:[#allocation27 + $0xa0] sm:$0xff]
        %v4645 = vld [vmem:[#allocation27 + $0xa8] sm:$0xff]
        %v4646 = vld [vmem:[#allocation27 + $0xb0] sm:$0xff]
        %v4647 = vld [vmem:[#allocation27 + $0xb8] sm:$0xff]
        %v4648 = vld [vmem:[#allocation27 + $0xc0] sm:$0xff]
        %v4649 = vld [vmem:[#allocation27 + $0xc8] sm:$0xff]
        %v4650 = vld [vmem:[#allocation27 + $0xd0] sm:$0xff]
        %v4651 = vld [vmem:[#allocation27 + $0xd8] sm:$0xff]
        %v4652 = vld [vmem:[#allocation27 + $0xe0] sm:$0xff]
        %v4653 = vld [vmem:[#allocation27 + $0xe8] sm:$0xff]
        %v4654 = vld [vmem:[#allocation27 + $0xf0] sm:$0xff]
        %v4655 = vld [vmem:[#allocation27 + $0xf8] sm:$0xff]
        %v4656 = vld [vmem:[#allocation27 + $0x100] sm:$0xff]
        %v4657 = vld [vmem:[#allocation27 + $0x108] sm:$0xff]
        %v4658 = vld [vmem:[#allocation27 + $0x110] sm:$0xff]
        %v4659 = vld [vmem:[#allocation27 + $0x118] sm:$0xff]
        %v4660 = vld [vmem:[#allocation27 + $0x120] sm:$0xff]
        %v4661 = vld [vmem:[#allocation27 + $0x128] sm:$0xff]
        %v4662 = vld [vmem:[#allocation27 + $0x130] sm:$0xff]
        %v4663 = vld [vmem:[#allocation27 + $0x138] sm:$0xff]
        %v4664 = vld [vmem:[#allocation27 + $0x140] sm:$0xff]
        %v4665 = vld [vmem:[#allocation27 + $0x148] sm:$0xff]
        %v4666 = vld [vmem:[#allocation27 + $0x150] sm:$0xff]
        %v4667 = vld [vmem:[#allocation27 + $0x158] sm:$0xff]
        %v4668 = vld [vmem:[#allocation27 + $0x160] sm:$0xff]
        %v4669 = vld [vmem:[#allocation27 + $0x168] sm:$0xff]
        %v4670 = vld [vmem:[#allocation27 + $0x170] sm:$0xff]
        %v4671 = vld [vmem:[#allocation27 + $0x178] sm:$0xff]
        %v4672 = vld [vmem:[#allocation27 + $0x180] sm:$0xff]
        %v4673 = vld [vmem:[#allocation27 + $0x188] sm:$0xff]
        %v4674 = vld [vmem:[#allocation27 + $0x190] sm:$0xff]
        %v4675 = vld [vmem:[#allocation27 + $0x198] sm:$0xff]
        %v4676 = vld [vmem:[#allocation27 + $0x1a0] sm:$0xff]
        %v4677 = vld [vmem:[#allocation27 + $0x1a8] sm:$0xff]
        %v4678 = vld [vmem:[#allocation27 + $0x1b0] sm:$0xff]
        %v4679 = vld [vmem:[#allocation27 + $0x1b8] sm:$0xff]
        %v4680 = vld [vmem:[#allocation27 + $0x1c0] sm:$0xff]
        %v4681 = vld [vmem:[#allocation27 + $0x1c8] sm:$0xff]
        %v4682 = vld [vmem:[#allocation27 + $0x1d0] sm:$0xff]
        %v4683 = vld [vmem:[#allocation27 + $0x1d8] sm:$0xff]
        %v4684 = vld [vmem:[#allocation27 + $0x1e0] sm:$0xff]
        %v4685 = vld [vmem:[#allocation27 + $0x1e8] sm:$0xff]
        %v4686 = vld [vmem:[#allocation27 + $0x1f0] sm:$0xff]
        %v4687 = vld [vmem:[#allocation27 + $0x1f8] sm:$0xff]
        %v4688 = vpack.c.bf16 %v4558, %v4556
        %v4689 = vpack.c.bf16 %v4559, %v4557
        %v4690 = vld [vmem:[%s19] sm:$0xf]
        %v4692 = vperm.slane %v4690, 0
        %v4693 = vperm.slane %v4690, 1
        %v4694 = vperm.slane %v4690, 2
        %v4695 = vperm.slane %v4690, 3
        %v4764 = vunpack.c.l.b16 %v4560
        %v4765 = vunpack.c.h.b16 %v4560
        %v4766 = vunpack.c.l.b16 %v4561
        %v4767 = vunpack.c.h.b16 %v4561
        %v4768 = vunpack.c.l.b16 %v4562
        %v4769 = vunpack.c.h.b16 %v4562
        %v4770 = vunpack.c.l.b16 %v4563
        %v4771 = vunpack.c.h.b16 %v4563
        %v4772 = vunpack.c.l.b16 %v4564
        %v4773 = vunpack.c.h.b16 %v4564
        %v4774 = vunpack.c.l.b16 %v4565
        %v4775 = vunpack.c.h.b16 %v4565
        %v4776 = vunpack.c.l.b16 %v4566
        %v4777 = vunpack.c.h.b16 %v4566
        %v4778 = vunpack.c.l.b16 %v4567
        %v4779 = vunpack.c.h.b16 %v4567
        %v4780 = vunpack.c.l.b16 %v4568
        %v4781 = vunpack.c.h.b16 %v4568
        %v4782 = vunpack.c.l.b16 %v4569
        %v4783 = vunpack.c.h.b16 %v4569
        %v4784 = vunpack.c.l.b16 %v4570
        %v4785 = vunpack.c.h.b16 %v4570
        %v4786 = vunpack.c.l.b16 %v4571
        %v4787 = vunpack.c.h.b16 %v4571
        %v4788 = vunpack.c.l.b16 %v4572
        %v4789 = vunpack.c.h.b16 %v4572
        %v4790 = vunpack.c.l.b16 %v4573
        %v4791 = vunpack.c.h.b16 %v4573
        %v4792 = vunpack.c.l.b16 %v4574
        %v4793 = vunpack.c.h.b16 %v4574
        %v4794 = vunpack.c.l.b16 %v4575
        %v4795 = vunpack.c.h.b16 %v4575
        %v4796 = vunpack.c.l.b16 %v4576
        %v4797 = vunpack.c.h.b16 %v4576
        %v4798 = vunpack.c.l.b16 %v4577
        %v4799 = vunpack.c.h.b16 %v4577
        %v4800 = vunpack.c.l.b16 %v4578
        %v4801 = vunpack.c.h.b16 %v4578
        %v4802 = vunpack.c.l.b16 %v4579
        %v4803 = vunpack.c.h.b16 %v4579
        %v4804 = vunpack.c.l.b16 %v4580
        %v4805 = vunpack.c.h.b16 %v4580
        %v4806 = vunpack.c.l.b16 %v4581
        %v4807 = vunpack.c.h.b16 %v4581
        %v4808 = vunpack.c.l.b16 %v4582
        %v4809 = vunpack.c.h.b16 %v4582
        %v4810 = vunpack.c.l.b16 %v4583
        %v4811 = vunpack.c.h.b16 %v4583
        %v4812 = vunpack.c.l.b16 %v4584
        %v4813 = vunpack.c.h.b16 %v4584
        %v4814 = vunpack.c.l.b16 %v4585
        %v4815 = vunpack.c.h.b16 %v4585
        %v4816 = vunpack.c.l.b16 %v4586
        %v4817 = vunpack.c.h.b16 %v4586
        %v4818 = vunpack.c.l.b16 %v4587
        %v4819 = vunpack.c.h.b16 %v4587
        %v4820 = vunpack.c.l.b16 %v4588
        %v4821 = vunpack.c.h.b16 %v4588
        %v4822 = vunpack.c.l.b16 %v4589
        %v4823 = vunpack.c.h.b16 %v4589
        %v4824 = vunpack.c.l.b16 %v4590
        %v4825 = vunpack.c.h.b16 %v4590
        %v4826 = vunpack.c.l.b16 %v4591
        %v4827 = vunpack.c.h.b16 %v4591
        %v4828 = vunpack.c.l.b16 %v4592
        %v4829 = vunpack.c.h.b16 %v4592
        %v4830 = vunpack.c.l.b16 %v4593
        %v4831 = vunpack.c.h.b16 %v4593
        %v4832 = vunpack.c.l.b16 %v4594
        %v4833 = vunpack.c.h.b16 %v4594
        %v4834 = vunpack.c.l.b16 %v4595
        %v4835 = vunpack.c.h.b16 %v4595
        %v4836 = vunpack.c.l.b16 %v4596
        %v4837 = vunpack.c.h.b16 %v4596
        %v4838 = vunpack.c.l.b16 %v4597
        %v4839 = vunpack.c.h.b16 %v4597
        %v4840 = vunpack.c.l.b16 %v4598
        %v4841 = vunpack.c.h.b16 %v4598
        %v4842 = vunpack.c.l.b16 %v4599
        %v4843 = vunpack.c.h.b16 %v4599
        %v4844 = vunpack.c.l.b16 %v4600
        %v4845 = vunpack.c.h.b16 %v4600
        %v4846 = vunpack.c.l.b16 %v4601
        %v4847 = vunpack.c.h.b16 %v4601
        %v4848 = vunpack.c.l.b16 %v4602
        %v4849 = vunpack.c.h.b16 %v4602
        %v4850 = vunpack.c.l.b16 %v4603
        %v4851 = vunpack.c.h.b16 %v4603
        %v4852 = vunpack.c.l.b16 %v4604
        %v4853 = vunpack.c.h.b16 %v4604
        %v4854 = vunpack.c.l.b16 %v4605
        %v4855 = vunpack.c.h.b16 %v4605
        %v4856 = vunpack.c.l.b16 %v4606
        %v4857 = vunpack.c.h.b16 %v4606
        %v4858 = vunpack.c.l.b16 %v4607
        %v4859 = vunpack.c.h.b16 %v4607
        %v4860 = vunpack.c.l.b16 %v4608
        %v4861 = vunpack.c.h.b16 %v4608
        %v4862 = vunpack.c.l.b16 %v4609
        %v4863 = vunpack.c.h.b16 %v4609
        %v4864 = vunpack.c.l.b16 %v4610
        %v4865 = vunpack.c.h.b16 %v4610
        %v4866 = vunpack.c.l.b16 %v4611
        %v4867 = vunpack.c.h.b16 %v4611
        %v4868 = vunpack.c.l.b16 %v4612
        %v4869 = vunpack.c.h.b16 %v4612
        %v4870 = vunpack.c.l.b16 %v4613
        %v4871 = vunpack.c.h.b16 %v4613
        %v4872 = vunpack.c.l.b16 %v4614
        %v4873 = vunpack.c.h.b16 %v4614
        %v4874 = vunpack.c.l.b16 %v4615
        %v4875 = vunpack.c.h.b16 %v4615
        %v4876 = vunpack.c.l.b16 %v4616
        %v4877 = vunpack.c.h.b16 %v4616
        %v4878 = vunpack.c.l.b16 %v4617
        %v4879 = vunpack.c.h.b16 %v4617
        %v4880 = vunpack.c.l.b16 %v4618
        %v4881 = vunpack.c.h.b16 %v4618
        %v4882 = vunpack.c.l.b16 %v4619
        %v4883 = vunpack.c.h.b16 %v4619
        %v4884 = vunpack.c.l.b16 %v4620
        %v4885 = vunpack.c.h.b16 %v4620
        %v4886 = vunpack.c.l.b16 %v4621
        %v4887 = vunpack.c.h.b16 %v4621
        %v4888 = vunpack.c.l.b16 %v4622
        %v4889 = vunpack.c.h.b16 %v4622
        %v4890 = vunpack.c.l.b16 %v4623
        %v4891 = vunpack.c.h.b16 %v4623
        %v4892 = vpack.c.b16 %v4768, %v4764
        %v4893 = vpack.c.b16 %v4769, %v4765
        %v4894 = vpack.c.b16 %v4770, %v4766
        %v4895 = vpack.c.b16 %v4771, %v4767
        %v4896 = vpack.c.b16 %v4776, %v4772
        %v4897 = vpack.c.b16 %v4777, %v4773
        %v4898 = vpack.c.b16 %v4778, %v4774
        %v4899 = vpack.c.b16 %v4779, %v4775
        %v4900 = vpack.c.b16 %v4784, %v4780
        %v4901 = vpack.c.b16 %v4785, %v4781
        %v4902 = vpack.c.b16 %v4786, %v4782
        %v4903 = vpack.c.b16 %v4787, %v4783
        %v4904 = vpack.c.b16 %v4792, %v4788
        %v4905 = vpack.c.b16 %v4793, %v4789
        %v4906 = vpack.c.b16 %v4794, %v4790
        %v4907 = vpack.c.b16 %v4795, %v4791
        %v4908 = vpack.c.b16 %v4800, %v4796
        %v4909 = vpack.c.b16 %v4801, %v4797
        %v4910 = vpack.c.b16 %v4802, %v4798
        %v4911 = vpack.c.b16 %v4803, %v4799
        %v4912 = vpack.c.b16 %v4808, %v4804
        %v4913 = vpack.c.b16 %v4809, %v4805
        %v4914 = vpack.c.b16 %v4810, %v4806
        %v4915 = vpack.c.b16 %v4811, %v4807
        %v4916 = vpack.c.b16 %v4816, %v4812
        %v4917 = vpack.c.b16 %v4817, %v4813
        %v4918 = vpack.c.b16 %v4818, %v4814
        %v4919 = vpack.c.b16 %v4819, %v4815
        %v4920 = vpack.c.b16 %v4824, %v4820
        %v4921 = vpack.c.b16 %v4825, %v4821
        %v4922 = vpack.c.b16 %v4826, %v4822
        %v4923 = vpack.c.b16 %v4827, %v4823
        %v4924 = vpack.c.b16 %v4832, %v4828
        %v4925 = vpack.c.b16 %v4833, %v4829
        %v4926 = vpack.c.b16 %v4834, %v4830
        %v4927 = vpack.c.b16 %v4835, %v4831
        %v4928 = vpack.c.b16 %v4840, %v4836
        %v4929 = vpack.c.b16 %v4841, %v4837
        %v4930 = vpack.c.b16 %v4842, %v4838
        %v4931 = vpack.c.b16 %v4843, %v4839
        %v4932 = vpack.c.b16 %v4848, %v4844
        %v4933 = vpack.c.b16 %v4849, %v4845
        %v4934 = vpack.c.b16 %v4850, %v4846
        %v4935 = vpack.c.b16 %v4851, %v4847
        %v4936 = vpack.c.b16 %v4856, %v4852
        %v4937 = vpack.c.b16 %v4857, %v4853
        %v4938 = vpack.c.b16 %v4858, %v4854
        %v4939 = vpack.c.b16 %v4859, %v4855
        %v4940 = vpack.c.b16 %v4864, %v4860
        %v4941 = vpack.c.b16 %v4865, %v4861
        %v4942 = vpack.c.b16 %v4866, %v4862
        %v4943 = vpack.c.b16 %v4867, %v4863
        %v4944 = vpack.c.b16 %v4872, %v4868
        %v4945 = vpack.c.b16 %v4873, %v4869
        %v4946 = vpack.c.b16 %v4874, %v4870
        %v4947 = vpack.c.b16 %v4875, %v4871
        %v4948 = vpack.c.b16 %v4880, %v4876
        %v4949 = vpack.c.b16 %v4881, %v4877
        %v4950 = vpack.c.b16 %v4882, %v4878
        %v4951 = vpack.c.b16 %v4883, %v4879
        %v4952 = vpack.c.b16 %v4888, %v4884
        %v4953 = vpack.c.b16 %v4889, %v4885
        %v4954 = vpack.c.b16 %v4890, %v4886
        %v4955 = vpack.c.b16 %v4891, %v4887
        %5020 = vmatpush.bf16.msra.mxu0 %v4920
        %5021 = vmatpush.bf16.msra.mxu0 %v4916
        %5022 = vmatpush.bf16.msra.mxu0 %v4912
        %5023 = vmatpush.bf16.msra.mxu0 %v4908
        %5024 = vmatpush.bf16.msra.mxu0 %v4904
        %5025 = vmatpush.bf16.msra.mxu0 %v4900
        %5026 = vmatpush.bf16.msra.mxu0 %v4896
        %5027 = vmatpush.bf16.msra.mxu0 %v4892
        %5028 = vmatmul.bf16.gmra.mxu0 %v4688
        %v5029 = vpop.f32.mrf.mxu0
        %v5030 = vadd.f32 %v4692, %v5029
        %v5031 = vpop.f32.mrf.mxu0
        %v5032 = vadd.f32 %v4692, %v5031
        %5033 = vdwg.mxu0
        %5034 = vmatpush.bf16.msra.mxu0 %v4952
        %5035 = vmatpush.bf16.msra.mxu0 %v4948
        %5036 = vmatpush.bf16.msra.mxu0 %v4944
        %5037 = vmatpush.bf16.msra.mxu0 %v4940
        %5038 = vmatpush.bf16.msra.mxu0 %v4936
        %5039 = vmatpush.bf16.msra.mxu0 %v4932
        %5040 = vmatpush.bf16.msra.mxu0 %v4928
        %5041 = vmatpush.bf16.msra.mxu0 %v4924
        %5042 = vmatmul.bf16.gmra.mxu0 %v4689
        %v5043 = vpop.f32.mrf.mxu0
        %v5044 = vadd.f32 %v5030, %v5043
        %v5045 = vpop.f32.mrf.mxu0
        %v5046 = vadd.f32 %v5032, %v5045
        %5047 = vdwg.mxu0
        %5048 = vmatpush.bf16.msra.mxu0 %v4921
        %5049 = vmatpush.bf16.msra.mxu0 %v4917
        %5050 = vmatpush.bf16.msra.mxu0 %v4913
        %5051 = vmatpush.bf16.msra.mxu0 %v4909
        %5052 = vmatpush.bf16.msra.mxu0 %v4905
        %5053 = vmatpush.bf16.msra.mxu0 %v4901
        %5054 = vmatpush.bf16.msra.mxu0 %v4897
        %5055 = vmatpush.bf16.msra.mxu0 %v4893
        %5056 = vmatmul.bf16.gmra.mxu0 %v4688
        %v5057 = vpop.f32.mrf.mxu0
        %v5058 = vadd.f32 %v4693, %v5057
        %v5059 = vpop.f32.mrf.mxu0
        %v5060 = vadd.f32 %v4693, %v5059
        %5061 = vdwg.mxu0
        %5062 = vmatpush.bf16.msra.mxu0 %v4953
        %5063 = vmatpush.bf16.msra.mxu0 %v4949
        %5064 = vmatpush.bf16.msra.mxu0 %v4945
        %5065 = vmatpush.bf16.msra.mxu0 %v4941
        %5066 = vmatpush.bf16.msra.mxu0 %v4937
        %5067 = vmatpush.bf16.msra.mxu0 %v4933
        %5068 = vmatpush.bf16.msra.mxu0 %v4929
        %5069 = vmatpush.bf16.msra.mxu0 %v4925
        %5070 = vmatmul.bf16.gmra.mxu0 %v4689
        %v5071 = vpop.f32.mrf.mxu0
        %v5072 = vadd.f32 %v5058, %v5071
        %v5073 = vpop.f32.mrf.mxu0
        %v5074 = vadd.f32 %v5060, %v5073
        %5075 = vdwg.mxu0
        %5076 = vmatpush.bf16.msra.mxu0 %v4922
        %5077 = vmatpush.bf16.msra.mxu0 %v4918
        %5078 = vmatpush.bf16.msra.mxu0 %v4914
        %5079 = vmatpush.bf16.msra.mxu0 %v4910
        %5080 = vmatpush.bf16.msra.mxu0 %v4906
        %5081 = vmatpush.bf16.msra.mxu0 %v4902
        %5082 = vmatpush.bf16.msra.mxu0 %v4898
        %5083 = vmatpush.bf16.msra.mxu0 %v4894
        %5084 = vmatmul.bf16.gmra.mxu0 %v4688
        %v5085 = vpop.f32.mrf.mxu0
        %v5086 = vadd.f32 %v4694, %v5085
        %v5087 = vpop.f32.mrf.mxu0
        %v5088 = vadd.f32 %v4694, %v5087
        %5089 = vdwg.mxu0
        %5090 = vmatpush.bf16.msra.mxu0 %v4954
        %5091 = vmatpush.bf16.msra.mxu0 %v4950
        %5092 = vmatpush.bf16.msra.mxu0 %v4946
        %5093 = vmatpush.bf16.msra.mxu0 %v4942
        %5094 = vmatpush.bf16.msra.mxu0 %v4938
        %5095 = vmatpush.bf16.msra.mxu0 %v4934
        %5096 = vmatpush.bf16.msra.mxu0 %v4930
        %5097 = vmatpush.bf16.msra.mxu0 %v4926
        %5098 = vmatmul.bf16.gmra.mxu0 %v4689
        %v5099 = vpop.f32.mrf.mxu0
        %v5100 = vadd.f32 %v5086, %v5099
        %v5101 = vpop.f32.mrf.mxu0
        %v5102 = vadd.f32 %v5088, %v5101
        %5103 = vdwg.mxu0
        %5104 = vmatpush.bf16.msra.mxu0 %v4923
        %5105 = vmatpush.bf16.msra.mxu0 %v4919
        %5106 = vmatpush.bf16.msra.mxu0 %v4915
        %5107 = vmatpush.bf16.msra.mxu0 %v4911
        %5108 = vmatpush.bf16.msra.mxu0 %v4907
        %5109 = vmatpush.bf16.msra.mxu0 %v4903
        %5110 = vmatpush.bf16.msra.mxu0 %v4899
        %5111 = vmatpush.bf16.msra.mxu0 %v4895
        %5112 = vmatmul.bf16.gmra.mxu0 %v4688
        %v5113 = vpop.f32.mrf.mxu0
        %v5114 = vadd.f32 %v4695, %v5113
        %v5115 = vpop.f32.mrf.mxu0
        %v5116 = vadd.f32 %v4695, %v5115
        %5117 = vdwg.mxu0
        %5118 = vmatpush.bf16.msra.mxu0 %v4955
        %5119 = vmatpush.bf16.msra.mxu0 %v4951
        %5120 = vmatpush.bf16.msra.mxu0 %v4947
        %5121 = vmatpush.bf16.msra.mxu0 %v4943
        %5122 = vmatpush.bf16.msra.mxu0 %v4939
        %5123 = vmatpush.bf16.msra.mxu0 %v4935
        %5124 = vmatpush.bf16.msra.mxu0 %v4931
        %5125 = vmatpush.bf16.msra.mxu0 %v4927
        %5126 = vmatmul.bf16.gmra.mxu0 %v4689
        %v5127 = vpop.f32.mrf.mxu0
        %v5128 = vadd.f32 %v5114, %v5127
        %v5129 = vpop.f32.mrf.mxu0
        %v5130 = vadd.f32 %v5116, %v5129
        %5131 = vdwg.mxu0
        %v5132 = vmax.f32 %v5044, 0.0
        %v5133 = vmax.f32 %v5072, 0.0
        %v5134 = vmax.f32 %v5100, 0.0
        %v5135 = vmax.f32 %v5128, 0.0
        %v5136 = vmax.f32 %v5046, 0.0
        %v5137 = vmax.f32 %v5074, 0.0
        %v5138 = vmax.f32 %v5102, 0.0
        %v5139 = vmax.f32 %v5130, 0.0
        %v5140 = vpack.c.bf16 %v5136, %v5132
        %v5141 = vpack.c.bf16 %v5137, %v5133
        %v5142 = vpack.c.bf16 %v5138, %v5134
        %v5143 = vpack.c.bf16 %v5139, %v5135
        %v5144 = vld [vmem:[%s21] sm:$0x3]
        %v5146 = vperm.slane %v5144, 0
        %v5147 = vperm.slane %v5144, 1
        %v5214 = vunpack.c.l.b16 %v4624
        %v5215 = vunpack.c.h.b16 %v4624
        %v5216 = vunpack.c.l.b16 %v4625
        %v5217 = vunpack.c.h.b16 %v4625
        %v5218 = vunpack.c.l.b16 %v4626
        %v5219 = vunpack.c.h.b16 %v4626
        %v5220 = vunpack.c.l.b16 %v4627
        %v5221 = vunpack.c.h.b16 %v4627
        %v5222 = vunpack.c.l.b16 %v4628
        %v5223 = vunpack.c.h.b16 %v4628
        %v5224 = vunpack.c.l.b16 %v4629
        %v5225 = vunpack.c.h.b16 %v4629
        %v5226 = vunpack.c.l.b16 %v4630
        %v5227 = vunpack.c.h.b16 %v4630
        %v5228 = vunpack.c.l.b16 %v4631
        %v5229 = vunpack.c.h.b16 %v4631
        %v5230 = vunpack.c.l.b16 %v4632
        %v5231 = vunpack.c.h.b16 %v4632
        %v5232 = vunpack.c.l.b16 %v4633
        %v5233 = vunpack.c.h.b16 %v4633
        %v5234 = vunpack.c.l.b16 %v4634
        %v5235 = vunpack.c.h.b16 %v4634
        %v5236 = vunpack.c.l.b16 %v4635
        %v5237 = vunpack.c.h.b16 %v4635
        %v5238 = vunpack.c.l.b16 %v4636
        %v5239 = vunpack.c.h.b16 %v4636
        %v5240 = vunpack.c.l.b16 %v4637
        %v5241 = vunpack.c.h.b16 %v4637
        %v5242 = vunpack.c.l.b16 %v4638
        %v5243 = vunpack.c.h.b16 %v4638
        %v5244 = vunpack.c.l.b16 %v4639
        %v5245 = vunpack.c.h.b16 %v4639
        %v5246 = vunpack.c.l.b16 %v4640
        %v5247 = vunpack.c.h.b16 %v4640
        %v5248 = vunpack.c.l.b16 %v4641
        %v5249 = vunpack.c.h.b16 %v4641
        %v5250 = vunpack.c.l.b16 %v4642
        %v5251 = vunpack.c.h.b16 %v4642
        %v5252 = vunpack.c.l.b16 %v4643
        %v5253 = vunpack.c.h.b16 %v4643
        %v5254 = vunpack.c.l.b16 %v4644
        %v5255 = vunpack.c.h.b16 %v4644
        %v5256 = vunpack.c.l.b16 %v4645
        %v5257 = vunpack.c.h.b16 %v4645
        %v5258 = vunpack.c.l.b16 %v4646
        %v5259 = vunpack.c.h.b16 %v4646
        %v5260 = vunpack.c.l.b16 %v4647
        %v5261 = vunpack.c.h.b16 %v4647
        %v5262 = vunpack.c.l.b16 %v4648
        %v5263 = vunpack.c.h.b16 %v4648
        %v5264 = vunpack.c.l.b16 %v4649
        %v5265 = vunpack.c.h.b16 %v4649
        %v5266 = vunpack.c.l.b16 %v4650
        %v5267 = vunpack.c.h.b16 %v4650
        %v5268 = vunpack.c.l.b16 %v4651
        %v5269 = vunpack.c.h.b16 %v4651
        %v5270 = vunpack.c.l.b16 %v4652
        %v5271 = vunpack.c.h.b16 %v4652
        %v5272 = vunpack.c.l.b16 %v4653
        %v5273 = vunpack.c.h.b16 %v4653
        %v5274 = vunpack.c.l.b16 %v4654
        %v5275 = vunpack.c.h.b16 %v4654
        %v5276 = vunpack.c.l.b16 %v4655
        %v5277 = vunpack.c.h.b16 %v4655
        %v5278 = vunpack.c.l.b16 %v4656
        %v5279 = vunpack.c.h.b16 %v4656
        %v5280 = vunpack.c.l.b16 %v4657
        %v5281 = vunpack.c.h.b16 %v4657
        %v5282 = vunpack.c.l.b16 %v4658
        %v5283 = vunpack.c.h.b16 %v4658
        %v5284 = vunpack.c.l.b16 %v4659
        %v5285 = vunpack.c.h.b16 %v4659
        %v5286 = vunpack.c.l.b16 %v4660
        %v5287 = vunpack.c.h.b16 %v4660
        %v5288 = vunpack.c.l.b16 %v4661
        %v5289 = vunpack.c.h.b16 %v4661
        %v5290 = vunpack.c.l.b16 %v4662
        %v5291 = vunpack.c.h.b16 %v4662
        %v5292 = vunpack.c.l.b16 %v4663
        %v5293 = vunpack.c.h.b16 %v4663
        %v5294 = vunpack.c.l.b16 %v4664
        %v5295 = vunpack.c.h.b16 %v4664
        %v5296 = vunpack.c.l.b16 %v4665
        %v5297 = vunpack.c.h.b16 %v4665
        %v5298 = vunpack.c.l.b16 %v4666
        %v5299 = vunpack.c.h.b16 %v4666
        %v5300 = vunpack.c.l.b16 %v4667
        %v5301 = vunpack.c.h.b16 %v4667
        %v5302 = vunpack.c.l.b16 %v4668
        %v5303 = vunpack.c.h.b16 %v4668
        %v5304 = vunpack.c.l.b16 %v4669
        %v5305 = vunpack.c.h.b16 %v4669
        %v5306 = vunpack.c.l.b16 %v4670
        %v5307 = vunpack.c.h.b16 %v4670
        %v5308 = vunpack.c.l.b16 %v4671
        %v5309 = vunpack.c.h.b16 %v4671
        %v5310 = vunpack.c.l.b16 %v4672
        %v5311 = vunpack.c.h.b16 %v4672
        %v5312 = vunpack.c.l.b16 %v4673
        %v5313 = vunpack.c.h.b16 %v4673
        %v5314 = vunpack.c.l.b16 %v4674
        %v5315 = vunpack.c.h.b16 %v4674
        %v5316 = vunpack.c.l.b16 %v4675
        %v5317 = vunpack.c.h.b16 %v4675
        %v5318 = vunpack.c.l.b16 %v4676
        %v5319 = vunpack.c.h.b16 %v4676
        %v5320 = vunpack.c.l.b16 %v4677
        %v5321 = vunpack.c.h.b16 %v4677
        %v5322 = vunpack.c.l.b16 %v4678
        %v5323 = vunpack.c.h.b16 %v4678
        %v5324 = vunpack.c.l.b16 %v4679
        %v5325 = vunpack.c.h.b16 %v4679
        %v5326 = vunpack.c.l.b16 %v4680
        %v5327 = vunpack.c.h.b16 %v4680
        %v5328 = vunpack.c.l.b16 %v4681
        %v5329 = vunpack.c.h.b16 %v4681
        %v5330 = vunpack.c.l.b16 %v4682
        %v5331 = vunpack.c.h.b16 %v4682
        %v5332 = vunpack.c.l.b16 %v4683
        %v5333 = vunpack.c.h.b16 %v4683
        %v5334 = vunpack.c.l.b16 %v4684
        %v5335 = vunpack.c.h.b16 %v4684
        %v5336 = vunpack.c.l.b16 %v4685
        %v5337 = vunpack.c.h.b16 %v4685
        %v5338 = vunpack.c.l.b16 %v4686
        %v5339 = vunpack.c.h.b16 %v4686
        %v5340 = vunpack.c.l.b16 %v4687
        %v5341 = vunpack.c.h.b16 %v4687
        %v5342 = vpack.c.b16 %v5216, %v5214
        %v5343 = vpack.c.b16 %v5217, %v5215
        %v5344 = vpack.c.b16 %v5220, %v5218
        %v5345 = vpack.c.b16 %v5221, %v5219
        %v5346 = vpack.c.b16 %v5224, %v5222
        %v5347 = vpack.c.b16 %v5225, %v5223
        %v5348 = vpack.c.b16 %v5228, %v5226
        %v5349 = vpack.c.b16 %v5229, %v5227
        %v5350 = vpack.c.b16 %v5232, %v5230
        %v5351 = vpack.c.b16 %v5233, %v5231
        %v5352 = vpack.c.b16 %v5236, %v5234
        %v5353 = vpack.c.b16 %v5237, %v5235
        %v5354 = vpack.c.b16 %v5240, %v5238
        %v5355 = vpack.c.b16 %v5241, %v5239
        %v5356 = vpack.c.b16 %v5244, %v5242
        %v5357 = vpack.c.b16 %v5245, %v5243
        %v5358 = vpack.c.b16 %v5248, %v5246
        %v5359 = vpack.c.b16 %v5249, %v5247
        %v5360 = vpack.c.b16 %v5252, %v5250
        %v5361 = vpack.c.b16 %v5253, %v5251
        %v5362 = vpack.c.b16 %v5256, %v5254
        %v5363 = vpack.c.b16 %v5257, %v5255
        %v5364 = vpack.c.b16 %v5260, %v5258
        %v5365 = vpack.c.b16 %v5261, %v5259
        %v5366 = vpack.c.b16 %v5264, %v5262
        %v5367 = vpack.c.b16 %v5265, %v5263
        %v5368 = vpack.c.b16 %v5268, %v5266
        %v5369 = vpack.c.b16 %v5269, %v5267
        %v5370 = vpack.c.b16 %v5272, %v5270
        %v5371 = vpack.c.b16 %v5273, %v5271
        %v5372 = vpack.c.b16 %v5276, %v5274
        %v5373 = vpack.c.b16 %v5277, %v5275
        %v5374 = vpack.c.b16 %v5280, %v5278
        %v5375 = vpack.c.b16 %v5281, %v5279
        %v5376 = vpack.c.b16 %v5284, %v5282
        %v5377 = vpack.c.b16 %v5285, %v5283
        %v5378 = vpack.c.b16 %v5288, %v5286
        %v5379 = vpack.c.b16 %v5289, %v5287
        %v5380 = vpack.c.b16 %v5292, %v5290
        %v5381 = vpack.c.b16 %v5293, %v5291
        %v5382 = vpack.c.b16 %v5296, %v5294
        %v5383 = vpack.c.b16 %v5297, %v5295
        %v5384 = vpack.c.b16 %v5300, %v5298
        %v5385 = vpack.c.b16 %v5301, %v5299
        %v5386 = vpack.c.b16 %v5304, %v5302
        %v5387 = vpack.c.b16 %v5305, %v5303
        %v5388 = vpack.c.b16 %v5308, %v5306
        %v5389 = vpack.c.b16 %v5309, %v5307
        %v5390 = vpack.c.b16 %v5312, %v5310
        %v5391 = vpack.c.b16 %v5313, %v5311
        %v5392 = vpack.c.b16 %v5316, %v5314
        %v5393 = vpack.c.b16 %v5317, %v5315
        %v5394 = vpack.c.b16 %v5320, %v5318
        %v5395 = vpack.c.b16 %v5321, %v5319
        %v5396 = vpack.c.b16 %v5324, %v5322
        %v5397 = vpack.c.b16 %v5325, %v5323
        %v5398 = vpack.c.b16 %v5328, %v5326
        %v5399 = vpack.c.b16 %v5329, %v5327
        %v5400 = vpack.c.b16 %v5332, %v5330
        %v5401 = vpack.c.b16 %v5333, %v5331
        %v5402 = vpack.c.b16 %v5336, %v5334
        %v5403 = vpack.c.b16 %v5337, %v5335
        %v5404 = vpack.c.b16 %v5340, %v5338
        %v5405 = vpack.c.b16 %v5341, %v5339
        %5470 = vmatpush.bf16.msra.mxu0 %v5356
        %5471 = vmatpush.bf16.msra.mxu0 %v5354
        %5472 = vmatpush.bf16.msra.mxu0 %v5352
        %5473 = vmatpush.bf16.msra.mxu0 %v5350
        %5474 = vmatpush.bf16.msra.mxu0 %v5348
        %5475 = vmatpush.bf16.msra.mxu0 %v5346
        %5476 = vmatpush.bf16.msra.mxu0 %v5344
        %5477 = vmatpush.bf16.msra.mxu0 %v5342
        %5478 = vmatmul.bf16.gmra.mxu0 %v5140
        %v5479 = vpop.f32.mrf.mxu0
        %v5480 = vadd.f32 %v5146, %v5479
        %v5481 = vpop.f32.mrf.mxu0
        %v5482 = vadd.f32 %v5146, %v5481
        %5483 = vdwg.mxu0
        %5484 = vmatpush.bf16.msra.mxu0 %v5372
        %5485 = vmatpush.bf16.msra.mxu0 %v5370
        %5486 = vmatpush.bf16.msra.mxu0 %v5368
        %5487 = vmatpush.bf16.msra.mxu0 %v5366
        %5488 = vmatpush.bf16.msra.mxu0 %v5364
        %5489 = vmatpush.bf16.msra.mxu0 %v5362
        %5490 = vmatpush.bf16.msra.mxu0 %v5360
        %5491 = vmatpush.bf16.msra.mxu0 %v5358
        %5492 = vmatmul.bf16.gmra.mxu0 %v5141
        %v5493 = vpop.f32.mrf.mxu0
        %v5494 = vadd.f32 %v5480, %v5493
        %v5495 = vpop.f32.mrf.mxu0
        %v5496 = vadd.f32 %v5482, %v5495
        %5497 = vdwg.mxu0
        %5498 = vmatpush.bf16.msra.mxu0 %v5388
        %5499 = vmatpush.bf16.msra.mxu0 %v5386
        %5500 = vmatpush.bf16.msra.mxu0 %v5384
        %5501 = vmatpush.bf16.msra.mxu0 %v5382
        %5502 = vmatpush.bf16.msra.mxu0 %v5380
        %5503 = vmatpush.bf16.msra.mxu0 %v5378
        %5504 = vmatpush.bf16.msra.mxu0 %v5376
        %5505 = vmatpush.bf16.msra.mxu0 %v5374
        %5506 = vmatmul.bf16.gmra.mxu0 %v5142
        %v5507 = vpop.f32.mrf.mxu0
        %v5508 = vadd.f32 %v5494, %v5507
        %v5509 = vpop.f32.mrf.mxu0
        %v5510 = vadd.f32 %v5496, %v5509
        %5511 = vdwg.mxu0
        %5512 = vmatpush.bf16.msra.mxu0 %v5404
        %5513 = vmatpush.bf16.msra.mxu0 %v5402
        %5514 = vmatpush.bf16.msra.mxu0 %v5400
        %5515 = vmatpush.bf16.msra.mxu0 %v5398
        %5516 = vmatpush.bf16.msra.mxu0 %v5396
        %5517 = vmatpush.bf16.msra.mxu0 %v5394
        %5518 = vmatpush.bf16.msra.mxu0 %v5392
        %5519 = vmatpush.bf16.msra.mxu0 %v5390
        %5520 = vmatmul.bf16.gmra.mxu0 %v5143
        %v5521 = vpop.f32.mrf.mxu0
        %v5522 = vadd.f32 %v5508, %v5521
        %v5523 = vpop.f32.mrf.mxu0
        %v5524 = vadd.f32 %v5510, %v5523
        %5525 = vdwg.mxu0
        %5526 = vmatpush.bf16.msra.mxu0 %v5357
        %5527 = vmatpush.bf16.msra.mxu0 %v5355
        %5528 = vmatpush.bf16.msra.mxu0 %v5353
        %5529 = vmatpush.bf16.msra.mxu0 %v5351
        %5530 = vmatpush.bf16.msra.mxu0 %v5349
        %5531 = vmatpush.bf16.msra.mxu0 %v5347
        %5532 = vmatpush.bf16.msra.mxu0 %v5345
        %5533 = vmatpush.bf16.msra.mxu0 %v5343
        %5534 = vmatmul.bf16.gmra.mxu0 %v5140
        %v5535 = vpop.f32.mrf.mxu0
        %v5536 = vadd.f32 %v5147, %v5535
        %v5537 = vpop.f32.mrf.mxu0
        %v5538 = vadd.f32 %v5147, %v5537
        %5539 = vdwg.mxu0
        %5540 = vmatpush.bf16.msra.mxu0 %v5373
        %5541 = vmatpush.bf16.msra.mxu0 %v5371
        %5542 = vmatpush.bf16.msra.mxu0 %v5369
        %5543 = vmatpush.bf16.msra.mxu0 %v5367
        %5544 = vmatpush.bf16.msra.mxu0 %v5365
        %5545 = vmatpush.bf16.msra.mxu0 %v5363
        %5546 = vmatpush.bf16.msra.mxu0 %v5361
        %5547 = vmatpush.bf16.msra.mxu0 %v5359
        %5548 = vmatmul.bf16.gmra.mxu0 %v5141
        %v5549 = vpop.f32.mrf.mxu0
        %v5550 = vadd.f32 %v5536, %v5549
        %v5551 = vpop.f32.mrf.mxu0
        %v5552 = vadd.f32 %v5538, %v5551
        %5553 = vdwg.mxu0
        %5554 = vmatpush.bf16.msra.mxu0 %v5389
        %5555 = vmatpush.bf16.msra.mxu0 %v5387
        %5556 = vmatpush.bf16.msra.mxu0 %v5385
        %5557 = vmatpush.bf16.msra.mxu0 %v5383
        %5558 = vmatpush.bf16.msra.mxu0 %v5381
        %5559 = vmatpush.bf16.msra.mxu0 %v5379
        %5560 = vmatpush.bf16.msra.mxu0 %v5377
        %5561 = vmatpush.bf16.msra.mxu0 %v5375
        %5562 = vmatmul.bf16.gmra.mxu0 %v5142
        %v5563 = vpop.f32.mrf.mxu0
        %v5564 = vadd.f32 %v5550, %v5563
        %v5565 = vpop.f32.mrf.mxu0
        %v5566 = vadd.f32 %v5552, %v5565
        %5567 = vdwg.mxu0
        %5568 = vmatpush.bf16.msra.mxu0 %v5405
        %5569 = vmatpush.bf16.msra.mxu0 %v5403
        %5570 = vmatpush.bf16.msra.mxu0 %v5401
        %5571 = vmatpush.bf16.msra.mxu0 %v5399
        %5572 = vmatpush.bf16.msra.mxu0 %v5397
        %5573 = vmatpush.bf16.msra.mxu0 %v5395
        %5574 = vmatpush.bf16.msra.mxu0 %v5393
        %5575 = vmatpush.bf16.msra.mxu0 %v5391
        %5576 = vmatmul.bf16.gmra.mxu0 %v5143
        %v5577 = vpop.f32.mrf.mxu0
        %v5578 = vadd.f32 %v5564, %v5577
        %v5579 = vpop.f32.mrf.mxu0
        %v5580 = vadd.f32 %v5566, %v5579
        %5581 = vdwg.mxu0
        %v5582 = vadd.f32 %v5522, %v4556
        %v5583 = vadd.f32 %v5578, %v4557
        %v5584 = vadd.f32 %v5524, %v4558
        %v5585 = vadd.f32 %v5580, %v4559
        %v5586 = vld [vmem:[#allocation30] sm:$0x3]
        %v5587 = vld [vmem:[#allocation32] sm:$0x3]
        %v5588 = vadd.f32 %v5582, %v5583
        %5589 = vadd.xlane.f32.xlu0 %v5588
        %v5590 = vpop.xlane.xlu0 %5589
        %v5591 = vadd.f32 %v5584, %v5585
        %5592 = vadd.xlane.f32.xlu0 %v5591
        %v5593 = vpop.xlane.xlu0 %5592
        %v5594 = vmul.f32 %v5590, %v3593
        %v5595 = vmul.f32 %v5593, %v3593
        %v5596 = vsub.f32 %v5582, %v5594
        %v5597 = vsub.f32 %v5583, %v5594
        %v5598 = vsub.f32 %v5584, %v5595
        %v5599 = vsub.f32 %v5585, %v5595
        %v5600 = vmul.f32 %v5596, %v5596
        %v5601 = vmul.f32 %v5597, %v5597
        %v5602 = vmul.f32 %v5598, %v5598
        %v5603 = vmul.f32 %v5599, %v5599
        %v5604 = vadd.f32 %v5600, %v5601
        %5605 = vadd.xlane.f32.xlu0 %v5604
        %v5606 = vpop.xlane.xlu0 %5605
        %v5607 = vadd.f32 %v5602, %v5603
        %5608 = vadd.xlane.f32.xlu0 %v5607
        %v5609 = vpop.xlane.xlu0 %5608
        %v5610 = vmul.f32 %v5606, %v3593
        %v5611 = vmul.f32 %v5609, %v3593
        %v5612 = vadd.f32 %v5610, 1e-05
        %v5613 = vadd.f32 %v5611, 1e-05
        %v5614 = vrsqrt.pop %v5612
        %v5615 = vmul.f32 %v5614, %v5612
        %v5616 = vmul.f32 %v5615, %v5614
        %v5617 = vmul.f32 0.5, %v5616
        %v5618 = vsub.f32 1.5, %v5617
        %v5619 = vmul.f32 %v5614, %v5618
        %vm5620 = vweird.f32 %v5612
        %vm5621 = vweird.f32 %v5614
        %vm5622 = vmor %vm5620, %vm5621
        %v5623 = vsel %vm5622, %v5614, %v5619
        %v5624 = vrsqrt.pop %v5613
        %v5625 = vmul.f32 %v5624, %v5613
        %v5626 = vmul.f32 %v5625, %v5624
        %v5627 = vmul.f32 0.5, %v5626
        %v5628 = vsub.f32 1.5, %v5627
        %v5629 = vmul.f32 %v5624, %v5628
        %vm5630 = vweird.f32 %v5613
        %vm5631 = vweird.f32 %v5624
        %vm5632 = vmor %vm5630, %vm5631
        %v5633 = vsel %vm5632, %v5624, %v5629
        %v5634 = vmul.f32 %v5596, %v5623
        %v5635 = vmul.f32 %v5597, %v5623
        %v5636 = vmul.f32 %v5598, %v5633
        %v5637 = vmul.f32 %v5599, %v5633
        %v5639 = vperm.slane %v5586, 0
        %v5640 = vperm.slane %v5586, 1
        %v5643 = vmul.f32 %v5634, %v5639
        %v5644 = vmul.f32 %v5635, %v5640
        %v5645 = vmul.f32 %v5636, %v5639
        %v5646 = vmul.f32 %v5637, %v5640
        %v5648 = vperm.slane %v5587, 0
        %v5649 = vperm.slane %v5587, 1
        %v5652 = vadd.f32 %v5643, %v5648
        %v5653 = vadd.f32 %v5644, %v5649
        %v5654 = vadd.f32 %v5645, %v5648
        %v5655 = vadd.f32 %v5646, %v5649
        %5656 = vst [vmem:[%s1162] sm:$0xff] %v5652
        %5657 = vst [vmem:[%s1162 + $0x8] sm:$0xff] %v5653
        %5658 = vst [vmem:[%s1162 + $0x10] sm:$0xff] %v5654
        %5659 = vst [vmem:[%s1162 + $0x18] sm:$0xff] %v5655
        %s5660 = sand.u32 %s675, 1
        %s5661 = scalar_lea.sflag [#allocation8], %s5660
        %s5662 = sand.u32 %s675, 1
        %s5663 = smul.addr %s5662, 32
        %s5664 = scalar_lea.vmem [#allocation33], %s5663
        // Predicated region
        $region205: #{tpu_custom_call.1} parent=131 // pred_check
          %p5665 = pneg %p685
        $region206: #{tpu_custom_call.1} parent=131 // pred_check_branch
          %5667 = sbr.rel (%p5665) target = $region208
        $region207: #{tpu_custom_call.1} parent=131 // pred_region
          %s5668 = smul.u32 2, %s60
          %5670 = vsyncadd %s5661, 0
          %s5671 = smul.addr %s5668, 2
          %s5672 = smul.addr %s59, 8
          %s5673 = sadd.s32 %s5671, %s5672
          %s5674 = smul.addr %s5673, 8
          %s5675 = scalar_lea.hbm %s28, %s5674
          %s5676 = sshll.u32 %s5664, 4
          %s5677 = int_to_ptr.vmem [resolvable:$true] %s5676
          %s5678 = sshll.u32 %s5675, 4
          %s5679 = int_to_ptr.hbm [resolvable:$true] %s5678
          %5684 = dma.vmem_to_hbm [thread:$0]  %s5677, 512, %s5679, %s5661, 256, 256, 16
        $region208: #{tpu_custom_call.1} parent=131 // pred_fallthru
          _
      $region132: #{tpu_custom_call.1} parent=5 // pred_fallthru
        _
      %p5685 = scmp.le.s32.totalorder 2, %s50
      // Predicated region
      $region209: #{tpu_custom_call.1} parent=5 // pred_check
        %p5686 = pneg %p5685
      $region210: #{tpu_custom_call.1} parent=5 // pred_check_branch
        %5688 = sbr.rel (%p5686) target = $region212
      $region211: #{tpu_custom_call.1} parent=5 // pred_region
        %s5689 = ssub.s32 %s50, 2
        // Predicated region
        $region213: #{tpu_custom_call.1} parent=211 // pred_check
          %p5690 = pneg %p691
        $region214: #{tpu_custom_call.1} parent=211 // pred_check_branch
          %5692 = sbr.rel (%p5690) target = $region216
        $region215: #{tpu_custom_call.1} parent=211 // pred_region
          %s5693 = sand.u32 %s676, 1
          %s5694 = scalar_lea.sflag [#allocation8], %s5693
          %s5695 = sand.u32 %s676, 1
          %s5696 = smul.addr %s5695, 32
          %s5697 = scalar_lea.vmem [#allocation33], %s5696
          %5699 = dma.done %s5694, 512
        $region216: #{tpu_custom_call.1} parent=211 // pred_fallthru
          _
      $region212: #{tpu_custom_call.1} parent=5 // pred_fallthru
        _
    $region6: #{tpu_custom_call.1} parent=1 // loop_footer
      %s54 = sadd.s32 1, %s50
    $region7: #{tpu_custom_call.1} parent=1 // loop_footer_branch
      %49 = sbr.rel target = $region3
    $region8: #{tpu_custom_call.1} parent=1 // loop_exit
      _
    %5700 = vsyncpa [#allocation7], 1
    %s5701 = scalar_lea.sflag [#allocation7], 1
    %5702 = vsyncpa %s5701, 1
    %5703 = vsyncpa [#allocation10], 1
    %s5704 = scalar_lea.sflag [#allocation10], 1
    %5705 = vsyncpa %s5704, 1
    %5706 = vsyncpa [#allocation13], 1
    %5707 = vsyncpa [#allocation16], 1
    %5708 = vsyncpa [#allocation19], 1
    %5709 = vsyncpa [#allocation22], 1
    %5710 = vsyncpa [#allocation25], 1
    %5711 = vsyncpa [#allocation28], 1
    %5712 = vsyncpa [#allocation31], 1
    %5713 = vsyncpa [#allocation8], 1
    %s5714 = scalar_lea.sflag [#allocation8], 1
    %5715 = vsyncpa %s5714, 1

</llo_original>
